<compile_context>
chip_gen: v6e
topology: v6e:2x2x1
jax: 0.10.0
libtpu: 0.0.40
codegen_flags: <defaults>
</compile_context>

<pallas_src>
import functools
import math

import jax
import jax.numpy as jnp
from jax.experimental import pallas as pl
from jax.experimental.pallas import tpu as pltpu

KERNEL_SIZE = 5
MAX_ORDER = 2
PAD = KERNEL_SIZE // 2
D_TOTAL = (MAX_ORDER + 1) * (MAX_ORDER + 2) // 2            # 6 (includes 0-order)
D_DERIV = D_TOTAL - 1                                        # 5 == combofd in_channels
VACUUM_PERMEABILITY = 4.0 * math.pi * 1e-7

ROW_OFF = 8        # sublane offset of the field interior inside the scratch (aligned)
LANE_OFF = 128     # lane offset of the field interior inside the scratch (aligned)


def _fused_kernel(w_ref, j2_ref, j0_ref, u1i_ref, u0i_ref, inva_ref, cf1_ref, cf0_ref,
                  out_ref, fld_ref, u0s_ref, *colbuf_refs, H, W):
    """One (batch block, time step) grid point of the fused multi-step update.

    w_ref         : SMEM (K*K,)     folded stencil (includes 2*dt/mu and combofd)
    j2_ref/j0_ref : VMEM (NB, H, W) j2[:, t], j0[:, t] (time dim squeezed, streamed)
    u1i/u0i/inva/cf1/cf0 : VMEM (NB, H, W) time-invariant blocks
    out_ref       : VMEM (NB, H, W) final u2 (written only on the last time step)
    fld_ref       : VMEM scratch (NB, H+2*ROW_OFF, LANE_OFF+W+PAD) current field u1;
                    interior at [ROW_OFF:ROW_OFF+H, LANE_OFF:LANE_OFF+W], zero Dirichlet halo
    u0s_ref       : VMEM scratch (NB, H, W) previous field u0
    colbuf_refs   : 4 x VMEM scratch (NB, H+2*PAD, W) lane-shifted copies of the field window
    """
    K = KERNEL_SIZE
    t = pl.program_id(1)
    r0, r1 = ROW_OFF, ROW_OFF + H
    c0, c1 = LANE_OFF, LANE_OFF + W

    @pl.when(t == 0)
    def _init():
        # Establish the Dirichlet zero halo once per batch block; interior <- u1 init.
        fld_ref[...] = jnp.zeros_like(fld_ref)
        fld_ref[:, r0:r1, c0:c1] = u1i_ref[...]
        u0s_ref[...] = u0i_ref[...]

    # Non-stencil terms first so u1/u0/j2/j0/cf1/cf0 tiles go dead before the tap loop.
    u1 = fld_ref[:, r0:r1, c0:c1]                              # aligned vld (identity term)
    acc = cf1_ref[...] * u1 - cf0_ref[...] * u0s_ref[...] - (j2_ref[...] - j0_ref[...])

    # Materialize the 4 off-center lane-shifted copies of the halo-extended field window
    # once per step (one lane relayout each); kw == PAD is read directly from fld_ref.
    ci = 0
    for kw in range(K):
        if kw == PAD:
            continue
        colbuf_refs[ci][...] = fld_ref[:, r0 - PAD:r1 + PAD,
                                       c0 - PAD + kw:c0 - PAD + kw + W]
        ci += 1

    # 25-tap folded stencil: every tap is a ref-level load with only a row offset.
    ci = 0
    for kw in range(K):
        if kw == PAD:
            for kh in range(K):
                acc = acc + w_ref[kh * K + kw] * fld_ref[
                    :, r0 - PAD + kh:r0 - PAD + kh + H, c0:c1]
            continue
        cref = colbuf_refs[ci]
        for kh in range(K):
            acc = acc + w_ref[kh * K + kw] * cref[:, kh:kh + H, :]
        ci += 1

    # u2 = 1/(2*epsr/dt+sigma) * (2*dt/mu*combo - (j2-j0) + 4*epsr/dt*u1 - (2*epsr/dt-sigma)*u0)
    u2 = inva_ref[...] * acc

    # Recurrence: u0 <- u1 (re-read; keeps u1 dead across the taps), u1 <- u2.
    # Halo rows/lanes of fld_ref are never written, so they stay zero (Dirichlet).
    u0s_ref[...] = fld_ref[:, r0:r1, c0:c1]
    fld_ref[:, r0:r1, c0:c1] = u2

    @pl.when(t == pl.num_programs(1) - 1)
    def _finalize():
        out_ref[...] = u2


def _round_up(x, m):
    return ((x + m - 1) // m) * m


def _vmem_capacity_bytes():
    try:
        info = pltpu.get_tpu_info()
        cap = getattr(info, "vmem_capacity_bytes", None)
        if cap:
            return int(cap)
    except Exception:
        pass
    return 64 * 1024 * 1024          # conservative default (v7x-sized per-core VMEM)


def _bytes_per_batch_unit(H, W, single_buffer_invariants):
    """Estimated VMEM bytes for one batch element (f32)."""
    hr = _round_up(H, 8)
    wr = _round_up(W, 128)
    fld = _round_up(H + 2 * ROW_OFF, 8) * _round_up(LANE_OFF + W + PAD, 128)
    cols = (KERNEL_SIZE - 1) * _round_up(H + 2 * PAD, 8) * wr
    inv_bufs = 1 if single_buffer_invariants else 2
    # 5 invariant inputs + j2/j0 (double-buffered) + output + u0 scratch
    tiles = 5 * inv_bufs + 2 * 2 + inv_bufs + 1
    return 4 * (tiles * hr * wr + fld + cols)


def _pick_block_batch(N, H, W, vmem_budget, single_buffer_invariants):
    per = _bytes_per_batch_unit(H, W, single_buffer_invariants)
    cap = max(1, vmem_budget // per)
    if N >= 2:
        cap = min(cap, N // 2)        # keep >= 2 batch blocks so v7x megacore has work
    cap = int(max(1, min(cap, N)))
    nb = 1
    for d in range(1, cap + 1):
        if N % d == 0:
            nb = d
    return nb


def single_nonlinear2d_forward(init, stepnum, fd_w, combo_w, dt, mu, block_batch=None):
    """Mirrors SingleNonLinear2d.forward(init, stepnum). Fields are NCHW with C == 1."""
    u1, u0, j2, j0, epsr, sigma = init
    assert u1.ndim == 4 and u1.shape[1] == 1
    N, _, H, W = u1.shape
    assert j2.shape[1] >= stepnum and j0.shape[1] >= stepnum
    assert stepnum >= 1

    f32 = jnp.float32
    u1s = u1[:, 0].astype(f32)
    u0s_ = u0[:, 0].astype(f32)
    e = epsr[:, 0].astype(f32)
    s = sigma[:, 0].astype(f32)
    j2s = j2[:, :stepnum].astype(f32)           # (N, stepnum, H, W), streamed per step
    j0s = j0[:, :stepnum].astype(f32)

    # Time-invariant coefficients, computed once host-side (tiny: N*H*W each).
    inv_a = 1.0 / (2.0 * e / float(dt) + s)
    cf1 = 4.0 * e / float(dt)
    cf0 = 2.0 * e / float(dt) - s

    # Fold combofd (1x1 conv over derivative channels) and 2*dt/mu into one KxK stencil.
    w_eff = (2.0 * float(dt) / float(mu)) * jnp.einsum(
        'c,ckl->kl', combo_w.astype(f32), fd_w[1:].astype(f32))
    w_eff_flat = w_eff.reshape(-1)                                   # (25,)

    cap = _vmem_capacity_bytes()
    vmem_limit = int(0.75 * cap)            # ~48 MiB on v7x, ~96 MiB on v5e/v6e
    vmem_budget = int(0.8 * vmem_limit)

    kernel_fn = functools.partial(_fused_kernel, H=H, W=W)
    fld_shape = (H + 2 * ROW_OFF, LANE_OFF + W + PAD)
    col_shape = (H + 2 * PAD, W)

    def _run(single_buffer):
        if block_batch is not None:
            nb = block_batch
            assert N % nb == 0
        else:
            nb = _pick_block_batch(N, H, W, vmem_budget, single_buffer)

        inv_kw = {"pipeline_mode": pl.Buffered(1)} if single_buffer else {}
        field_spec = pl.BlockSpec((nb, H, W), lambda b, t: (b, 0, 0), **inv_kw)
        out_spec = pl.BlockSpec((nb, H, W), lambda b, t: (b, 0, 0), **inv_kw)
        j_spec = pl.BlockSpec((nb, pl.Squeezed(), H, W), lambda b, t: (b, t, 0, 0))

        return pl.pallas_call(
            kernel_fn,
            out_shape=jax.ShapeDtypeStruct((N, H, W), f32),
            grid=(N // nb, stepnum),
            in_specs=[
                pl.BlockSpec(memory_space=pltpu.MemorySpace.SMEM),   # folded stencil weights
                j_spec,                                              # j2[:, t] (streamed)
                j_spec,                                              # j0[:, t] (streamed)
                field_spec,                                          # u1 init
                field_spec,                                          # u0 init
                field_spec,                                          # inv_a
                field_spec,                                          # 4*epsr/dt
                field_spec,                                          # 2*epsr/dt - sigma
            ],
            out_specs=out_spec,
            scratch_shapes=[
                pltpu.VMEM((nb,) + fld_shape, f32),                  # current field (haloed)
                pltpu.VMEM((nb, H, W), f32),                         # previous field u0
            ] + [pltpu.VMEM((nb,) + col_shape, f32)
                 for _ in range(KERNEL_SIZE - 1)],                   # lane-shifted copies
            compiler_params=pltpu.CompilerParams(
                dimension_semantics=("parallel", "arbitrary"),       # batch || , time serial
                vmem_limit_bytes=vmem_limit,
            ),
        )(w_eff_flat, j2s, j0s, u1s, u0s_, inv_a, cf1, cf0)

    try:
        out = _run(single_buffer=True)
    except Exception:
        # Fallback for jax versions without BlockSpec(pipeline_mode=...): default
        # double-buffered pipeline (identical numerics, slightly more VMEM).
        out = _run(single_buffer=False)
    return out[:, None, :, :]


def _reference_forward(init, stepnum, fd_w, combo_w, dt, mu):
    """Pure-JAX reference of the full multi-step forward (for the sanity check)."""
    u1, u0, j2, j0, epsr, sigma = init
    N, _, H, W = u1.shape
    u2 = None
    for i in range(stepnum):
        if i > 0:
            u0 = u1
            u1 = u2
        u1p = jnp.pad(u1[:, 0], ((0, 0), (PAD, PAD), (PAD, PAD)))
        fd = jnp.zeros((N, D_DERIV, H, W), jnp.float32)
        for kh in range(KERNEL_SIZE):
            for kw in range(KERNEL_SIZE):
                shifted = u1p[:, kh:kh + H, kw:kw + W]
                fd = fd + fd_w[1:, kh, kw][None, :, None, None] * shifted[:, None]
        combo = jnp.einsum('c,nchw->nhw', combo_w, fd)[:, None]
        jdiff = (j2[:, i] - j0[:, i])[:, None]
        a = 2.0 * epsr / dt + sigma
        u2 = (1.0 / a) * ((2.0 * dt / mu) * combo - jdiff
                          + (4.0 * epsr / dt) * u1 - (2.0 * epsr / dt - sigma) * u0)
    return u2


if __name__ == "__main__":
    key = jax.random.PRNGKey(0)
    N, H, W = 2, 16, 16
    stepnum = 3
    dt = 1e-3
    mu = VACUUM_PERMEABILITY

    ks = jax.random.split(key, 8)
    u1 = jax.random.normal(ks[0], (N, 1, H, W), jnp.float32)
    u0 = jax.random.normal(ks[1], (N, 1, H, W), jnp.float32)
    j2 = jax.random.normal(ks[2], (N, stepnum, H, W), jnp.float32)
    j0 = jax.random.normal(ks[3], (N, stepnum, H, W), jnp.float32)
    epsr = 1.0 + jax.random.uniform(ks[4], (N, 1, H, W), jnp.float32)
    sigma = 0.1 * jax.random.uniform(ks[5], (N, 1, H, W), jnp.float32)

    # fd2d_u1 stencils: (D_TOTAL, K, K). The module initializes combofd.weight to 0, but that
    # would leave the stencil path untested -> use small nonzero weights for the check.
    fd_w = jax.random.normal(ks[6], (D_TOTAL, KERNEL_SIZE, KERNEL_SIZE), jnp.float32)
    combo_w = 0.05 * jax.random.normal(ks[7], (D_DERIV,), jnp.float32)

    init = [u1, u0, j2, j0, epsr, sigma]

    u2 = single_nonlinear2d_forward(init, stepnum, fd_w, combo_w, dt, mu)
    u2 = jax.block_until_ready(u2)
    assert u2.shape == (N, 1, H, W)

    ref = _reference_forward(init, stepnum, fd_w, combo_w, dt, mu)
    assert jnp.allclose(ref, u2, rtol=1e-4, atol=1e-4), float(jnp.max(jnp.abs(ref - u2)))

    # Also check stepnum=1 and the module's actual init (combo_w == 0).
    zero_w = jnp.zeros((D_DERIV,), jnp.float32)
    u2_1 = jax.block_until_ready(single_nonlinear2d_forward(init, 1, fd_w, zero_w, dt, mu))
    ref_1 = _reference_forward(init, 1, fd_w, zero_w, dt, mu)
    assert jnp.allclose(ref_1, u2_1, rtol=1e-4, atol=1e-4)

    print("KERNEL_OK")
</pallas_src>

<mosaic_0001>
module attributes {stable_mosaic.version = 11 : i64} {
  func.func @_fused_kernel(%arg0: i32, %arg1: i32, %arg2: memref<25xf32, #tpu.memory_space<smem>>, %arg3: memref<1x1x16x16xf32, #tpu.memory_space<vmem>>, %arg4: memref<1x1x16x16xf32, #tpu.memory_space<vmem>>, %arg5: memref<1x16x16xf32, #tpu.memory_space<vmem>>, %arg6: memref<1x16x16xf32, #tpu.memory_space<vmem>>, %arg7: memref<1x16x16xf32, #tpu.memory_space<vmem>>, %arg8: memref<1x16x16xf32, #tpu.memory_space<vmem>>, %arg9: memref<1x16x16xf32, #tpu.memory_space<vmem>>, %arg10: memref<1x16x16xf32, #tpu.memory_space<vmem>>, %arg11: memref<1x32x146xf32, #tpu.memory_space<vmem>>, %arg12: memref<1x16x16xf32, #tpu.memory_space<vmem>>, %arg13: memref<1x20x16xf32, #tpu.memory_space<vmem>>, %arg14: memref<1x20x16xf32, #tpu.memory_space<vmem>>, %arg15: memref<1x20x16xf32, #tpu.memory_space<vmem>>, %arg16: memref<1x20x16xf32, #tpu.memory_space<vmem>>) attributes {dimension_semantics = [#tpu.dimension_semantics<parallel>, #tpu.dimension_semantics<arbitrary>], iteration_bounds = array<i64: 2, 3>, scalar_prefetch = 0 : i64, scratch_operands = 6 : i64, tpu.core_type = #tpu.core_type<tc>, window_params = [{transform_indices = @transform_0, window_bounds = array<i64: 25>}, {transform_indices = @transform_1, window_bounds = array<i64: 1, 1, 16, 16>}, {transform_indices = @transform_2, window_bounds = array<i64: 1, 1, 16, 16>}, {pipeline_mode = #tpu.pipeline_mode<synchronous>, transform_indices = @transform_3, window_bounds = array<i64: 1, 16, 16>}, {pipeline_mode = #tpu.pipeline_mode<synchronous>, transform_indices = @transform_4, window_bounds = array<i64: 1, 16, 16>}, {pipeline_mode = #tpu.pipeline_mode<synchronous>, transform_indices = @transform_5, window_bounds = array<i64: 1, 16, 16>}, {pipeline_mode = #tpu.pipeline_mode<synchronous>, transform_indices = @transform_6, window_bounds = array<i64: 1, 16, 16>}, {pipeline_mode = #tpu.pipeline_mode<synchronous>, transform_indices = @transform_7, window_bounds = array<i64: 1, 16, 16>}, {pipeline_mode = #tpu.pipeline_mode<synchronous>, transform_indices = @transform_8, window_bounds = array<i64: 1, 16, 16>}]} {
    %c0_i32 = arith.constant 0 : i32
    %0 = arith.cmpi eq, %arg1, %c0_i32 : i32
    %1 = arith.extui %0 : i1 to i32
    %c0_i32_0 = arith.constant 0 : i32
    %2 = arith.cmpi ne, %1, %c0_i32_0 : i32
    scf.if %2 {
      %cst = arith.constant 0.000000e+00 : f32
      %157 = vector.broadcast %cst : f32 to vector<1x32x146xf32>
      %c0_128 = arith.constant 0 : index
      %c0_129 = arith.constant 0 : index
      %c0_130 = arith.constant 0 : index
      %158 = vector.load %arg11[%c0_128, %c0_129, %c0_130] : memref<1x32x146xf32, #tpu.memory_space<vmem>>, vector<1x32x146xf32>
      tpu.vector_store %arg11[%c0_128, %c0_129, %c0_130], %157 {strides = array<i32>} : memref<1x32x146xf32, #tpu.memory_space<vmem>>, vector<1x32x146xf32>,
      %c0_131 = arith.constant 0 : index
      %c0_132 = arith.constant 0 : index
      %c0_133 = arith.constant 0 : index
      %159 = vector.load %arg5[%c0_131, %c0_132, %c0_133] : memref<1x16x16xf32, #tpu.memory_space<vmem>>, vector<1x16x16xf32>
      %c0_134 = arith.constant 0 : index
      %c8_135 = arith.constant 8 : index
      %c128_136 = arith.constant 128 : index
      %160 = vector.load %arg11[%c0_134, %c8_135, %c128_136] : memref<1x32x146xf32, #tpu.memory_space<vmem>>, vector<1x16x16xf32>
      tpu.vector_store %arg11[%c0_134, %c8_135, %c128_136], %159 {strides = array<i32>} : memref<1x32x146xf32, #tpu.memory_space<vmem>>, vector<1x16x16xf32>,
      %c0_137 = arith.constant 0 : index
      %c0_138 = arith.constant 0 : index
      %c0_139 = arith.constant 0 : index
      %161 = vector.load %arg6[%c0_137, %c0_138, %c0_139] : memref<1x16x16xf32, #tpu.memory_space<vmem>>, vector<1x16x16xf32>
      %c0_140 = arith.constant 0 : index
      %c0_141 = arith.constant 0 : index
      %c0_142 = arith.constant 0 : index
      %162 = vector.load %arg12[%c0_140, %c0_141, %c0_142] : memref<1x16x16xf32, #tpu.memory_space<vmem>>, vector<1x16x16xf32>
      tpu.vector_store %arg12[%c0_140, %c0_141, %c0_142], %161 {strides = array<i32>} : memref<1x16x16xf32, #tpu.memory_space<vmem>>, vector<1x16x16xf32>,
    } else {
    }
    %c0 = arith.constant 0 : index
    %c8 = arith.constant 8 : index
    %c128 = arith.constant 128 : index
    %3 = vector.load %arg11[%c0, %c8, %c128] : memref<1x32x146xf32, #tpu.memory_space<vmem>>, vector<1x16x16xf32>
    %c0_1 = arith.constant 0 : index
    %c0_2 = arith.constant 0 : index
    %c0_3 = arith.constant 0 : index
    %4 = vector.load %arg8[%c0_1, %c0_2, %c0_3] : memref<1x16x16xf32, #tpu.memory_space<vmem>>, vector<1x16x16xf32>
    %5 = arith.mulf %4, %3 : vector<1x16x16xf32>
    %c0_4 = arith.constant 0 : index
    %c0_5 = arith.constant 0 : index
    %c0_6 = arith.constant 0 : index
    %6 = vector.load %arg9[%c0_4, %c0_5, %c0_6] : memref<1x16x16xf32, #tpu.memory_space<vmem>>, vector<1x16x16xf32>
    %c0_7 = arith.constant 0 : index
    %c0_8 = arith.constant 0 : index
    %c0_9 = arith.constant 0 : index
    %7 = vector.load %arg12[%c0_7, %c0_8, %c0_9] : memref<1x16x16xf32, #tpu.memory_space<vmem>>, vector<1x16x16xf32>
    %8 = arith.mulf %6, %7 : vector<1x16x16xf32>
    %9 = arith.subf %5, %8 : vector<1x16x16xf32>
    %c0_10 = arith.constant 0 : index
    %c0_11 = arith.constant 0 : index
    %c0_12 = arith.constant 0 : index
    %c0_13 = arith.constant 0 : index
    %10 = vector.load %arg3[%c0_10, %c0_11, %c0_12, %c0_13] : memref<1x1x16x16xf32, #tpu.memory_space<vmem>>, vector<1x1x16x16xf32>
    %11 = vector.shape_cast %10 : vector<1x1x16x16xf32> to vector<1x16x16xf32>
    %c0_14 = arith.constant 0 : index
    %c0_15 = arith.constant 0 : index
    %c0_16 = arith.constant 0 : index
    %c0_17 = arith.constant 0 : index
    %12 = vector.load %arg4[%c0_14, %c0_15, %c0_16, %c0_17] : memref<1x1x16x16xf32, #tpu.memory_space<vmem>>, vector<1x1x16x16xf32>
    %13 = vector.shape_cast %12 : vector<1x1x16x16xf32> to vector<1x16x16xf32>
    %14 = arith.subf %11, %13 : vector<1x16x16xf32>
    %15 = arith.subf %9, %14 : vector<1x16x16xf32>
    %c0_18 = arith.constant 0 : index
    %c6 = arith.constant 6 : index
    %c126 = arith.constant 126 : index
    %16 = vector.load %arg11[%c0_18, %c6, %c126] : memref<1x32x146xf32, #tpu.memory_space<vmem>>, vector<1x20x16xf32>
    %c0_19 = arith.constant 0 : index
    %c0_20 = arith.constant 0 : index
    %c0_21 = arith.constant 0 : index
    %17 = vector.load %arg13[%c0_19, %c0_20, %c0_21] : memref<1x20x16xf32, #tpu.memory_space<vmem>>, vector<1x20x16xf32>
    tpu.vector_store %arg13[%c0_19, %c0_20, %c0_21], %16 {strides = array<i32>} : memref<1x20x16xf32, #tpu.memory_space<vmem>>, vector<1x20x16xf32>,
    %c0_22 = arith.constant 0 : index
    %c6_23 = arith.constant 6 : index
    %c127 = arith.constant 127 : index
    %18 = vector.load %arg11[%c0_22, %c6_23, %c127] : memref<1x32x146xf32, #tpu.memory_space<vmem>>, vector<1x20x16xf32>
    %c0_24 = arith.constant 0 : index
    %c0_25 = arith.constant 0 : index
    %c0_26 = arith.constant 0 : index
    %19 = vector.load %arg14[%c0_24, %c0_25, %c0_26] : memref<1x20x16xf32, #tpu.memory_space<vmem>>, vector<1x20x16xf32>
    tpu.vector_store %arg14[%c0_24, %c0_25, %c0_26], %18 {strides = array<i32>} : memref<1x20x16xf32, #tpu.memory_space<vmem>>, vector<1x20x16xf32>,
    %c0_27 = arith.constant 0 : index
    %c6_28 = arith.constant 6 : index
    %c129 = arith.constant 129 : index
    %20 = vector.load %arg11[%c0_27, %c6_28, %c129] : memref<1x32x146xf32, #tpu.memory_space<vmem>>, vector<1x20x16xf32>
    %c0_29 = arith.constant 0 : index
    %c0_30 = arith.constant 0 : index
    %c0_31 = arith.constant 0 : index
    %21 = vector.load %arg15[%c0_29, %c0_30, %c0_31] : memref<1x20x16xf32, #tpu.memory_space<vmem>>, vector<1x20x16xf32>
    tpu.vector_store %arg15[%c0_29, %c0_30, %c0_31], %20 {strides = array<i32>} : memref<1x20x16xf32, #tpu.memory_space<vmem>>, vector<1x20x16xf32>,
    %c0_32 = arith.constant 0 : index
    %c6_33 = arith.constant 6 : index
    %c130 = arith.constant 130 : index
    %22 = vector.load %arg11[%c0_32, %c6_33, %c130] : memref<1x32x146xf32, #tpu.memory_space<vmem>>, vector<1x20x16xf32>
    %c0_34 = arith.constant 0 : index
    %c0_35 = arith.constant 0 : index
    %c0_36 = arith.constant 0 : index
    %23 = vector.load %arg16[%c0_34, %c0_35, %c0_36] : memref<1x20x16xf32, #tpu.memory_space<vmem>>, vector<1x20x16xf32>
    tpu.vector_store %arg16[%c0_34, %c0_35, %c0_36], %22 {strides = array<i32>} : memref<1x20x16xf32, #tpu.memory_space<vmem>>, vector<1x20x16xf32>,
    %c0_37 = arith.constant 0 : index
    %24 = memref.load %arg2[%c0_37] : memref<25xf32, #tpu.memory_space<smem>>
    %c0_38 = arith.constant 0 : index
    %c0_39 = arith.constant 0 : index
    %c0_40 = arith.constant 0 : index
    %25 = vector.load %arg13[%c0_38, %c0_39, %c0_40] : memref<1x20x16xf32, #tpu.memory_space<vmem>>, vector<1x16x16xf32>
    %26 = vector.broadcast %24 : f32 to vector<1x16x16xf32>
    %27 = arith.mulf %26, %25 : vector<1x16x16xf32>
    %28 = arith.addf %15, %27 : vector<1x16x16xf32>
    %c5 = arith.constant 5 : index
    %29 = memref.load %arg2[%c5] : memref<25xf32, #tpu.memory_space<smem>>
    %c0_41 = arith.constant 0 : index
    %c1 = arith.constant 1 : index
    %c0_42 = arith.constant 0 : index
    %30 = vector.load %arg13[%c0_41, %c1, %c0_42] : memref<1x20x16xf32, #tpu.memory_space<vmem>>, vector<1x16x16xf32>
    %31 = vector.broadcast %29 : f32 to vector<1x16x16xf32>
    %32 = arith.mulf %31, %30 : vector<1x16x16xf32>
    %33 = arith.addf %28, %32 : vector<1x16x16xf32>
    %c10 = arith.constant 10 : index
    %34 = memref.load %arg2[%c10] : memref<25xf32, #tpu.memory_space<smem>>
    %c0_43 = arith.constant 0 : index
    %c2 = arith.constant 2 : index
    %c0_44 = arith.constant 0 : index
    %35 = vector.load %arg13[%c0_43, %c2, %c0_44] : memref<1x20x16xf32, #tpu.memory_space<vmem>>, vector<1x16x16xf32>
    %36 = vector.broadcast %34 : f32 to vector<1x16x16xf32>
    %37 = arith.mulf %36, %35 : vector<1x16x16xf32>
    %38 = arith.addf %33, %37 : vector<1x16x16xf32>
    %c15 = arith.constant 15 : index
    %39 = memref.load %arg2[%c15] : memref<25xf32, #tpu.memory_space<smem>>
    %c0_45 = arith.constant 0 : index
    %c3 = arith.constant 3 : index
    %c0_46 = arith.constant 0 : index
    %40 = vector.load %arg13[%c0_45, %c3, %c0_46] : memref<1x20x16xf32, #tpu.memory_space<vmem>>, vector<1x16x16xf32>
    %41 = vector.broadcast %39 : f32 to vector<1x16x16xf32>
    %42 = arith.mulf %41, %40 : vector<1x16x16xf32>
    %43 = arith.addf %38, %42 : vector<1x16x16xf32>
    %c20 = arith.constant 20 : index
    %44 = memref.load %arg2[%c20] : memref<25xf32, #tpu.memory_space<smem>>
    %c0_47 = arith.constant 0 : index
    %c4 = arith.constant 4 : index
    %c0_48 = arith.constant 0 : index
    %45 = vector.load %arg13[%c0_47, %c4, %c0_48] : memref<1x20x16xf32, #tpu.memory_space<vmem>>, vector<1x16x16xf32>
    %46 = vector.broadcast %44 : f32 to vector<1x16x16xf32>
    %47 = arith.mulf %46, %45 : vector<1x16x16xf32>
    %48 = arith.addf %43, %47 : vector<1x16x16xf32>
    %c1_49 = arith.constant 1 : index
    %49 = memref.load %arg2[%c1_49] : memref<25xf32, #tpu.memory_space<smem>>
    %c0_50 = arith.constant 0 : index
    %c0_51 = arith.constant 0 : index
    %c0_52 = arith.constant 0 : index
    %50 = vector.load %arg14[%c0_50, %c0_51, %c0_52] : memref<1x20x16xf32, #tpu.memory_space<vmem>>, vector<1x16x16xf32>
    %51 = vector.broadcast %49 : f32 to vector<1x16x16xf32>
    %52 = arith.mulf %51, %50 : vector<1x16x16xf32>
    %53 = arith.addf %48, %52 : vector<1x16x16xf32>
    %c6_53 = arith.constant 6 : index
    %54 = memref.load %arg2[%c6_53] : memref<25xf32, #tpu.memory_space<smem>>
    %c0_54 = arith.constant 0 : index
    %c1_55 = arith.constant 1 : index
    %c0_56 = arith.constant 0 : index
    %55 = vector.load %arg14[%c0_54, %c1_55, %c0_56] : memref<1x20x16xf32, #tpu.memory_space<vmem>>, vector<1x16x16xf32>
    %56 = vector.broadcast %54 : f32 to vector<1x16x16xf32>
    %57 = arith.mulf %56, %55 : vector<1x16x16xf32>
    %58 = arith.addf %53, %57 : vector<1x16x16xf32>
    %c11 = arith.constant 11 : index
    %59 = memref.load %arg2[%c11] : memref<25xf32, #tpu.memory_space<smem>>
    %c0_57 = arith.constant 0 : index
    %c2_58 = arith.constant 2 : index
    %c0_59 = arith.constant 0 : index
    %60 = vector.load %arg14[%c0_57, %c2_58, %c0_59] : memref<1x20x16xf32, #tpu.memory_space<vmem>>, vector<1x16x16xf32>
    %61 = vector.broadcast %59 : f32 to vector<1x16x16xf32>
    %62 = arith.mulf %61, %60 : vector<1x16x16xf32>
    %63 = arith.addf %58, %62 : vector<1x16x16xf32>
    %c16 = arith.constant 16 : index
    %64 = memref.load %arg2[%c16] : memref<25xf32, #tpu.memory_space<smem>>
    %c0_60 = arith.constant 0 : index
    %c3_61 = arith.constant 3 : index
    %c0_62 = arith.constant 0 : index
    %65 = vector.load %arg14[%c0_60, %c3_61, %c0_62] : memref<1x20x16xf32, #tpu.memory_space<vmem>>, vector<1x16x16xf32>
    %66 = vector.broadcast %64 : f32 to vector<1x16x16xf32>
    %67 = arith.mulf %66, %65 : vector<1x16x16xf32>
    %68 = arith.addf %63, %67 : vector<1x16x16xf32>
    %c21 = arith.constant 21 : index
    %69 = memref.load %arg2[%c21] : memref<25xf32, #tpu.memory_space<smem>>
    %c0_63 = arith.constant 0 : index
    %c4_64 = arith.constant 4 : index
    %c0_65 = arith.constant 0 : index
    %70 = vector.load %arg14[%c0_63, %c4_64, %c0_65] : memref<1x20x16xf32, #tpu.memory_space<vmem>>, vector<1x16x16xf32>
    %71 = vector.broadcast %69 : f32 to vector<1x16x16xf32>
    %72 = arith.mulf %71, %70 : vector<1x16x16xf32>
    %73 = arith.addf %68, %72 : vector<1x16x16xf32>
    %c2_66 = arith.constant 2 : index
    %74 = memref.load %arg2[%c2_66] : memref<25xf32, #tpu.memory_space<smem>>
    %c0_67 = arith.constant 0 : index
    %c6_68 = arith.constant 6 : index
    %c128_69 = arith.constant 128 : index
    %75 = vector.load %arg11[%c0_67, %c6_68, %c128_69] : memref<1x32x146xf32, #tpu.memory_space<vmem>>, vector<1x16x16xf32>
    %76 = vector.broadcast %74 : f32 to vector<1x16x16xf32>
    %77 = arith.mulf %76, %75 : vector<1x16x16xf32>
    %78 = arith.addf %73, %77 : vector<1x16x16xf32>
    %c7 = arith.constant 7 : index
    %79 = memref.load %arg2[%c7] : memref<25xf32, #tpu.memory_space<smem>>
    %c0_70 = arith.constant 0 : index
    %c7_71 = arith.constant 7 : index
    %c128_72 = arith.constant 128 : index
    %80 = vector.load %arg11[%c0_70, %c7_71, %c128_72] : memref<1x32x146xf32, #tpu.memory_space<vmem>>, vector<1x16x16xf32>
    %81 = vector.broadcast %79 : f32 to vector<1x16x16xf32>
    %82 = arith.mulf %81, %80 : vector<1x16x16xf32>
    %83 = arith.addf %78, %82 : vector<1x16x16xf32>
    %c12 = arith.constant 12 : index
    %84 = memref.load %arg2[%c12] : memref<25xf32, #tpu.memory_space<smem>>
    %c0_73 = arith.constant 0 : index
    %c8_74 = arith.constant 8 : index
    %c128_75 = arith.constant 128 : index
    %85 = vector.load %arg11[%c0_73, %c8_74, %c128_75] : memref<1x32x146xf32, #tpu.memory_space<vmem>>, vector<1x16x16xf32>
    %86 = vector.broadcast %84 : f32 to vector<1x16x16xf32>
    %87 = arith.mulf %86, %85 : vector<1x16x16xf32>
    %88 = arith.addf %83, %87 : vector<1x16x16xf32>
    %c17 = arith.constant 17 : index
    %89 = memref.load %arg2[%c17] : memref<25xf32, #tpu.memory_space<smem>>
    %c0_76 = arith.constant 0 : index
    %c9 = arith.constant 9 : index
    %c128_77 = arith.constant 128 : index
    %90 = vector.load %arg11[%c0_76, %c9, %c128_77] : memref<1x32x146xf32, #tpu.memory_space<vmem>>, vector<1x16x16xf32>
    %91 = vector.broadcast %89 : f32 to vector<1x16x16xf32>
    %92 = arith.mulf %91, %90 : vector<1x16x16xf32>
    %93 = arith.addf %88, %92 : vector<1x16x16xf32>
    %c22 = arith.constant 22 : index
    %94 = memref.load %arg2[%c22] : memref<25xf32, #tpu.memory_space<smem>>
    %c0_78 = arith.constant 0 : index
    %c10_79 = arith.constant 10 : index
    %c128_80 = arith.constant 128 : index
    %95 = vector.load %arg11[%c0_78, %c10_79, %c128_80] : memref<1x32x146xf32, #tpu.memory_space<vmem>>, vector<1x16x16xf32>
    %96 = vector.broadcast %94 : f32 to vector<1x16x16xf32>
    %97 = arith.mulf %96, %95 : vector<1x16x16xf32>
    %98 = arith.addf %93, %97 : vector<1x16x16xf32>
    %c3_81 = arith.constant 3 : index
    %99 = memref.load %arg2[%c3_81] : memref<25xf32, #tpu.memory_space<smem>>
    %c0_82 = arith.constant 0 : index
    %c0_83 = arith.constant 0 : index
    %c0_84 = arith.constant 0 : index
    %100 = vector.load %arg15[%c0_82, %c0_83, %c0_84] : memref<1x20x16xf32, #tpu.memory_space<vmem>>, vector<1x16x16xf32>
    %101 = vector.broadcast %99 : f32 to vector<1x16x16xf32>
    %102 = arith.mulf %101, %100 : vector<1x16x16xf32>
    %103 = arith.addf %98, %102 : vector<1x16x16xf32>
    %c8_85 = arith.constant 8 : index
    %104 = memref.load %arg2[%c8_85] : memref<25xf32, #tpu.memory_space<smem>>
    %c0_86 = arith.constant 0 : index
    %c1_87 = arith.constant 1 : index
    %c0_88 = arith.constant 0 : index
    %105 = vector.load %arg15[%c0_86, %c1_87, %c0_88] : memref<1x20x16xf32, #tpu.memory_space<vmem>>, vector<1x16x16xf32>
    %106 = vector.broadcast %104 : f32 to vector<1x16x16xf32>
    %107 = arith.mulf %106, %105 : vector<1x16x16xf32>
    %108 = arith.addf %103, %107 : vector<1x16x16xf32>
    %c13 = arith.constant 13 : index
    %109 = memref.load %arg2[%c13] : memref<25xf32, #tpu.memory_space<smem>>
    %c0_89 = arith.constant 0 : index
    %c2_90 = arith.constant 2 : index
    %c0_91 = arith.constant 0 : index
    %110 = vector.load %arg15[%c0_89, %c2_90, %c0_91] : memref<1x20x16xf32, #tpu.memory_space<vmem>>, vector<1x16x16xf32>
    %111 = vector.broadcast %109 : f32 to vector<1x16x16xf32>
    %112 = arith.mulf %111, %110 : vector<1x16x16xf32>
    %113 = arith.addf %108, %112 : vector<1x16x16xf32>
    %c18 = arith.constant 18 : index
    %114 = memref.load %arg2[%c18] : memref<25xf32, #tpu.memory_space<smem>>
    %c0_92 = arith.constant 0 : index
    %c3_93 = arith.constant 3 : index
    %c0_94 = arith.constant 0 : index
    %115 = vector.load %arg15[%c0_92, %c3_93, %c0_94] : memref<1x20x16xf32, #tpu.memory_space<vmem>>, vector<1x16x16xf32>
    %116 = vector.broadcast %114 : f32 to vector<1x16x16xf32>
    %117 = arith.mulf %116, %115 : vector<1x16x16xf32>
    %118 = arith.addf %113, %117 : vector<1x16x16xf32>
    %c23 = arith.constant 23 : index
    %119 = memref.load %arg2[%c23] : memref<25xf32, #tpu.memory_space<smem>>
    %c0_95 = arith.constant 0 : index
    %c4_96 = arith.constant 4 : index
    %c0_97 = arith.constant 0 : index
    %120 = vector.load %arg15[%c0_95, %c4_96, %c0_97] : memref<1x20x16xf32, #tpu.memory_space<vmem>>, vector<1x16x16xf32>
    %121 = vector.broadcast %119 : f32 to vector<1x16x16xf32>
    %122 = arith.mulf %121, %120 : vector<1x16x16xf32>
    %123 = arith.addf %118, %122 : vector<1x16x16xf32>
    %c4_98 = arith.constant 4 : index
    %124 = memref.load %arg2[%c4_98] : memref<25xf32, #tpu.memory_space<smem>>
    %c0_99 = arith.constant 0 : index
    %c0_100 = arith.constant 0 : index
    %c0_101 = arith.constant 0 : index
    %125 = vector.load %arg16[%c0_99, %c0_100, %c0_101] : memref<1x20x16xf32, #tpu.memory_space<vmem>>, vector<1x16x16xf32>
    %126 = vector.broadcast %124 : f32 to vector<1x16x16xf32>
    %127 = arith.mulf %126, %125 : vector<1x16x16xf32>
    %128 = arith.addf %123, %127 : vector<1x16x16xf32>
    %c9_102 = arith.constant 9 : index
    %129 = memref.load %arg2[%c9_102] : memref<25xf32, #tpu.memory_space<smem>>
    %c0_103 = arith.constant 0 : index
    %c1_104 = arith.constant 1 : index
    %c0_105 = arith.constant 0 : index
    %130 = vector.load %arg16[%c0_103, %c1_104, %c0_105] : memref<1x20x16xf32, #tpu.memory_space<vmem>>, vector<1x16x16xf32>
    %131 = vector.broadcast %129 : f32 to vector<1x16x16xf32>
    %132 = arith.mulf %131, %130 : vector<1x16x16xf32>
    %133 = arith.addf %128, %132 : vector<1x16x16xf32>
    %c14 = arith.constant 14 : index
    %134 = memref.load %arg2[%c14] : memref<25xf32, #tpu.memory_space<smem>>
    %c0_106 = arith.constant 0 : index
    %c2_107 = arith.constant 2 : index
    %c0_108 = arith.constant 0 : index
    %135 = vector.load %arg16[%c0_106, %c2_107, %c0_108] : memref<1x20x16xf32, #tpu.memory_space<vmem>>, vector<1x16x16xf32>
    %136 = vector.broadcast %134 : f32 to vector<1x16x16xf32>
    %137 = arith.mulf %136, %135 : vector<1x16x16xf32>
    %138 = arith.addf %133, %137 : vector<1x16x16xf32>
    %c19 = arith.constant 19 : index
    %139 = memref.load %arg2[%c19] : memref<25xf32, #tpu.memory_space<smem>>
    %c0_109 = arith.constant 0 : index
    %c3_110 = arith.constant 3 : index
    %c0_111 = arith.constant 0 : index
    %140 = vector.load %arg16[%c0_109, %c3_110, %c0_111] : memref<1x20x16xf32, #tpu.memory_space<vmem>>, vector<1x16x16xf32>
    %141 = vector.broadcast %139 : f32 to vector<1x16x16xf32>
    %142 = arith.mulf %141, %140 : vector<1x16x16xf32>
    %143 = arith.addf %138, %142 : vector<1x16x16xf32>
    %c24 = arith.constant 24 : index
    %144 = memref.load %arg2[%c24] : memref<25xf32, #tpu.memory_space<smem>>
    %c0_112 = arith.constant 0 : index
    %c4_113 = arith.constant 4 : index
    %c0_114 = arith.constant 0 : index
    %145 = vector.load %arg16[%c0_112, %c4_113, %c0_114] : memref<1x20x16xf32, #tpu.memory_space<vmem>>, vector<1x16x16xf32>
    %146 = vector.broadcast %144 : f32 to vector<1x16x16xf32>
    %147 = arith.mulf %146, %145 : vector<1x16x16xf32>
    %148 = arith.addf %143, %147 : vector<1x16x16xf32>
    %c0_115 = arith.constant 0 : index
    %c0_116 = arith.constant 0 : index
    %c0_117 = arith.constant 0 : index
    %149 = vector.load %arg7[%c0_115, %c0_116, %c0_117] : memref<1x16x16xf32, #tpu.memory_space<vmem>>, vector<1x16x16xf32>
    %150 = arith.mulf %149, %148 : vector<1x16x16xf32>
    %c0_118 = arith.constant 0 : index
    %c8_119 = arith.constant 8 : index
    %c128_120 = arith.constant 128 : index
    %151 = vector.load %arg11[%c0_118, %c8_119, %c128_120] : memref<1x32x146xf32, #tpu.memory_space<vmem>>, vector<1x16x16xf32>
    %c0_121 = arith.constant 0 : index
    %c0_122 = arith.constant 0 : index
    %c0_123 = arith.constant 0 : index
    %152 = vector.load %arg12[%c0_121, %c0_122, %c0_123] : memref<1x16x16xf32, #tpu.memory_space<vmem>>, vector<1x16x16xf32>
    tpu.vector_store %arg12[%c0_121, %c0_122, %c0_123], %151 {strides = array<i32>} : memref<1x16x16xf32, #tpu.memory_space<vmem>>, vector<1x16x16xf32>,
    %c0_124 = arith.constant 0 : index
    %c8_125 = arith.constant 8 : index
    %c128_126 = arith.constant 128 : index
    %153 = vector.load %arg11[%c0_124, %c8_125, %c128_126] : memref<1x32x146xf32, #tpu.memory_space<vmem>>, vector<1x16x16xf32>
    tpu.vector_store %arg11[%c0_124, %c8_125, %c128_126], %150 {strides = array<i32>} : memref<1x32x146xf32, #tpu.memory_space<vmem>>, vector<1x16x16xf32>,
    %c2_i32 = arith.constant 2 : i32
    %154 = arith.cmpi eq, %arg1, %c2_i32 : i32
    %155 = arith.extui %154 : i1 to i32
    %c0_i32_127 = arith.constant 0 : i32
    %156 = arith.cmpi ne, %155, %c0_i32_127 : i32
    scf.if %156 {
      %c0_128 = arith.constant 0 : index
      %c0_129 = arith.constant 0 : index
      %c0_130 = arith.constant 0 : index
      %157 = vector.load %arg10[%c0_128, %c0_129, %c0_130] : memref<1x16x16xf32, #tpu.memory_space<vmem>>, vector<1x16x16xf32>
      tpu.vector_store %arg10[%c0_128, %c0_129, %c0_130], %150 {strides = array<i32>} : memref<1x16x16xf32, #tpu.memory_space<vmem>>, vector<1x16x16xf32>,
    } else {
    }
    return
  }
  func.func @transform_0(%arg0: i32, %arg1: i32) -> i32 {
    %c0_i32 = arith.constant 0 : i32
    %c0_i32_0 = arith.constant 0 : i32
    return %c0_i32 : i32
  }
  func.func @transform_1(%arg0: i32, %arg1: i32) -> (i32, i32, i32, i32) {
    %c0_i32 = arith.constant 0 : i32
    %c0_i32_0 = arith.constant 0 : i32
    %c0_i32_1 = arith.constant 0 : i32
    return %arg0, %arg1, %c0_i32, %c0_i32_0 : i32, i32, i32, i32
  }
  func.func @transform_2(%arg0: i32, %arg1: i32) -> (i32, i32, i32, i32) {
    %c0_i32 = arith.constant 0 : i32
    %c0_i32_0 = arith.constant 0 : i32
    %c0_i32_1 = arith.constant 0 : i32
    return %arg0, %arg1, %c0_i32, %c0_i32_0 : i32, i32, i32, i32
  }
  func.func @transform_3(%arg0: i32, %arg1: i32) -> (i32, i32, i32) {
    %c0_i32 = arith.constant 0 : i32
    %c0_i32_0 = arith.constant 0 : i32
    %c0_i32_1 = arith.constant 0 : i32
    return %arg0, %c0_i32, %c0_i32_0 : i32, i32, i32
  }
  func.func @transform_4(%arg0: i32, %arg1: i32) -> (i32, i32, i32) {
    %c0_i32 = arith.constant 0 : i32
    %c0_i32_0 = arith.constant 0 : i32
    %c0_i32_1 = arith.constant 0 : i32
    return %arg0, %c0_i32, %c0_i32_0 : i32, i32, i32
  }
  func.func @transform_5(%arg0: i32, %arg1: i32) -> (i32, i32, i32) {
    %c0_i32 = arith.constant 0 : i32
    %c0_i32_0 = arith.constant 0 : i32
    %c0_i32_1 = arith.constant 0 : i32
    return %arg0, %c0_i32, %c0_i32_0 : i32, i32, i32
  }
  func.func @transform_6(%arg0: i32, %arg1: i32) -> (i32, i32, i32) {
    %c0_i32 = arith.constant 0 : i32
    %c0_i32_0 = arith.constant 0 : i32
    %c0_i32_1 = arith.constant 0 : i32
    return %arg0, %c0_i32, %c0_i32_0 : i32, i32, i32
  }
  func.func @transform_7(%arg0: i32, %arg1: i32) -> (i32, i32, i32) {
    %c0_i32 = arith.constant 0 : i32
    %c0_i32_0 = arith.constant 0 : i32
    %c0_i32_1 = arith.constant 0 : i32
    return %arg0, %c0_i32, %c0_i32_0 : i32, i32, i32
  }
  func.func @transform_8(%arg0: i32, %arg1: i32) -> (i32, i32, i32) {
    %c0_i32 = arith.constant 0 : i32
    %c0_i32_0 = arith.constant 0 : i32
    %c0_i32_1 = arith.constant 0 : i32
    return %arg0, %c0_i32, %c0_i32_0 : i32, i32, i32
  }
}

module attributes {stable_mosaic.version = 11 : i64} {
  func.func @_fused_kernel(%arg0: i32, %arg1: i32, %arg2: memref<25xf32, #tpu.memory_space<smem>>, %arg3: memref<1x1x16x16xf32, #tpu.memory_space<vmem>>, %arg4: memref<1x1x16x16xf32, #tpu.memory_space<vmem>>, %arg5: memref<1x16x16xf32, #tpu.memory_space<vmem>>, %arg6: memref<1x16x16xf32, #tpu.memory_space<vmem>>, %arg7: memref<1x16x16xf32, #tpu.memory_space<vmem>>, %arg8: memref<1x16x16xf32, #tpu.memory_space<vmem>>, %arg9: memref<1x16x16xf32, #tpu.memory_space<vmem>>, %arg10: memref<1x16x16xf32, #tpu.memory_space<vmem>>, %arg11: memref<1x32x146xf32, #tpu.memory_space<vmem>>, %arg12: memref<1x16x16xf32, #tpu.memory_space<vmem>>, %arg13: memref<1x20x16xf32, #tpu.memory_space<vmem>>, %arg14: memref<1x20x16xf32, #tpu.memory_space<vmem>>, %arg15: memref<1x20x16xf32, #tpu.memory_space<vmem>>, %arg16: memref<1x20x16xf32, #tpu.memory_space<vmem>>) attributes {dimension_semantics = [#tpu.dimension_semantics<parallel>, #tpu.dimension_semantics<arbitrary>], iteration_bounds = array<i64: 2, 3>, scalar_prefetch = 0 : i64, scratch_operands = 6 : i64, tpu.core_type = #tpu.core_type<tc>, window_params = [{transform_indices = @transform_0, window_bounds = array<i64: 25>}, {transform_indices = @transform_1, window_bounds = array<i64: 1, 1, 16, 16>}, {transform_indices = @transform_2, window_bounds = array<i64: 1, 1, 16, 16>}, {transform_indices = @transform_3, window_bounds = array<i64: 1, 16, 16>}, {transform_indices = @transform_4, window_bounds = array<i64: 1, 16, 16>}, {transform_indices = @transform_5, window_bounds = array<i64: 1, 16, 16>}, {transform_indices = @transform_6, window_bounds = array<i64: 1, 16, 16>}, {transform_indices = @transform_7, window_bounds = array<i64: 1, 16, 16>}, {transform_indices = @transform_8, window_bounds = array<i64: 1, 16, 16>}]} {
    %c0_i32 = arith.constant 0 : i32
    %0 = arith.cmpi eq, %arg1, %c0_i32 : i32
    %1 = arith.extui %0 : i1 to i32
    %c0_i32_0 = arith.constant 0 : i32
    %2 = arith.cmpi ne, %1, %c0_i32_0 : i32
    scf.if %2 {
      %cst = arith.constant 0.000000e+00 : f32
      %157 = vector.broadcast %cst : f32 to vector<1x32x146xf32>
      %c0_128 = arith.constant 0 : index
      %c0_129 = arith.constant 0 : index
      %c0_130 = arith.constant 0 : index
      %158 = vector.load %arg11[%c0_128, %c0_129, %c0_130] : memref<1x32x146xf32, #tpu.memory_space<vmem>>, vector<1x32x146xf32>
      tpu.vector_store %arg11[%c0_128, %c0_129, %c0_130], %157 {strides = array<i32>} : memref<1x32x146xf32, #tpu.memory_space<vmem>>, vector<1x32x146xf32>,
      %c0_131 = arith.constant 0 : index
      %c0_132 = arith.constant 0 : index
      %c0_133 = arith.constant 0 : index
      %159 = vector.load %arg5[%c0_131, %c0_132, %c0_133] : memref<1x16x16xf32, #tpu.memory_space<vmem>>, vector<1x16x16xf32>
      %c0_134 = arith.constant 0 : index
      %c8_135 = arith.constant 8 : index
      %c128_136 = arith.constant 128 : index
      %160 = vector.load %arg11[%c0_134, %c8_135, %c128_136] : memref<1x32x146xf32, #tpu.memory_space<vmem>>, vector<1x16x16xf32>
      tpu.vector_store %arg11[%c0_134, %c8_135, %c128_136], %159 {strides = array<i32>} : memref<1x32x146xf32, #tpu.memory_space<vmem>>, vector<1x16x16xf32>,
      %c0_137 = arith.constant 0 : index
      %c0_138 = arith.constant 0 : index
      %c0_139 = arith.constant 0 : index
      %161 = vector.load %arg6[%c0_137, %c0_138, %c0_139] : memref<1x16x16xf32, #tpu.memory_space<vmem>>, vector<1x16x16xf32>
      %c0_140 = arith.constant 0 : index
      %c0_141 = arith.constant 0 : index
      %c0_142 = arith.constant 0 : index
      %162 = vector.load %arg12[%c0_140, %c0_141, %c0_142] : memref<1x16x16xf32, #tpu.memory_space<vmem>>, vector<1x16x16xf32>
      tpu.vector_store %arg12[%c0_140, %c0_141, %c0_142], %161 {strides = array<i32>} : memref<1x16x16xf32, #tpu.memory_space<vmem>>, vector<1x16x16xf32>,
    } else {
    }
    %c0 = arith.constant 0 : index
    %c8 = arith.constant 8 : index
    %c128 = arith.constant 128 : index
    %3 = vector.load %arg11[%c0, %c8, %c128] : memref<1x32x146xf32, #tpu.memory_space<vmem>>, vector<1x16x16xf32>
    %c0_1 = arith.constant 0 : index
    %c0_2 = arith.constant 0 : index
    %c0_3 = arith.constant 0 : index
    %4 = vector.load %arg8[%c0_1, %c0_2, %c0_3] : memref<1x16x16xf32, #tpu.memory_space<vmem>>, vector<1x16x16xf32>
    %5 = arith.mulf %4, %3 : vector<1x16x16xf32>
    %c0_4 = arith.constant 0 : index
    %c0_5 = arith.constant 0 : index
    %c0_6 = arith.constant 0 : index
    %6 = vector.load %arg9[%c0_4, %c0_5, %c0_6] : memref<1x16x16xf32, #tpu.memory_space<vmem>>, vector<1x16x16xf32>
    %c0_7 = arith.constant 0 : index
    %c0_8 = arith.constant 0 : index
    %c0_9 = arith.constant 0 : index
    %7 = vector.load %arg12[%c0_7, %c0_8, %c0_9] : memref<1x16x16xf32, #tpu.memory_space<vmem>>, vector<1x16x16xf32>
    %8 = arith.mulf %6, %7 : vector<1x16x16xf32>
    %9 = arith.subf %5, %8 : vector<1x16x16xf32>
    %c0_10 = arith.constant 0 : index
    %c0_11 = arith.constant 0 : index
    %c0_12 = arith.constant 0 : index
    %c0_13 = arith.constant 0 : index
    %10 = vector.load %arg3[%c0_10, %c0_11, %c0_12, %c0_13] : memref<1x1x16x16xf32, #tpu.memory_space<vmem>>, vector<1x1x16x16xf32>
    %11 = vector.shape_cast %10 : vector<1x1x16x16xf32> to vector<1x16x16xf32>
    %c0_14 = arith.constant 0 : index
    %c0_15 = arith.constant 0 : index
    %c0_16 = arith.constant 0 : index
    %c0_17 = arith.constant 0 : index
    %12 = vector.load %arg4[%c0_14, %c0_15, %c0_16, %c0_17] : memref<1x1x16x16xf32, #tpu.memory_space<vmem>>, vector<1x1x16x16xf32>
    %13 = vector.shape_cast %12 : vector<1x1x16x16xf32> to vector<1x16x16xf32>
    %14 = arith.subf %11, %13 : vector<1x16x16xf32>
    %15 = arith.subf %9, %14 : vector<1x16x16xf32>
    %c0_18 = arith.constant 0 : index
    %c6 = arith.constant 6 : index
    %c126 = arith.constant 126 : index
    %16 = vector.load %arg11[%c0_18, %c6, %c126] : memref<1x32x146xf32, #tpu.memory_space<vmem>>, vector<1x20x16xf32>
    %c0_19 = arith.constant 0 : index
    %c0_20 = arith.constant 0 : index
    %c0_21 = arith.constant 0 : index
    %17 = vector.load %arg13[%c0_19, %c0_20, %c0_21] : memref<1x20x16xf32, #tpu.memory_space<vmem>>, vector<1x20x16xf32>
    tpu.vector_store %arg13[%c0_19, %c0_20, %c0_21], %16 {strides = array<i32>} : memref<1x20x16xf32, #tpu.memory_space<vmem>>, vector<1x20x16xf32>,
    %c0_22 = arith.constant 0 : index
    %c6_23 = arith.constant 6 : index
    %c127 = arith.constant 127 : index
    %18 = vector.load %arg11[%c0_22, %c6_23, %c127] : memref<1x32x146xf32, #tpu.memory_space<vmem>>, vector<1x20x16xf32>
    %c0_24 = arith.constant 0 : index
    %c0_25 = arith.constant 0 : index
    %c0_26 = arith.constant 0 : index
    %19 = vector.load %arg14[%c0_24, %c0_25, %c0_26] : memref<1x20x16xf32, #tpu.memory_space<vmem>>, vector<1x20x16xf32>
    tpu.vector_store %arg14[%c0_24, %c0_25, %c0_26], %18 {strides = array<i32>} : memref<1x20x16xf32, #tpu.memory_space<vmem>>, vector<1x20x16xf32>,
    %c0_27 = arith.constant 0 : index
    %c6_28 = arith.constant 6 : index
    %c129 = arith.constant 129 : index
    %20 = vector.load %arg11[%c0_27, %c6_28, %c129] : memref<1x32x146xf32, #tpu.memory_space<vmem>>, vector<1x20x16xf32>
    %c0_29 = arith.constant 0 : index
    %c0_30 = arith.constant 0 : index
    %c0_31 = arith.constant 0 : index
    %21 = vector.load %arg15[%c0_29, %c0_30, %c0_31] : memref<1x20x16xf32, #tpu.memory_space<vmem>>, vector<1x20x16xf32>
    tpu.vector_store %arg15[%c0_29, %c0_30, %c0_31], %20 {strides = array<i32>} : memref<1x20x16xf32, #tpu.memory_space<vmem>>, vector<1x20x16xf32>,
    %c0_32 = arith.constant 0 : index
    %c6_33 = arith.constant 6 : index
    %c130 = arith.constant 130 : index
    %22 = vector.load %arg11[%c0_32, %c6_33, %c130] : memref<1x32x146xf32, #tpu.memory_space<vmem>>, vector<1x20x16xf32>
    %c0_34 = arith.constant 0 : index
    %c0_35 = arith.constant 0 : index
    %c0_36 = arith.constant 0 : index
    %23 = vector.load %arg16[%c0_34, %c0_35, %c0_36] : memref<1x20x16xf32, #tpu.memory_space<vmem>>, vector<1x20x16xf32>
    tpu.vector_store %arg16[%c0_34, %c0_35, %c0_36], %22 {strides = array<i32>} : memref<1x20x16xf32, #tpu.memory_space<vmem>>, vector<1x20x16xf32>,
    %c0_37 = arith.constant 0 : index
    %24 = memref.load %arg2[%c0_37] : memref<25xf32, #tpu.memory_space<smem>>
    %c0_38 = arith.constant 0 : index
    %c0_39 = arith.constant 0 : index
    %c0_40 = arith.constant 0 : index
    %25 = vector.load %arg13[%c0_38, %c0_39, %c0_40] : memref<1x20x16xf32, #tpu.memory_space<vmem>>, vector<1x16x16xf32>
    %26 = vector.broadcast %24 : f32 to vector<1x16x16xf32>
    %27 = arith.mulf %26, %25 : vector<1x16x16xf32>
    %28 = arith.addf %15, %27 : vector<1x16x16xf32>
    %c5 = arith.constant 5 : index
    %29 = memref.load %arg2[%c5] : memref<25xf32, #tpu.memory_space<smem>>
    %c0_41 = arith.constant 0 : index
    %c1 = arith.constant 1 : index
    %c0_42 = arith.constant 0 : index
    %30 = vector.load %arg13[%c0_41, %c1, %c0_42] : memref<1x20x16xf32, #tpu.memory_space<vmem>>, vector<1x16x16xf32>
    %31 = vector.broadcast %29 : f32 to vector<1x16x16xf32>
    %32 = arith.mulf %31, %30 : vector<1x16x16xf32>
    %33 = arith.addf %28, %32 : vector<1x16x16xf32>
    %c10 = arith.constant 10 : index
    %34 = memref.load %arg2[%c10] : memref<25xf32, #tpu.memory_space<smem>>
    %c0_43 = arith.constant 0 : index
    %c2 = arith.constant 2 : index
    %c0_44 = arith.constant 0 : index
    %35 = vector.load %arg13[%c0_43, %c2, %c0_44] : memref<1x20x16xf32, #tpu.memory_space<vmem>>, vector<1x16x16xf32>
    %36 = vector.broadcast %34 : f32 to vector<1x16x16xf32>
    %37 = arith.mulf %36, %35 : vector<1x16x16xf32>
    %38 = arith.addf %33, %37 : vector<1x16x16xf32>
    %c15 = arith.constant 15 : index
    %39 = memref.load %arg2[%c15] : memref<25xf32, #tpu.memory_space<smem>>
    %c0_45 = arith.constant 0 : index
    %c3 = arith.constant 3 : index
    %c0_46 = arith.constant 0 : index
    %40 = vector.load %arg13[%c0_45, %c3, %c0_46] : memref<1x20x16xf32, #tpu.memory_space<vmem>>, vector<1x16x16xf32>
    %41 = vector.broadcast %39 : f32 to vector<1x16x16xf32>
    %42 = arith.mulf %41, %40 : vector<1x16x16xf32>
    %43 = arith.addf %38, %42 : vector<1x16x16xf32>
    %c20 = arith.constant 20 : index
    %44 = memref.load %arg2[%c20] : memref<25xf32, #tpu.memory_space<smem>>
    %c0_47 = arith.constant 0 : index
    %c4 = arith.constant 4 : index
    %c0_48 = arith.constant 0 : index
    %45 = vector.load %arg13[%c0_47, %c4, %c0_48] : memref<1x20x16xf32, #tpu.memory_space<vmem>>, vector<1x16x16xf32>
    %46 = vector.broadcast %44 : f32 to vector<1x16x16xf32>
    %47 = arith.mulf %46, %45 : vector<1x16x16xf32>
    %48 = arith.addf %43, %47 : vector<1x16x16xf32>
    %c1_49 = arith.constant 1 : index
    %49 = memref.load %arg2[%c1_49] : memref<25xf32, #tpu.memory_space<smem>>
    %c0_50 = arith.constant 0 : index
    %c0_51 = arith.constant 0 : index
    %c0_52 = arith.constant 0 : index
    %50 = vector.load %arg14[%c0_50, %c0_51, %c0_52] : memref<1x20x16xf32, #tpu.memory_space<vmem>>, vector<1x16x16xf32>
    %51 = vector.broadcast %49 : f32 to vector<1x16x16xf32>
    %52 = arith.mulf %51, %50 : vector<1x16x16xf32>
    %53 = arith.addf %48, %52 : vector<1x16x16xf32>
    %c6_53 = arith.constant 6 : index
    %54 = memref.load %arg2[%c6_53] : memref<25xf32, #tpu.memory_space<smem>>
    %c0_54 = arith.constant 0 : index
    %c1_55 = arith.constant 1 : index
    %c0_56 = arith.constant 0 : index
    %55 = vector.load %arg14[%c0_54, %c1_55, %c0_56] : memref<1x20x16xf32, #tpu.memory_space<vmem>>, vector<1x16x16xf32>
    %56 = vector.broadcast %54 : f32 to vector<1x16x16xf32>
    %57 = arith.mulf %56, %55 : vector<1x16x16xf32>
    %58 = arith.addf %53, %57 : vector<1x16x16xf32>
    %c11 = arith.constant 11 : index
    %59 = memref.load %arg2[%c11] : memref<25xf32, #tpu.memory_space<smem>>
    %c0_57 = arith.constant 0 : index
    %c2_58 = arith.constant 2 : index
    %c0_59 = arith.constant 0 : index
    %60 = vector.load %arg14[%c0_57, %c2_58, %c0_59] : memref<1x20x16xf32, #tpu.memory_space<vmem>>, vector<1x16x16xf32>
    %61 = vector.broadcast %59 : f32 to vector<1x16x16xf32>
    %62 = arith.mulf %61, %60 : vector<1x16x16xf32>
    %63 = arith.addf %58, %62 : vector<1x16x16xf32>
    %c16 = arith.constant 16 : index
    %64 = memref.load %arg2[%c16] : memref<25xf32, #tpu.memory_space<smem>>
    %c0_60 = arith.constant 0 : index
    %c3_61 = arith.constant 3 : index
    %c0_62 = arith.constant 0 : index
    %65 = vector.load %arg14[%c0_60, %c3_61, %c0_62] : memref<1x20x16xf32, #tpu.memory_space<vmem>>, vector<1x16x16xf32>
    %66 = vector.broadcast %64 : f32 to vector<1x16x16xf32>
    %67 = arith.mulf %66, %65 : vector<1x16x16xf32>
    %68 = arith.addf %63, %67 : vector<1x16x16xf32>
    %c21 = arith.constant 21 : index
    %69 = memref.load %arg2[%c21] : memref<25xf32, #tpu.memory_space<smem>>
    %c0_63 = arith.constant 0 : index
    %c4_64 = arith.constant 4 : index
    %c0_65 = arith.constant 0 : index
    %70 = vector.load %arg14[%c0_63, %c4_64, %c0_65] : memref<1x20x16xf32, #tpu.memory_space<vmem>>, vector<1x16x16xf32>
    %71 = vector.broadcast %69 : f32 to vector<1x16x16xf32>
    %72 = arith.mulf %71, %70 : vector<1x16x16xf32>
    %73 = arith.addf %68, %72 : vector<1x16x16xf32>
    %c2_66 = arith.constant 2 : index
    %74 = memref.load %arg2[%c2_66] : memref<25xf32, #tpu.memory_space<smem>>
    %c0_67 = arith.constant 0 : index
    %c6_68 = arith.constant 6 : index
    %c128_69 = arith.constant 128 : index
    %75 = vector.load %arg11[%c0_67, %c6_68, %c128_69] : memref<1x32x146xf32, #tpu.memory_space<vmem>>, vector<1x16x16xf32>
    %76 = vector.broadcast %74 : f32 to vector<1x16x16xf32>
    %77 = arith.mulf %76, %75 : vector<1x16x16xf32>
    %78 = arith.addf %73, %77 : vector<1x16x16xf32>
    %c7 = arith.constant 7 : index
    %79 = memref.load %arg2[%c7] : memref<25xf32, #tpu.memory_space<smem>>
    %c0_70 = arith.constant 0 : index
    %c7_71 = arith.constant 7 : index
    %c128_72 = arith.constant 128 : index
    %80 = vector.load %arg11[%c0_70, %c7_71, %c128_72] : memref<1x32x146xf32, #tpu.memory_space<vmem>>, vector<1x16x16xf32>
    %81 = vector.broadcast %79 : f32 to vector<1x16x16xf32>
    %82 = arith.mulf %81, %80 : vector<1x16x16xf32>
    %83 = arith.addf %78, %82 : vector<1x16x16xf32>
    %c12 = arith.constant 12 : index
    %84 = memref.load %arg2[%c12] : memref<25xf32, #tpu.memory_space<smem>>
    %c0_73 = arith.constant 0 : index
    %c8_74 = arith.constant 8 : index
    %c128_75 = arith.constant 128 : index
    %85 = vector.load %arg11[%c0_73, %c8_74, %c128_75] : memref<1x32x146xf32, #tpu.memory_space<vmem>>, vector<1x16x16xf32>
    %86 = vector.broadcast %84 : f32 to vector<1x16x16xf32>
    %87 = arith.mulf %86, %85 : vector<1x16x16xf32>
    %88 = arith.addf %83, %87 : vector<1x16x16xf32>
    %c17 = arith.constant 17 : index
    %89 = memref.load %arg2[%c17] : memref<25xf32, #tpu.memory_space<smem>>
    %c0_76 = arith.constant 0 : index
    %c9 = arith.constant 9 : index
    %c128_77 = arith.constant 128 : index
    %90 = vector.load %arg11[%c0_76, %c9, %c128_77] : memref<1x32x146xf32, #tpu.memory_space<vmem>>, vector<1x16x16xf32>
    %91 = vector.broadcast %89 : f32 to vector<1x16x16xf32>
    %92 = arith.mulf %91, %90 : vector<1x16x16xf32>
    %93 = arith.addf %88, %92 : vector<1x16x16xf32>
    %c22 = arith.constant 22 : index
    %94 = memref.load %arg2[%c22] : memref<25xf32, #tpu.memory_space<smem>>
    %c0_78 = arith.constant 0 : index
    %c10_79 = arith.constant 10 : index
    %c128_80 = arith.constant 128 : index
    %95 = vector.load %arg11[%c0_78, %c10_79, %c128_80] : memref<1x32x146xf32, #tpu.memory_space<vmem>>, vector<1x16x16xf32>
    %96 = vector.broadcast %94 : f32 to vector<1x16x16xf32>
    %97 = arith.mulf %96, %95 : vector<1x16x16xf32>
    %98 = arith.addf %93, %97 : vector<1x16x16xf32>
    %c3_81 = arith.constant 3 : index
    %99 = memref.load %arg2[%c3_81] : memref<25xf32, #tpu.memory_space<smem>>
    %c0_82 = arith.constant 0 : index
    %c0_83 = arith.constant 0 : index
    %c0_84 = arith.constant 0 : index
    %100 = vector.load %arg15[%c0_82, %c0_83, %c0_84] : memref<1x20x16xf32, #tpu.memory_space<vmem>>, vector<1x16x16xf32>
    %101 = vector.broadcast %99 : f32 to vector<1x16x16xf32>
    %102 = arith.mulf %101, %100 : vector<1x16x16xf32>
    %103 = arith.addf %98, %102 : vector<1x16x16xf32>
    %c8_85 = arith.constant 8 : index
    %104 = memref.load %arg2[%c8_85] : memref<25xf32, #tpu.memory_space<smem>>
    %c0_86 = arith.constant 0 : index
    %c1_87 = arith.constant 1 : index
    %c0_88 = arith.constant 0 : index
    %105 = vector.load %arg15[%c0_86, %c1_87, %c0_88] : memref<1x20x16xf32, #tpu.memory_space<vmem>>, vector<1x16x16xf32>
    %106 = vector.broadcast %104 : f32 to vector<1x16x16xf32>
    %107 = arith.mulf %106, %105 : vector<1x16x16xf32>
    %108 = arith.addf %103, %107 : vector<1x16x16xf32>
    %c13 = arith.constant 13 : index
    %109 = memref.load %arg2[%c13] : memref<25xf32, #tpu.memory_space<smem>>
    %c0_89 = arith.constant 0 : index
    %c2_90 = arith.constant 2 : index
    %c0_91 = arith.constant 0 : index
    %110 = vector.load %arg15[%c0_89, %c2_90, %c0_91] : memref<1x20x16xf32, #tpu.memory_space<vmem>>, vector<1x16x16xf32>
    %111 = vector.broadcast %109 : f32 to vector<1x16x16xf32>
    %112 = arith.mulf %111, %110 : vector<1x16x16xf32>
    %113 = arith.addf %108, %112 : vector<1x16x16xf32>
    %c18 = arith.constant 18 : index
    %114 = memref.load %arg2[%c18] : memref<25xf32, #tpu.memory_space<smem>>
    %c0_92 = arith.constant 0 : index
    %c3_93 = arith.constant 3 : index
    %c0_94 = arith.constant 0 : index
    %115 = vector.load %arg15[%c0_92, %c3_93, %c0_94] : memref<1x20x16xf32, #tpu.memory_space<vmem>>, vector<1x16x16xf32>
    %116 = vector.broadcast %114 : f32 to vector<1x16x16xf32>
    %117 = arith.mulf %116, %115 : vector<1x16x16xf32>
    %118 = arith.addf %113, %117 : vector<1x16x16xf32>
    %c23 = arith.constant 23 : index
    %119 = memref.load %arg2[%c23] : memref<25xf32, #tpu.memory_space<smem>>
    %c0_95 = arith.constant 0 : index
    %c4_96 = arith.constant 4 : index
    %c0_97 = arith.constant 0 : index
    %120 = vector.load %arg15[%c0_95, %c4_96, %c0_97] : memref<1x20x16xf32, #tpu.memory_space<vmem>>, vector<1x16x16xf32>
    %121 = vector.broadcast %119 : f32 to vector<1x16x16xf32>
    %122 = arith.mulf %121, %120 : vector<1x16x16xf32>
    %123 = arith.addf %118, %122 : vector<1x16x16xf32>
    %c4_98 = arith.constant 4 : index
    %124 = memref.load %arg2[%c4_98] : memref<25xf32, #tpu.memory_space<smem>>
    %c0_99 = arith.constant 0 : index
    %c0_100 = arith.constant 0 : index
    %c0_101 = arith.constant 0 : index
    %125 = vector.load %arg16[%c0_99, %c0_100, %c0_101] : memref<1x20x16xf32, #tpu.memory_space<vmem>>, vector<1x16x16xf32>
    %126 = vector.broadcast %124 : f32 to vector<1x16x16xf32>
    %127 = arith.mulf %126, %125 : vector<1x16x16xf32>
    %128 = arith.addf %123, %127 : vector<1x16x16xf32>
    %c9_102 = arith.constant 9 : index
    %129 = memref.load %arg2[%c9_102] : memref<25xf32, #tpu.memory_space<smem>>
    %c0_103 = arith.constant 0 : index
    %c1_104 = arith.constant 1 : index
    %c0_105 = arith.constant 0 : index
    %130 = vector.load %arg16[%c0_103, %c1_104, %c0_105] : memref<1x20x16xf32, #tpu.memory_space<vmem>>, vector<1x16x16xf32>
    %131 = vector.broadcast %129 : f32 to vector<1x16x16xf32>
    %132 = arith.mulf %131, %130 : vector<1x16x16xf32>
    %133 = arith.addf %128, %132 : vector<1x16x16xf32>
    %c14 = arith.constant 14 : index
    %134 = memref.load %arg2[%c14] : memref<25xf32, #tpu.memory_space<smem>>
    %c0_106 = arith.constant 0 : index
    %c2_107 = arith.constant 2 : index
    %c0_108 = arith.constant 0 : index
    %135 = vector.load %arg16[%c0_106, %c2_107, %c0_108] : memref<1x20x16xf32, #tpu.memory_space<vmem>>, vector<1x16x16xf32>
    %136 = vector.broadcast %134 : f32 to vector<1x16x16xf32>
    %137 = arith.mulf %136, %135 : vector<1x16x16xf32>
    %138 = arith.addf %133, %137 : vector<1x16x16xf32>
    %c19 = arith.constant 19 : index
    %139 = memref.load %arg2[%c19] : memref<25xf32, #tpu.memory_space<smem>>
    %c0_109 = arith.constant 0 : index
    %c3_110 = arith.constant 3 : index
    %c0_111 = arith.constant 0 : index
    %140 = vector.load %arg16[%c0_109, %c3_110, %c0_111] : memref<1x20x16xf32, #tpu.memory_space<vmem>>, vector<1x16x16xf32>
    %141 = vector.broadcast %139 : f32 to vector<1x16x16xf32>
    %142 = arith.mulf %141, %140 : vector<1x16x16xf32>
    %143 = arith.addf %138, %142 : vector<1x16x16xf32>
    %c24 = arith.constant 24 : index
    %144 = memref.load %arg2[%c24] : memref<25xf32, #tpu.memory_space<smem>>
    %c0_112 = arith.constant 0 : index
    %c4_113 = arith.constant 4 : index
    %c0_114 = arith.constant 0 : index
    %145 = vector.load %arg16[%c0_112, %c4_113, %c0_114] : memref<1x20x16xf32, #tpu.memory_space<vmem>>, vector<1x16x16xf32>
    %146 = vector.broadcast %144 : f32 to vector<1x16x16xf32>
    %147 = arith.mulf %146, %145 : vector<1x16x16xf32>
    %148 = arith.addf %143, %147 : vector<1x16x16xf32>
    %c0_115 = arith.constant 0 : index
    %c0_116 = arith.constant 0 : index
    %c0_117 = arith.constant 0 : index
    %149 = vector.load %arg7[%c0_115, %c0_116, %c0_117] : memref<1x16x16xf32, #tpu.memory_space<vmem>>, vector<1x16x16xf32>
    %150 = arith.mulf %149, %148 : vector<1x16x16xf32>
    %c0_118 = arith.constant 0 : index
    %c8_119 = arith.constant 8 : index
    %c128_120 = arith.constant 128 : index
    %151 = vector.load %arg11[%c0_118, %c8_119, %c128_120] : memref<1x32x146xf32, #tpu.memory_space<vmem>>, vector<1x16x16xf32>
    %c0_121 = arith.constant 0 : index
    %c0_122 = arith.constant 0 : index
    %c0_123 = arith.constant 0 : index
    %152 = vector.load %arg12[%c0_121, %c0_122, %c0_123] : memref<1x16x16xf32, #tpu.memory_space<vmem>>, vector<1x16x16xf32>
    tpu.vector_store %arg12[%c0_121, %c0_122, %c0_123], %151 {strides = array<i32>} : memref<1x16x16xf32, #tpu.memory_space<vmem>>, vector<1x16x16xf32>,
    %c0_124 = arith.constant 0 : index
    %c8_125 = arith.constant 8 : index
    %c128_126 = arith.constant 128 : index
    %153 = vector.load %arg11[%c0_124, %c8_125, %c128_126] : memref<1x32x146xf32, #tpu.memory_space<vmem>>, vector<1x16x16xf32>
    tpu.vector_store %arg11[%c0_124, %c8_125, %c128_126], %150 {strides = array<i32>} : memref<1x32x146xf32, #tpu.memory_space<vmem>>, vector<1x16x16xf32>,
    %c2_i32 = arith.constant 2 : i32
    %154 = arith.cmpi eq, %arg1, %c2_i32 : i32
    %155 = arith.extui %154 : i1 to i32
    %c0_i32_127 = arith.constant 0 : i32
    %156 = arith.cmpi ne, %155, %c0_i32_127 : i32
    scf.if %156 {
      %c0_128 = arith.constant 0 : index
      %c0_129 = arith.constant 0 : index
      %c0_130 = arith.constant 0 : index
      %157 = vector.load %arg10[%c0_128, %c0_129, %c0_130] : memref<1x16x16xf32, #tpu.memory_space<vmem>>, vector<1x16x16xf32>
      tpu.vector_store %arg10[%c0_128, %c0_129, %c0_130], %150 {strides = array<i32>} : memref<1x16x16xf32, #tpu.memory_space<vmem>>, vector<1x16x16xf32>,
    } else {
    }
    return
  }
  func.func @transform_0(%arg0: i32, %arg1: i32) -> i32 {
    %c0_i32 = arith.constant 0 : i32
    %c0_i32_0 = arith.constant 0 : i32
    return %c0_i32 : i32
  }
  func.func @transform_1(%arg0: i32, %arg1: i32) -> (i32, i32, i32, i32) {
    %c0_i32 = arith.constant 0 : i32
    %c0_i32_0 = arith.constant 0 : i32
    %c0_i32_1 = arith.constant 0 : i32
    return %arg0, %arg1, %c0_i32, %c0_i32_0 : i32, i32, i32, i32
  }
  func.func @transform_2(%arg0: i32, %arg1: i32) -> (i32, i32, i32, i32) {
    %c0_i32 = arith.constant 0 : i32
    %c0_i32_0 = arith.constant 0 : i32
    %c0_i32_1 = arith.constant 0 : i32
    return %arg0, %arg1, %c0_i32, %c0_i32_0 : i32, i32, i32, i32
  }
  func.func @transform_3(%arg0: i32, %arg1: i32) -> (i32, i32, i32) {
    %c0_i32 = arith.constant 0 : i32
    %c0_i32_0 = arith.constant 0 : i32
    %c0_i32_1 = arith.constant 0 : i32
    return %arg0, %c0_i32, %c0_i32_0 : i32, i32, i32
  }
  func.func @transform_4(%arg0: i32, %arg1: i32) -> (i32, i32, i32) {
    %c0_i32 = arith.constant 0 : i32
    %c0_i32_0 = arith.constant 0 : i32
    %c0_i32_1 = arith.constant 0 : i32
    return %arg0, %c0_i32, %c0_i32_0 : i32, i32, i32
  }
  func.func @transform_5(%arg0: i32, %arg1: i32) -> (i32, i32, i32) {
    %c0_i32 = arith.constant 0 : i32
    %c0_i32_0 = arith.constant 0 : i32
    %c0_i32_1 = arith.constant 0 : i32
    return %arg0, %c0_i32, %c0_i32_0 : i32, i32, i32
  }
  func.func @transform_6(%arg0: i32, %arg1: i32) -> (i32, i32, i32) {
    %c0_i32 = arith.constant 0 : i32
    %c0_i32_0 = arith.constant 0 : i32
    %c0_i32_1 = arith.constant 0 : i32
    return %arg0, %c0_i32, %c0_i32_0 : i32, i32, i32
  }
  func.func @transform_7(%arg0: i32, %arg1: i32) -> (i32, i32, i32) {
    %c0_i32 = arith.constant 0 : i32
    %c0_i32_0 = arith.constant 0 : i32
    %c0_i32_1 = arith.constant 0 : i32
    return %arg0, %c0_i32, %c0_i32_0 : i32, i32, i32
  }
  func.func @transform_8(%arg0: i32, %arg1: i32) -> (i32, i32, i32) {
    %c0_i32 = arith.constant 0 : i32
    %c0_i32_0 = arith.constant 0 : i32
    %c0_i32_1 = arith.constant 0 : i32
    return %arg0, %c0_i32, %c0_i32_0 : i32, i32, i32
  }
}

</mosaic_0001>

<llo_original>
// kernel: tpu_custom_call.1
$region0: #{tpu_custom_call.1}
  #allocation0 [shape = 'u32[]', space=smem, size = 0x4, offset = 0x4, fixed_abs, tag = 'smem constant byte address 0x4 - core index']
  #allocation1 [shape = 'u32[144,128]{1,0:T(1,128)}', space=vmem, size = 0x12000, scoped, tag = 'internal scratch']
  #allocation2 [shape = 'f32[1,32,146]{2,1,0:T(8,128)}', space=vmem, size = 0x8000, scoped, tag = 'scratch operand']
  #allocation3 [shape = 'f32[1,16,16]{2,1,0:T(8,128)}', space=vmem, size = 0x2000, scoped, tag = 'scratch operand']
  #allocation4 [shape = 'f32[1,20,16]{2,1,0:T(8,128)}', space=vmem, size = 0x3000, scoped, tag = 'scratch operand']
  #allocation5 [shape = 'f32[1,20,16]{2,1,0:T(8,128)}', space=vmem, size = 0x3000, scoped, tag = 'scratch operand']
  #allocation6 [shape = 'f32[1,20,16]{2,1,0:T(8,128)}', space=vmem, size = 0x3000, scoped, tag = 'scratch operand']
  #allocation7 [shape = 'f32[1,20,16]{2,1,0:T(8,128)}', space=vmem, size = 0x3000, scoped, tag = 'scratch operand']
  %s0 = inlined_call_operand.hbm [shape: f32[25], index: 0, kind: input, shape index: {}]
  %s1 = inlined_call_operand.hbm [shape: f32[2,3,16,16], index: 1, kind: input, shape index: {}]
  %s2 = inlined_call_operand.hbm [shape: f32[2,3,16,16], index: 2, kind: input, shape index: {}]
  %s3 = inlined_call_operand.hbm [shape: f32[2,16,16], index: 3, kind: input, shape index: {}]
  %s4 = inlined_call_operand.hbm [shape: f32[2,16,16], index: 4, kind: input, shape index: {}]
  %s5 = inlined_call_operand.hbm [shape: f32[2,16,16], index: 5, kind: input, shape index: {}]
  %s6 = inlined_call_operand.hbm [shape: f32[2,16,16], index: 6, kind: input, shape index: {}]
  %s7 = inlined_call_operand.hbm [shape: f32[2,16,16], index: 7, kind: input, shape index: {}]
  %s8 = inlined_call_operand.hbm [shape: f32[2,16,16], index: 8, kind: output, shape index: {}]
  %s9 = sld [smem:[#allocation0]]
  $region105: #{tpu_custom_call.1} parent=0
    _
  %s11 = ssub.s32 1, %s9
  %s12 = scalar_select 0, %s11, %s9
  $region1: #{tpu_custom_call.1} parent=0
    #allocation8 [shape = 'u8[512]{0}', space=smem, size = 0x200, scoped, tag = 'input window, operand 0, single buffered']
    #allocation9 [shape = 's32[2]{0}', space=sflag, size = 0x8, scoped, tag = 'scoped memory for tpu_custom_call.1']
    #allocation10 [shape = 's32[2]{0}', space=sflag, size = 0x8, scoped, tag = 'scoped memory for tpu_custom_call.1']
    #allocation11 [shape = 's32[2]{0}', space=sflag, size = 0x8, scoped, tag = 'scoped memory for tpu_custom_call.1']
    #allocation12 [shape = 'u8[16384]{0}', space=vmem, size = 0x4000, scoped, tag = 'input window, operand 1']
    #allocation13 [shape = 'u8[16384]{0}', space=vmem, size = 0x4000, scoped, tag = 'input window, operand 2']
    #allocation14 [shape = 's32[2]{0}', space=sflag, size = 0x8, scoped, tag = 'scoped memory for tpu_custom_call.1']
    #allocation15 [shape = 'u8[8192]{0}', space=vmem, size = 0x2000, scoped, tag = 'input window, operand 3, single buffered']
    #allocation16 [shape = 'u8[8192]{0}', space=vmem, size = 0x2000, scoped, tag = 'input window, operand 4, single buffered']
    #allocation17 [shape = 's32[1]{0}', space=sflag, size = 0x4, scoped, tag = 'scoped memory for tpu_custom_call.1']
    #allocation18 [shape = 'u8[8192]{0}', space=vmem, size = 0x2000, scoped, tag = 'input window, operand 5, single buffered']
    #allocation19 [shape = 'u8[8192]{0}', space=vmem, size = 0x2000, scoped, tag = 'input window, operand 6, single buffered']
    #allocation20 [shape = 's32[1]{0}', space=sflag, size = 0x4, scoped, tag = 'scoped memory for tpu_custom_call.1']
    #allocation21 [shape = 'u8[8192]{0}', space=vmem, size = 0x2000, scoped, tag = 'input window, operand 7, single buffered']
    #allocation22 [shape = 'u8[8192]{0}', space=vmem, size = 0x2000, scoped, tag = 'output window, operand 0, single buffered']
    %13 = vsyncpa [#allocation11], 0
    %14 = vsyncpa [#allocation9], 0
    %s15 = scalar_lea.sflag [#allocation9], 1
    %16 = vsyncpa %s15, 0
    %17 = vsyncpa [#allocation14], 0
    %s18 = scalar_lea.sflag [#allocation14], 1
    %19 = vsyncpa %s18, 0
    %20 = vsyncpa [#allocation17], 0
    %21 = vsyncpa [#allocation20], 0
    %22 = vsyncpa [#allocation10], 0
    loop: start=0, step=1, limit=8
    $region2: #{tpu_custom_call.1} parent=1 // loop_pre_header
      _
    $region3: #{tpu_custom_call.1} parent=1 // loop_header
      %s24 = sphi 0, %s28
      %p25 = scmp.ge.s32.totalorder %s24, 8
      %s31 = sphi 0, %s43
      %s32 = sphi 0, %s39
      %s33 = sphi 0, %s31
      %s34 = sphi 0, %s32
      %s35 = sphi 0, %s33
      %s36 = sphi 0, %s34
      %s44 = sphi 0, %s44
      %s46 = sphi 0, %s44
      %s47 = sphi 0, %s46
      %s61 = sphi 0, %s47
      %s69 = sphi 0, %s71
      %s72 = sphi 0, %s69
      %s73 = sphi 0, %s72
      %s89 = sphi 0, %s73
      %s97 = sphi 0, %s99
      %s100 = sphi 0, %s97
      %s101 = sphi 0, %s100
      %s117 = sphi 0, %s101
      %s123 = sphi 0, %s125
      %s126 = sphi 0, %s123
      %s127 = sphi 0, %s126
      %s143 = sphi 0, %s127
      %s149 = sphi 0, %s151
      %s152 = sphi 0, %s149
      %s153 = sphi 0, %s152
      %s169 = sphi 0, %s153
      %s175 = sphi 0, %s177
      %s178 = sphi 0, %s175
      %s179 = sphi 0, %s178
      %s195 = sphi 0, %s179
      %s201 = sphi 0, %s203
      %s204 = sphi 0, %s201
      %s205 = sphi 0, %s204
      %s221 = sphi 0, %s205
      %s227 = sphi 0, %s229
      %s230 = sphi 0, %s227
      %s231 = sphi 0, %s230
      %s247 = sphi 0, %s231
      %s253 = sphi 0, %s255
      %s256 = sphi 0, %s253
      %s257 = sphi 0, %s256
      %s273 = sphi 0, %s257
    $region4: #{tpu_custom_call.1} parent=1 // loop_header_branch
      %27 = sbr.rel (%p25) target = $region8
    $region5: #{tpu_custom_call.1} parent=1 // loop_body
      %s29 = ssub.s32 %s24, 1
      %s30 = ssub.s32 %s24, 2
      %s37 = sadd.s32 1, %s32
      %p38 = scmp.ge.s32.totalorder %s37, 3
      %s39 = scalar_select %p38, 0, %s37
      %s40 = sadd.s32 1, %s31
      %s41 = scalar_select %p38, %s40, %s31
      %p42 = scmp.ge.s32.totalorder %s41, 2
      %s43 = scalar_select %p42, 0, %s41
      %s45 = sadd.s32 %s44, 1
      %p48 = scmp.eq.s32.totalorder %s24, 5
      %p49 = scmp.ne.s32.totalorder %s44, %s46
      %p50 = scmp.eq.s32.totalorder %s24, 0
      %p51 = por %p49, %p50
      %p52 = scmp.ne.s32.totalorder %s44, %s46
      %p53 = scmp.eq.s32.totalorder %s29, 5
      %p54 = por %p52, %p53
      %p55 = scmp.ne.s32.totalorder %s46, %s47
      %p56 = scmp.eq.s32.totalorder %s29, 0
      %p57 = por %p55, %p56
      %p58 = scmp.ne.s32.totalorder %s46, %s47
      %p59 = scmp.eq.s32.totalorder %s30, 5
      %p60 = por %p58, %p59
      %p62 = scmp.ne.s32.totalorder %s47, %s61
      %p63 = scmp.eq.s32.totalorder %s30, 0
      %p64 = por %p62, %p63
      %s65 = ssub.s32 %s31, %s43
      %s66 = ssub.s32 %s32, %s39
      %s67 = sor.u32 %s65, %s66
      %p68 = scmp.eq.s32.totalorder %s67, 0
      %s70 = sadd.s32 %s69, 1
      %s71 = scalar_select %p68, %s69, %s70
      %p74 = pneg %p68
      %p75 = scmp.eq.s32.totalorder %s24, 5
      %p76 = por %p74, %p75
      %p77 = scmp.ne.s32.totalorder %s69, %s72
      %p78 = scmp.eq.s32.totalorder %s24, 0
      %p79 = por %p77, %p78
      %p80 = scmp.ne.s32.totalorder %s69, %s72
      %p81 = scmp.eq.s32.totalorder %s29, 5
      %p82 = por %p80, %p81
      %p83 = scmp.ne.s32.totalorder %s72, %s73
      %p84 = scmp.eq.s32.totalorder %s29, 0
      %p85 = por %p83, %p84
      %p86 = scmp.ne.s32.totalorder %s72, %s73
      %p87 = scmp.eq.s32.totalorder %s30, 5
      %p88 = por %p86, %p87
      %p90 = scmp.ne.s32.totalorder %s73, %s89
      %p91 = scmp.eq.s32.totalorder %s30, 0
      %p92 = por %p90, %p91
      %s93 = ssub.s32 %s31, %s43
      %s94 = ssub.s32 %s32, %s39
      %s95 = sor.u32 %s93, %s94
      %p96 = scmp.eq.s32.totalorder %s95, 0
      %s98 = sadd.s32 %s97, 1
      %s99 = scalar_select %p96, %s97, %s98
      %p102 = pneg %p96
      %p103 = scmp.eq.s32.totalorder %s24, 5
      %p104 = por %p102, %p103
      %p105 = scmp.ne.s32.totalorder %s97, %s100
      %p106 = scmp.eq.s32.totalorder %s24, 0
      %p107 = por %p105, %p106
      %p108 = scmp.ne.s32.totalorder %s97, %s100
      %p109 = scmp.eq.s32.totalorder %s29, 5
      %p110 = por %p108, %p109
      %p111 = scmp.ne.s32.totalorder %s100, %s101
      %p112 = scmp.eq.s32.totalorder %s29, 0
      %p113 = por %p111, %p112
      %p114 = scmp.ne.s32.totalorder %s100, %s101
      %p115 = scmp.eq.s32.totalorder %s30, 5
      %p116 = por %p114, %p115
      %p118 = scmp.ne.s32.totalorder %s101, %s117
      %p119 = scmp.eq.s32.totalorder %s30, 0
      %p120 = por %p118, %p119
      %s121 = ssub.s32 %s31, %s43
      %p122 = scmp.eq.s32.totalorder %s121, 0
      %s124 = sadd.s32 %s123, 1
      %s125 = scalar_select %p122, %s123, %s124
      %p128 = pneg %p122
      %p129 = scmp.eq.s32.totalorder %s24, 5
      %p130 = por %p128, %p129
      %p131 = scmp.ne.s32.totalorder %s123, %s126
      %p132 = scmp.eq.s32.totalorder %s24, 0
      %p133 = por %p131, %p132
      %p134 = scmp.ne.s32.totalorder %s123, %s126
      %p135 = scmp.eq.s32.totalorder %s29, 5
      %p136 = por %p134, %p135
      %p137 = scmp.ne.s32.totalorder %s126, %s127
      %p138 = scmp.eq.s32.totalorder %s29, 0
      %p139 = por %p137, %p138
      %p140 = scmp.ne.s32.totalorder %s126, %s127
      %p141 = scmp.eq.s32.totalorder %s30, 5
      %p142 = por %p140, %p141
      %p144 = scmp.ne.s32.totalorder %s127, %s143
      %p145 = scmp.eq.s32.totalorder %s30, 0
      %p146 = por %p144, %p145
      %s147 = ssub.s32 %s31, %s43
      %p148 = scmp.eq.s32.totalorder %s147, 0
      %s150 = sadd.s32 %s149, 1
      %s151 = scalar_select %p148, %s149, %s150
      %p154 = pneg %p148
      %p155 = scmp.eq.s32.totalorder %s24, 5
      %p156 = por %p154, %p155
      %p157 = scmp.ne.s32.totalorder %s149, %s152
      %p158 = scmp.eq.s32.totalorder %s24, 0
      %p159 = por %p157, %p158
      %p160 = scmp.ne.s32.totalorder %s149, %s152
      %p161 = scmp.eq.s32.totalorder %s29, 5
      %p162 = por %p160, %p161
      %p163 = scmp.ne.s32.totalorder %s152, %s153
      %p164 = scmp.eq.s32.totalorder %s29, 0
      %p165 = por %p163, %p164
      %p166 = scmp.ne.s32.totalorder %s152, %s153
      %p167 = scmp.eq.s32.totalorder %s30, 5
      %p168 = por %p166, %p167
      %p170 = scmp.ne.s32.totalorder %s153, %s169
      %p171 = scmp.eq.s32.totalorder %s30, 0
      %p172 = por %p170, %p171
      %s173 = ssub.s32 %s31, %s43
      %p174 = scmp.eq.s32.totalorder %s173, 0
      %s176 = sadd.s32 %s175, 1
      %s177 = scalar_select %p174, %s175, %s176
      %p180 = pneg %p174
      %p181 = scmp.eq.s32.totalorder %s24, 5
      %p182 = por %p180, %p181
      %p183 = scmp.ne.s32.totalorder %s175, %s178
      %p184 = scmp.eq.s32.totalorder %s24, 0
      %p185 = por %p183, %p184
      %p186 = scmp.ne.s32.totalorder %s175, %s178
      %p187 = scmp.eq.s32.totalorder %s29, 5
      %p188 = por %p186, %p187
      %p189 = scmp.ne.s32.totalorder %s178, %s179
      %p190 = scmp.eq.s32.totalorder %s29, 0
      %p191 = por %p189, %p190
      %p192 = scmp.ne.s32.totalorder %s178, %s179
      %p193 = scmp.eq.s32.totalorder %s30, 5
      %p194 = por %p192, %p193
      %p196 = scmp.ne.s32.totalorder %s179, %s195
      %p197 = scmp.eq.s32.totalorder %s30, 0
      %p198 = por %p196, %p197
      %s199 = ssub.s32 %s31, %s43
      %p200 = scmp.eq.s32.totalorder %s199, 0
      %s202 = sadd.s32 %s201, 1
      %s203 = scalar_select %p200, %s201, %s202
      %p206 = pneg %p200
      %p207 = scmp.eq.s32.totalorder %s24, 5
      %p208 = por %p206, %p207
      %p209 = scmp.ne.s32.totalorder %s201, %s204
      %p210 = scmp.eq.s32.totalorder %s24, 0
      %p211 = por %p209, %p210
      %p212 = scmp.ne.s32.totalorder %s201, %s204
      %p213 = scmp.eq.s32.totalorder %s29, 5
      %p214 = por %p212, %p213
      %p215 = scmp.ne.s32.totalorder %s204, %s205
      %p216 = scmp.eq.s32.totalorder %s29, 0
      %p217 = por %p215, %p216
      %p218 = scmp.ne.s32.totalorder %s204, %s205
      %p219 = scmp.eq.s32.totalorder %s30, 5
      %p220 = por %p218, %p219
      %p222 = scmp.ne.s32.totalorder %s205, %s221
      %p223 = scmp.eq.s32.totalorder %s30, 0
      %p224 = por %p222, %p223
      %s225 = ssub.s32 %s31, %s43
      %p226 = scmp.eq.s32.totalorder %s225, 0
      %s228 = sadd.s32 %s227, 1
      %s229 = scalar_select %p226, %s227, %s228
      %p232 = pneg %p226
      %p233 = scmp.eq.s32.totalorder %s24, 5
      %p234 = por %p232, %p233
      %p235 = scmp.ne.s32.totalorder %s227, %s230
      %p236 = scmp.eq.s32.totalorder %s24, 0
      %p237 = por %p235, %p236
      %p238 = scmp.ne.s32.totalorder %s227, %s230
      %p239 = scmp.eq.s32.totalorder %s29, 5
      %p240 = por %p238, %p239
      %p241 = scmp.ne.s32.totalorder %s230, %s231
      %p242 = scmp.eq.s32.totalorder %s29, 0
      %p243 = por %p241, %p242
      %p244 = scmp.ne.s32.totalorder %s230, %s231
      %p245 = scmp.eq.s32.totalorder %s30, 5
      %p246 = por %p244, %p245
      %p248 = scmp.ne.s32.totalorder %s231, %s247
      %p249 = scmp.eq.s32.totalorder %s30, 0
      %p250 = por %p248, %p249
      %s251 = ssub.s32 %s31, %s43
      %p252 = scmp.eq.s32.totalorder %s251, 0
      %s254 = sadd.s32 %s253, 1
      %s255 = scalar_select %p252, %s253, %s254
      %p258 = pneg %p252
      %p259 = scmp.eq.s32.totalorder %s24, 5
      %p260 = por %p258, %p259
      %p261 = scmp.ne.s32.totalorder %s253, %s256
      %p262 = scmp.eq.s32.totalorder %s24, 0
      %p263 = por %p261, %p262
      %p264 = scmp.ne.s32.totalorder %s253, %s256
      %p265 = scmp.eq.s32.totalorder %s29, 5
      %p266 = por %p264, %p265
      %p267 = scmp.ne.s32.totalorder %s256, %s257
      %p268 = scmp.eq.s32.totalorder %s29, 0
      %p269 = por %p267, %p268
      %p270 = scmp.ne.s32.totalorder %s256, %s257
      %p271 = scmp.eq.s32.totalorder %s30, 5
      %p272 = por %p270, %p271
      %p274 = scmp.ne.s32.totalorder %s257, %s273
      %p275 = scmp.eq.s32.totalorder %s30, 0
      %p276 = por %p274, %p275
      %p277 = scmp.le.s32.totalorder 1, %s24
      %p278 = scmp.lt.s32.totalorder %s24, 7
      %p279 = pnand %p277, %p278
      %p280 = pneg %p279
      // Predicated region
      $region9: #{tpu_custom_call.1} parent=5 // pred_check
        _
      $region10: #{tpu_custom_call.1} parent=5 // pred_check_branch
        %282 = sbr.rel (%p279) target = $region12
      $region11: #{tpu_custom_call.1} parent=5 // pred_region
        %s283 = ssub.s32 %s24, 1
        // Predicated region
        $region13: #{tpu_custom_call.1} parent=11 // pred_check
          %p284 = pneg %p57
        $region14: #{tpu_custom_call.1} parent=11 // pred_check_branch
          %286 = sbr.rel (%p284) target = $region16
        $region15: #{tpu_custom_call.1} parent=11 // pred_region
          %s288 = ssub.s32 16, 16
          %289 = vsyncadd [#allocation11], %s288
          %292 = dma.hbm_to_smem %s0, 16, [#allocation8], [#allocation11]
        $region16: #{tpu_custom_call.1} parent=11 // pred_fallthru
          _
        // Predicated region
        $region17: #{tpu_custom_call.1} parent=11 // pred_check
          %p293 = pneg %p139
        $region18: #{tpu_custom_call.1} parent=11 // pred_check_branch
          %295 = sbr.rel (%p293) target = $region20
        $region19: #{tpu_custom_call.1} parent=11 // pred_region
          %s297 = ssub.s32 256, 256
          %298 = vsyncadd [#allocation14], %s297
          %s299 = smul.addr %s33, 2
          %s300 = smul.addr %s299, 128
          %s301 = scalar_lea.hbm %s3, %s300
          %s302 = sshll.u32 [#allocation15], 4
          %s303 = int_to_ptr.vmem [resolvable:$true] %s302
          %308 = dma.hbm_to_vmem [thread:$0]  %s301, 256, %s303, [#allocation14], 128, 128, 8
        $region20: #{tpu_custom_call.1} parent=11 // pred_fallthru
          _
        // Predicated region
        $region21: #{tpu_custom_call.1} parent=11 // pred_check
          %p309 = pneg %p165
        $region22: #{tpu_custom_call.1} parent=11 // pred_check_branch
          %311 = sbr.rel (%p309) target = $region24
        $region23: #{tpu_custom_call.1} parent=11 // pred_region
          %s313 = ssub.s32 256, 256
          %314 = vsyncadd [#allocation17], %s313
          %s315 = smul.addr %s33, 2
          %s316 = smul.addr %s315, 128
          %s317 = scalar_lea.hbm %s4, %s316
          %s318 = sshll.u32 [#allocation16], 4
          %s319 = int_to_ptr.vmem [resolvable:$true] %s318
          %324 = dma.hbm_to_vmem [thread:$0]  %s317, 256, %s319, [#allocation17], 128, 128, 8
        $region24: #{tpu_custom_call.1} parent=11 // pred_fallthru
          _
        // Predicated region
        $region25: #{tpu_custom_call.1} parent=11 // pred_check
          %p325 = pneg %p191
        $region26: #{tpu_custom_call.1} parent=11 // pred_check_branch
          %327 = sbr.rel (%p325) target = $region28
        $region27: #{tpu_custom_call.1} parent=11 // pred_region
          %s329 = ssub.s32 256, 256
          %330 = vsyncadd [#allocation17], %s329
          %s331 = smul.addr %s33, 2
          %s332 = smul.addr %s331, 128
          %s333 = scalar_lea.hbm %s5, %s332
          %s334 = sshll.u32 [#allocation18], 4
          %s335 = int_to_ptr.vmem [resolvable:$true] %s334
          %340 = dma.hbm_to_vmem [thread:$0]  %s333, 256, %s335, [#allocation17], 128, 128, 8
        $region28: #{tpu_custom_call.1} parent=11 // pred_fallthru
          _
        // Predicated region
        $region29: #{tpu_custom_call.1} parent=11 // pred_check
          %p341 = pneg %p217
        $region30: #{tpu_custom_call.1} parent=11 // pred_check_branch
          %343 = sbr.rel (%p341) target = $region32
        $region31: #{tpu_custom_call.1} parent=11 // pred_region
          %s345 = ssub.s32 256, 256
          %346 = vsyncadd [#allocation20], %s345
          %s347 = smul.addr %s33, 2
          %s348 = smul.addr %s347, 128
          %s349 = scalar_lea.hbm %s6, %s348
          %s350 = sshll.u32 [#allocation19], 4
          %s351 = int_to_ptr.vmem [resolvable:$true] %s350
          %356 = dma.hbm_to_vmem [thread:$0]  %s349, 256, %s351, [#allocation20], 128, 128, 8
        $region32: #{tpu_custom_call.1} parent=11 // pred_fallthru
          _
        // Predicated region
        $region33: #{tpu_custom_call.1} parent=11 // pred_check
          %p357 = pneg %p243
        $region34: #{tpu_custom_call.1} parent=11 // pred_check_branch
          %359 = sbr.rel (%p357) target = $region36
        $region35: #{tpu_custom_call.1} parent=11 // pred_region
          %s361 = ssub.s32 256, 256
          %362 = vsyncadd [#allocation20], %s361
          %s363 = smul.addr %s33, 2
          %s364 = smul.addr %s363, 128
          %s365 = scalar_lea.hbm %s7, %s364
          %s366 = sshll.u32 [#allocation21], 4
          %s367 = int_to_ptr.vmem [resolvable:$true] %s366
          %372 = dma.hbm_to_vmem [thread:$0]  %s365, 256, %s367, [#allocation20], 128, 128, 8
        $region36: #{tpu_custom_call.1} parent=11 // pred_fallthru
          _
      $region12: #{tpu_custom_call.1} parent=5 // pred_fallthru
        _
      %p373 = scmp.lt.s32.totalorder %s24, 6
      // Predicated region
      $region37: #{tpu_custom_call.1} parent=5 // pred_check
        %p374 = pneg %p373
      $region38: #{tpu_custom_call.1} parent=5 // pred_check_branch
        %376 = sbr.rel (%p374) target = $region40
      $region39: #{tpu_custom_call.1} parent=5 // pred_region
        // Predicated region
        $region41: #{tpu_custom_call.1} parent=39 // pred_check
          %p377 = pneg %p79
        $region42: #{tpu_custom_call.1} parent=39 // pred_check_branch
          %379 = sbr.rel (%p377) target = $region44
        $region43: #{tpu_custom_call.1} parent=39 // pred_region
          %s380 = sand.u32 %s69, 1
          %s381 = scalar_lea.sflag [#allocation9], %s380
          %s382 = sand.u32 %s69, 1
          %s383 = smul.addr %s382, 16
          %s384 = scalar_lea.vmem [#allocation12], %s383
          %s386 = ssub.s32 256, 256
          %387 = vsyncadd %s381, %s386
          %s388 = smul.addr %s32, 2
          %s389 = smul.addr %s31, 6
          %s390 = sadd.s32 %s388, %s389
          %s391 = smul.addr %s390, 128
          %s392 = scalar_lea.hbm %s1, %s391
          %s393 = sshll.u32 %s384, 4
          %s394 = int_to_ptr.vmem [resolvable:$true] %s393
          %399 = dma.hbm_to_vmem [thread:$0]  %s392, 256, %s394, %s381, 128, 128, 8
        $region44: #{tpu_custom_call.1} parent=39 // pred_fallthru
          _
        // Predicated region
        $region45: #{tpu_custom_call.1} parent=39 // pred_check
          %p400 = pneg %p107
        $region46: #{tpu_custom_call.1} parent=39 // pred_check_branch
          %402 = sbr.rel (%p400) target = $region48
        $region47: #{tpu_custom_call.1} parent=39 // pred_region
          %s403 = sand.u32 %s24, 1
          %s404 = scalar_lea.sflag [#allocation14], %s403
          %s405 = sand.u32 %s97, 1
          %s406 = smul.addr %s405, 16
          %s407 = scalar_lea.vmem [#allocation13], %s406
          %s409 = ssub.s32 256, 256
          %410 = vsyncadd %s404, %s409
          %s411 = smul.addr %s32, 2
          %s412 = smul.addr %s31, 6
          %s413 = sadd.s32 %s411, %s412
          %s414 = smul.addr %s413, 128
          %s415 = scalar_lea.hbm %s2, %s414
          %s416 = sshll.u32 %s407, 4
          %s417 = int_to_ptr.vmem [resolvable:$true] %s416
          %422 = dma.hbm_to_vmem [thread:$0]  %s415, 256, %s417, %s404, 128, 128, 8
        $region48: #{tpu_custom_call.1} parent=39 // pred_fallthru
          _
      $region40: #{tpu_custom_call.1} parent=5 // pred_fallthru
        _
      %p423 = scmp.le.s32.totalorder 1, %s24
      %p424 = scmp.lt.s32.totalorder %s24, 7
      %p425 = pnand %p423, %p424
      %p426 = pneg %p425
      // Predicated region
      $region49: #{tpu_custom_call.1} parent=5 // pred_check
        _
      $region50: #{tpu_custom_call.1} parent=5 // pred_check_branch
        %428 = sbr.rel (%p425) target = $region52
      $region51: #{tpu_custom_call.1} parent=5 // pred_region
        %s429 = ssub.s32 %s24, 1
        // Predicated region
        $region53: #{tpu_custom_call.1} parent=51 // pred_check
          %p430 = pneg %p57
        $region54: #{tpu_custom_call.1} parent=51 // pred_check_branch
          %432 = sbr.rel (%p430) target = $region56
        $region55: #{tpu_custom_call.1} parent=51 // pred_region
          %433 = dma.done [#allocation11], 16
        $region56: #{tpu_custom_call.1} parent=51 // pred_fallthru
          _
        %s434 = sand.u32 %s72, 1
        %s435 = scalar_lea.sflag [#allocation9], %s434
        %s436 = sand.u32 %s72, 1
        %s437 = smul.addr %s436, 16
        %s438 = scalar_lea.vmem [#allocation12], %s437
        // Predicated region
        $region57: #{tpu_custom_call.1} parent=51 // pred_check
          %p439 = pneg %p85
        $region58: #{tpu_custom_call.1} parent=51 // pred_check_branch
          %441 = sbr.rel (%p439) target = $region60
        $region59: #{tpu_custom_call.1} parent=51 // pred_region
          %442 = dma.done %s435, 256
        $region60: #{tpu_custom_call.1} parent=51 // pred_fallthru
          _
        %s443 = sand.u32 %s29, 1
        %s444 = scalar_lea.sflag [#allocation14], %s443
        %s445 = sand.u32 %s100, 1
        %s446 = smul.addr %s445, 16
        %s447 = scalar_lea.vmem [#allocation13], %s446
        // Predicated region
        $region61: #{tpu_custom_call.1} parent=51 // pred_check
          %p448 = pneg %p113
        $region62: #{tpu_custom_call.1} parent=51 // pred_check_branch
          %450 = sbr.rel (%p448) target = $region64
        $region63: #{tpu_custom_call.1} parent=51 // pred_region
          %451 = dma.done %s444, 256
        $region64: #{tpu_custom_call.1} parent=51 // pred_fallthru
          _
        // Predicated region
        $region65: #{tpu_custom_call.1} parent=51 // pred_check
          %p452 = pneg %p139
        $region66: #{tpu_custom_call.1} parent=51 // pred_check_branch
          %454 = sbr.rel (%p452) target = $region68
        $region67: #{tpu_custom_call.1} parent=51 // pred_region
          %455 = dma.done [#allocation14], 256
        $region68: #{tpu_custom_call.1} parent=51 // pred_fallthru
          _
        // Predicated region
        $region69: #{tpu_custom_call.1} parent=51 // pred_check
          %p456 = pneg %p165
        $region70: #{tpu_custom_call.1} parent=51 // pred_check_branch
          %458 = sbr.rel (%p456) target = $region72
        $region71: #{tpu_custom_call.1} parent=51 // pred_region
          %459 = dma.done [#allocation17], 256
        $region72: #{tpu_custom_call.1} parent=51 // pred_fallthru
          _
        // Predicated region
        $region73: #{tpu_custom_call.1} parent=51 // pred_check
          %p460 = pneg %p191
        $region74: #{tpu_custom_call.1} parent=51 // pred_check_branch
          %462 = sbr.rel (%p460) target = $region76
        $region75: #{tpu_custom_call.1} parent=51 // pred_region
          %463 = dma.done [#allocation17], 256
        $region76: #{tpu_custom_call.1} parent=51 // pred_fallthru
          _
        // Predicated region
        $region77: #{tpu_custom_call.1} parent=51 // pred_check
          %p464 = pneg %p217
        $region78: #{tpu_custom_call.1} parent=51 // pred_check_branch
          %466 = sbr.rel (%p464) target = $region80
        $region79: #{tpu_custom_call.1} parent=51 // pred_region
          %467 = dma.done [#allocation20], 256
        $region80: #{tpu_custom_call.1} parent=51 // pred_fallthru
          _
        // Predicated region
        $region81: #{tpu_custom_call.1} parent=51 // pred_check
          %p468 = pneg %p243
        $region82: #{tpu_custom_call.1} parent=51 // pred_check_branch
          %470 = sbr.rel (%p468) target = $region84
        $region83: #{tpu_custom_call.1} parent=51 // pred_region
          %471 = dma.done [#allocation20], 256
        $region84: #{tpu_custom_call.1} parent=51 // pred_fallthru
          _
        %472 = sfence
        %p473 = pneg %p57
        %p474 = pneg %p54
        %s475 = sand.u32 %s72, 1
        %s476 = scalar_lea.sflag [#allocation9], %s475
        %s477 = sand.u32 %s72, 1
        %s478 = smul.addr %s477, 16
        %s479 = scalar_lea.vmem [#allocation12], %s478
        %p480 = pneg %p85
        %p481 = pneg %p82
        %s482 = sand.u32 %s29, 1
        %s483 = scalar_lea.sflag [#allocation14], %s482
        %s484 = sand.u32 %s100, 1
        %s485 = smul.addr %s484, 16
        %s486 = scalar_lea.vmem [#allocation13], %s485
        %p487 = pneg %p113
        %p488 = pneg %p110
        %p489 = pneg %p139
        %p490 = pneg %p136
        %p491 = pneg %p165
        %p492 = pneg %p162
        %p493 = pneg %p191
        %p494 = pneg %p188
        %p495 = pneg %p217
        %p496 = pneg %p214
        %p497 = pneg %p243
        %p498 = pneg %p240
        %p499 = pneg %p269
        %p500 = pneg %p266
        %p501 = scmp.eq.s32.totalorder %s34, 0
        // Predicated region
        $region85: #{tpu_custom_call.1} parent=51 // pred_check
          %p502 = pneg %p501
        $region86: #{tpu_custom_call.1} parent=51 // pred_check_branch
          %504 = sbr.rel (%p502) target = $region88
        $region87: #{tpu_custom_call.1} parent=51 // pred_region
          %505 = vst [vmem:[#allocation2] sm:$0xff] 0.0
          %vm506 = vcmask 146432
          %507 = vst.msk [vmem:[#allocation2 + $0x8] sm:$0xff] %vm506, 0.0
          %508 = vst [vmem:[#allocation2 + $0x10] sm:$0xff] 0.0
          %509 = vst.msk [vmem:[#allocation2 + $0x18] sm:$0xff] %vm506, 0.0
          %510 = vst [vmem:[#allocation2 + $0x20] sm:$0xff] 0.0
          %511 = vst.msk [vmem:[#allocation2 + $0x28] sm:$0xff] %vm506, 0.0
          %512 = vst [vmem:[#allocation2 + $0x30] sm:$0xff] 0.0
          %513 = vst.msk [vmem:[#allocation2 + $0x38] sm:$0xff] %vm506, 0.0
          %v514 = vld [vmem:[#allocation15] sm:$0xff]
          %v515 = vld [vmem:[#allocation15 + $0x8] sm:$0xff]
          %vm516 = vcmask 130048
          %517 = vst.msk [vmem:[#allocation2 + $0x18] sm:$0xff] %vm516, %v514
          %518 = vst.msk [vmem:[#allocation2 + $0x28] sm:$0xff] %vm516, %v515
          %v519 = vld [vmem:[#allocation16] sm:$0xff]
          %v520 = vld [vmem:[#allocation16 + $0x8] sm:$0xff]
          %521 = vst.msk [vmem:[#allocation3] sm:$0xff] %vm516, %v519
          %522 = vst.msk [vmem:[#allocation3 + $0x8] sm:$0xff] %vm516, %v520
        $region88: #{tpu_custom_call.1} parent=51 // pred_fallthru
          _
        %v523 = vld [vmem:[#allocation2 + $0x18] sm:$0xff]
        %v524 = vld [vmem:[#allocation2 + $0x28] sm:$0xff]
        %v525 = vld [vmem:[#allocation19] sm:$0xff]
        %v526 = vld [vmem:[#allocation19 + $0x8] sm:$0xff]
        %v527 = vmul.f32 %v525, %v523
        %v528 = vmul.f32 %v526, %v524
        %v529 = vld [vmem:[#allocation21] sm:$0xff]
        %v530 = vld [vmem:[#allocation21 + $0x8] sm:$0xff]
        %v531 = vld [vmem:[#allocation3] sm:$0xff]
        %v532 = vld [vmem:[#allocation3 + $0x8] sm:$0xff]
        %v533 = vmul.f32 %v529, %v531
        %v534 = vmul.f32 %v530, %v532
        %v535 = vsub.f32 %v527, %v533
        %v536 = vsub.f32 %v528, %v534
        %v537 = vld [vmem:[%s438] sm:$0xff]
        %v538 = vld [vmem:[%s438 + $0x8] sm:$0xff]
        %v539 = vld [vmem:[%s447] sm:$0xff]
        %v540 = vld [vmem:[%s447 + $0x8] sm:$0xff]
        %v541 = vsub.f32 %v537, %v539
        %v542 = vsub.f32 %v538, %v540
        %v543 = vsub.f32 %v535, %v541
        %v544 = vsub.f32 %v536, %v542
        %v545 = vld [vmem:[#allocation2] sm:$0xc0]
        %v546 = vld [vmem:[#allocation2 + $0x8] sm:$0xc0]
        %v547 = vld [vmem:[#allocation2 + $0x10] sm:$0xff]
        %v548 = vld [vmem:[#allocation2 + $0x20] sm:$0xff]
        %v549 = vld [vmem:[#allocation2 + $0x30] sm:$0x3]
        %v550 = vld [vmem:[#allocation2 + $0x38] sm:$0x3]
        %559 = vrot.lane.b32.xlu0 %v545, 2
        %v560 = vpop.permute.xlu0 %559
        %561 = vrot.lane.b32.xlu0 %v546, 2
        %v562 = vpop.permute.xlu0 %561
        %563 = vrot.lane.b32.xlu0 %v547, 2
        %v564 = vpop.permute.xlu0 %563
        %565 = vrot.lane.b32.xlu0 %v523, 2
        %v566 = vpop.permute.xlu0 %565
        %567 = vrot.lane.b32.xlu0 %v548, 2
        %v568 = vpop.permute.xlu0 %567
        %569 = vrot.lane.b32.xlu0 %v524, 2
        %v570 = vpop.permute.xlu0 %569
        %571 = vrot.lane.b32.xlu0 %v549, 2
        %v572 = vpop.permute.xlu0 %571
        %573 = vrot.lane.b32.xlu0 %v550, 2
        %v574 = vpop.permute.xlu0 %573
        %vm575 = vcmask 15360
        %v576 = vsel %vm575, %v560, %v562
        %v577 = vsel %vm575, %v564, %v566
        %v578 = vsel %vm575, %v568, %v570
        %v579 = vsel %vm575, %v572, %v574
        %vm584 = vcmask 130054
        %585 = vst.msk [vmem:[#allocation4 - $0x6] sm:$0xc0] %vm584, %v576
        %vm586 = vcmask 130048
        %587 = vst.msk [vmem:[#allocation4 + $0x2] sm:$0xff] %vm586, %v577
        %588 = vst.msk [vmem:[#allocation4 + $0xa] sm:$0xff] %vm586, %v578
        %vm589 = vcmask 123904
        %590 = vst.msk [vmem:[#allocation4 + $0x12] sm:$0x3] %vm589, %v579
        %v591 = vld [vmem:[#allocation2] sm:$0xc0]
        %v592 = vld [vmem:[#allocation2 + $0x8] sm:$0xc0]
        %v593 = vld [vmem:[#allocation2 + $0x10] sm:$0xff]
        %v594 = vld [vmem:[#allocation2 + $0x18] sm:$0xff]
        %v595 = vld [vmem:[#allocation2 + $0x20] sm:$0xff]
        %v596 = vld [vmem:[#allocation2 + $0x28] sm:$0xff]
        %v597 = vld [vmem:[#allocation2 + $0x30] sm:$0x3]
        %v598 = vld [vmem:[#allocation2 + $0x38] sm:$0x3]
        %607 = vrot.lane.b32.xlu0 %v591, 1
        %v608 = vpop.permute.xlu0 %607
        %609 = vrot.lane.b32.xlu0 %v592, 1
        %v610 = vpop.permute.xlu0 %609
        %611 = vrot.lane.b32.xlu0 %v593, 1
        %v612 = vpop.permute.xlu0 %611
        %613 = vrot.lane.b32.xlu0 %v594, 1
        %v614 = vpop.permute.xlu0 %613
        %615 = vrot.lane.b32.xlu0 %v595, 1
        %v616 = vpop.permute.xlu0 %615
        %617 = vrot.lane.b32.xlu0 %v596, 1
        %v618 = vpop.permute.xlu0 %617
        %619 = vrot.lane.b32.xlu0 %v597, 1
        %v620 = vpop.permute.xlu0 %619
        %621 = vrot.lane.b32.xlu0 %v598, 1
        %v622 = vpop.permute.xlu0 %621
        %vm623 = vcmask 7168
        %v624 = vsel %vm623, %v608, %v610
        %v625 = vsel %vm623, %v612, %v614
        %v626 = vsel %vm623, %v616, %v618
        %v627 = vsel %vm623, %v620, %v622
        %632 = vst.msk [vmem:[#allocation5 - $0x6] sm:$0xc0] %vm584, %v624
        %633 = vst.msk [vmem:[#allocation5 + $0x2] sm:$0xff] %vm586, %v625
        %634 = vst.msk [vmem:[#allocation5 + $0xa] sm:$0xff] %vm586, %v626
        %635 = vst.msk [vmem:[#allocation5 + $0x12] sm:$0x3] %vm589, %v627
        %v636 = vld [vmem:[#allocation2 + $0x8] sm:$0xc0]
        %v637 = vld [vmem:[#allocation2 + $0x18] sm:$0xff]
        %v638 = vld [vmem:[#allocation2 + $0x28] sm:$0xff]
        %v639 = vld [vmem:[#allocation2 + $0x38] sm:$0x3]
        %644 = vrot.lane.b32.xlu0 %v636, 127
        %v645 = vpop.permute.xlu0 %644
        %646 = vrot.lane.b32.xlu0 %v637, 127
        %v647 = vpop.permute.xlu0 %646
        %648 = vrot.lane.b32.xlu0 %v638, 127
        %v649 = vpop.permute.xlu0 %648
        %650 = vrot.lane.b32.xlu0 %v639, 127
        %v651 = vpop.permute.xlu0 %650
        %656 = vst.msk [vmem:[#allocation6 - $0x6] sm:$0xc0] %vm584, %v645
        %657 = vst.msk [vmem:[#allocation6 + $0x2] sm:$0xff] %vm586, %v647
        %658 = vst.msk [vmem:[#allocation6 + $0xa] sm:$0xff] %vm586, %v649
        %659 = vst.msk [vmem:[#allocation6 + $0x12] sm:$0x3] %vm589, %v651
        %v660 = vld [vmem:[#allocation2 + $0x8] sm:$0xc0]
        %v661 = vld [vmem:[#allocation2 + $0x18] sm:$0xff]
        %v662 = vld [vmem:[#allocation2 + $0x28] sm:$0xff]
        %v663 = vld [vmem:[#allocation2 + $0x38] sm:$0x3]
        %668 = vrot.lane.b32.xlu0 %v660, 126
        %v669 = vpop.permute.xlu0 %668
        %670 = vrot.lane.b32.xlu0 %v661, 126
        %v671 = vpop.permute.xlu0 %670
        %672 = vrot.lane.b32.xlu0 %v662, 126
        %v673 = vpop.permute.xlu0 %672
        %674 = vrot.lane.b32.xlu0 %v663, 126
        %v675 = vpop.permute.xlu0 %674
        %680 = vst.msk [vmem:[#allocation7 - $0x6] sm:$0xc0] %vm584, %v669
        %681 = vst.msk [vmem:[#allocation7 + $0x2] sm:$0xff] %vm586, %v671
        %682 = vst.msk [vmem:[#allocation7 + $0xa] sm:$0xff] %vm586, %v673
        %683 = vst.msk [vmem:[#allocation7 + $0x12] sm:$0x3] %vm589, %v675
        %s684 = sld [smem:[#allocation8]]
        %v685 = vld [vmem:[#allocation4] sm:$0xff]
        %v686 = vld [vmem:[#allocation4 + $0x8] sm:$0xff]
        %v687 = vstv %s684
        %v688 = vmul.f32 %v687, %v685
        %v689 = vmul.f32 %v687, %v686
        %v690 = vadd.f32 %v543, %v688
        %v691 = vadd.f32 %v544, %v689
        %s692 = sld [smem:[#allocation8 + $0x5]]
        %v693 = vld [vmem:[#allocation4 + $0x1] sm:$0xff]
        %v694 = vld [vmem:[#allocation4 + $0x9] sm:$0xff]
        %v695 = vstv %s692
        %v696 = vmul.f32 %v695, %v693
        %v697 = vmul.f32 %v695, %v694
        %v698 = vadd.f32 %v690, %v696
        %v699 = vadd.f32 %v691, %v697
        %s700 = sld [smem:[#allocation8 + $0xa]]
        %v701 = vld [vmem:[#allocation4 + $0x2] sm:$0xff]
        %v702 = vld [vmem:[#allocation4 + $0xa] sm:$0xff]
        %v703 = vstv %s700
        %v704 = vmul.f32 %v703, %v701
        %v705 = vmul.f32 %v703, %v702
        %v706 = vadd.f32 %v698, %v704
        %v707 = vadd.f32 %v699, %v705
        %s708 = sld [smem:[#allocation8 + $0xf]]
        %v709 = vld [vmem:[#allocation4 + $0x3] sm:$0xff]
        %v710 = vld [vmem:[#allocation4 + $0xb] sm:$0xff]
        %v711 = vstv %s708
        %v712 = vmul.f32 %v711, %v709
        %v713 = vmul.f32 %v711, %v710
        %v714 = vadd.f32 %v706, %v712
        %v715 = vadd.f32 %v707, %v713
        %s716 = sld [smem:[#allocation8 + $0x14]]
        %v717 = vld [vmem:[#allocation4 + $0x4] sm:$0xff]
        %v718 = vld [vmem:[#allocation4 + $0xc] sm:$0xff]
        %v719 = vstv %s716
        %v720 = vmul.f32 %v719, %v717
        %v721 = vmul.f32 %v719, %v718
        %v722 = vadd.f32 %v714, %v720
        %v723 = vadd.f32 %v715, %v721
        %s724 = sld [smem:[#allocation8 + $0x1]]
        %v725 = vld [vmem:[#allocation5] sm:$0xff]
        %v726 = vld [vmem:[#allocation5 + $0x8] sm:$0xff]
        %v727 = vstv %s724
        %v728 = vmul.f32 %v727, %v725
        %v729 = vmul.f32 %v727, %v726
        %v730 = vadd.f32 %v722, %v728
        %v731 = vadd.f32 %v723, %v729
        %s732 = sld [smem:[#allocation8 + $0x6]]
        %v733 = vld [vmem:[#allocation5 + $0x1] sm:$0xff]
        %v734 = vld [vmem:[#allocation5 + $0x9] sm:$0xff]
        %v735 = vstv %s732
        %v736 = vmul.f32 %v735, %v733
        %v737 = vmul.f32 %v735, %v734
        %v738 = vadd.f32 %v730, %v736
        %v739 = vadd.f32 %v731, %v737
        %s740 = sld [smem:[#allocation8 + $0xb]]
        %v741 = vld [vmem:[#allocation5 + $0x2] sm:$0xff]
        %v742 = vld [vmem:[#allocation5 + $0xa] sm:$0xff]
        %v743 = vstv %s740
        %v744 = vmul.f32 %v743, %v741
        %v745 = vmul.f32 %v743, %v742
        %v746 = vadd.f32 %v738, %v744
        %v747 = vadd.f32 %v739, %v745
        %s748 = sld [smem:[#allocation8 + $0x10]]
        %v749 = vld [vmem:[#allocation5 + $0x3] sm:$0xff]
        %v750 = vld [vmem:[#allocation5 + $0xb] sm:$0xff]
        %v751 = vstv %s748
        %v752 = vmul.f32 %v751, %v749
        %v753 = vmul.f32 %v751, %v750
        %v754 = vadd.f32 %v746, %v752
        %v755 = vadd.f32 %v747, %v753
        %s756 = sld [smem:[#allocation8 + $0x15]]
        %v757 = vld [vmem:[#allocation5 + $0x4] sm:$0xff]
        %v758 = vld [vmem:[#allocation5 + $0xc] sm:$0xff]
        %v759 = vstv %s756
        %v760 = vmul.f32 %v759, %v757
        %v761 = vmul.f32 %v759, %v758
        %v762 = vadd.f32 %v754, %v760
        %v763 = vadd.f32 %v755, %v761
        %s764 = sld [smem:[#allocation8 + $0x2]]
        %v765 = vld [vmem:[#allocation2 + $0x8] sm:$0xc0]
        %v766 = vld [vmem:[#allocation2 + $0x18] sm:$0xff]
        %v767 = vld [vmem:[#allocation2 + $0x28] sm:$0x3f]
        %v768 = vstv %s764
        %v769 = vmul.f32 %v768, %v765
        %v770 = vmul.f32 %v768, %v766
        %v771 = vmul.f32 %v768, %v767
        %vm775 = vcmask 1041408
        %v776 = vrot.slane %v769, 6
        %v777 = vrot.slane %v770, 6
        %v778 = vsel %vm775, %v776, %v777
        %v779 = vrot.slane %v771, 6
        %v780 = vsel %vm775, %v777, %v779
        %v783 = vadd.f32 %v762, %v778
        %v784 = vadd.f32 %v763, %v780
        %s785 = sld [smem:[#allocation8 + $0x7]]
        %v786 = vld [vmem:[#allocation2 + $0x8] sm:$0x80]
        %v787 = vld [vmem:[#allocation2 + $0x28] sm:$0x7f]
        %v788 = vstv %s785
        %v789 = vmul.f32 %v788, %v786
        %v790 = vmul.f32 %v788, %v766
        %v791 = vmul.f32 %v788, %v787
        %vm795 = vcmask 1040384
        %v796 = vrot.slane %v789, 7
        %v797 = vrot.slane %v790, 7
        %v798 = vsel %vm795, %v796, %v797
        %v799 = vrot.slane %v791, 7
        %v800 = vsel %vm795, %v797, %v799
        %v803 = vadd.f32 %v783, %v798
        %v804 = vadd.f32 %v784, %v800
        %s805 = sld [smem:[#allocation8 + $0xc]]
        %v806 = vld [vmem:[#allocation2 + $0x28] sm:$0xff]
        %v807 = vstv %s805
        %v808 = vmul.f32 %v807, %v766
        %v809 = vmul.f32 %v807, %v806
        %v810 = vadd.f32 %v803, %v808
        %v811 = vadd.f32 %v804, %v809
        %s812 = sld [smem:[#allocation8 + $0x11]]
        %v813 = vld [vmem:[#allocation2 + $0x18] sm:$0xfe]
        %v814 = vld [vmem:[#allocation2 + $0x28] sm:$0xff]
        %v815 = vld [vmem:[#allocation2 + $0x38] sm:$0x1]
        %v816 = vstv %s812
        %v817 = vmul.f32 %v816, %v813
        %v818 = vmul.f32 %v816, %v814
        %v819 = vmul.f32 %v816, %v815
        %vm823 = vcmask 1046528
        %v824 = vrot.slane %v817, 1
        %v825 = vrot.slane %v818, 1
        %v826 = vsel %vm823, %v824, %v825
        %v827 = vrot.slane %v819, 1
        %v828 = vsel %vm823, %v825, %v827
        %v831 = vadd.f32 %v810, %v826
        %v832 = vadd.f32 %v811, %v828
        %s833 = sld [smem:[#allocation8 + $0x16]]
        %v834 = vld [vmem:[#allocation2 + $0x18] sm:$0xfc]
        %v835 = vld [vmem:[#allocation2 + $0x38] sm:$0x3]
        %v836 = vstv %s833
        %v837 = vmul.f32 %v836, %v834
        %v838 = vmul.f32 %v836, %v814
        %v839 = vmul.f32 %v836, %v835
        %vm843 = vcmask 1045504
        %v844 = vrot.slane %v837, 2
        %v845 = vrot.slane %v838, 2
        %v846 = vsel %vm843, %v844, %v845
        %v847 = vrot.slane %v839, 2
        %v848 = vsel %vm843, %v845, %v847
        %v851 = vadd.f32 %v831, %v846
        %v852 = vadd.f32 %v832, %v848
        %s853 = sld [smem:[#allocation8 + $0x3]]
        %v854 = vld [vmem:[#allocation6] sm:$0xff]
        %v855 = vld [vmem:[#allocation6 + $0x8] sm:$0xff]
        %v856 = vstv %s853
        %v857 = vmul.f32 %v856, %v854
        %v858 = vmul.f32 %v856, %v855
        %v859 = vadd.f32 %v851, %v857
        %v860 = vadd.f32 %v852, %v858
        %s861 = sld [smem:[#allocation8 + $0x8]]
        %v862 = vld [vmem:[#allocation6 + $0x1] sm:$0xff]
        %v863 = vld [vmem:[#allocation6 + $0x9] sm:$0xff]
        %v864 = vstv %s861
        %v865 = vmul.f32 %v864, %v862
        %v866 = vmul.f32 %v864, %v863
        %v867 = vadd.f32 %v859, %v865
        %v868 = vadd.f32 %v860, %v866
        %s869 = sld [smem:[#allocation8 + $0xd]]
        %v870 = vld [vmem:[#allocation6 + $0x2] sm:$0xff]
        %v871 = vld [vmem:[#allocation6 + $0xa] sm:$0xff]
        %v872 = vstv %s869
        %v873 = vmul.f32 %v872, %v870
        %v874 = vmul.f32 %v872, %v871
        %v875 = vadd.f32 %v867, %v873
        %v876 = vadd.f32 %v868, %v874
        %s877 = sld [smem:[#allocation8 + $0x12]]
        %v878 = vld [vmem:[#allocation6 + $0x3] sm:$0xff]
        %v879 = vld [vmem:[#allocation6 + $0xb] sm:$0xff]
        %v880 = vstv %s877
        %v881 = vmul.f32 %v880, %v878
        %v882 = vmul.f32 %v880, %v879
        %v883 = vadd.f32 %v875, %v881
        %v884 = vadd.f32 %v876, %v882
        %s885 = sld [smem:[#allocation8 + $0x17]]
        %v886 = vld [vmem:[#allocation6 + $0x4] sm:$0xff]
        %v887 = vld [vmem:[#allocation6 + $0xc] sm:$0xff]
        %v888 = vstv %s885
        %v889 = vmul.f32 %v888, %v886
        %v890 = vmul.f32 %v888, %v887
        %v891 = vadd.f32 %v883, %v889
        %v892 = vadd.f32 %v884, %v890
        %s893 = sld [smem:[#allocation8 + $0x4]]
        %v894 = vld [vmem:[#allocation7] sm:$0xff]
        %v895 = vld [vmem:[#allocation7 + $0x8] sm:$0xff]
        %v896 = vstv %s893
        %v897 = vmul.f32 %v896, %v894
        %v898 = vmul.f32 %v896, %v895
        %v899 = vadd.f32 %v891, %v897
        %v900 = vadd.f32 %v892, %v898
        %s901 = sld [smem:[#allocation8 + $0x9]]
        %v902 = vld [vmem:[#allocation7 + $0x1] sm:$0xff]
        %v903 = vld [vmem:[#allocation7 + $0x9] sm:$0xff]
        %v904 = vstv %s901
        %v905 = vmul.f32 %v904, %v902
        %v906 = vmul.f32 %v904, %v903
        %v907 = vadd.f32 %v899, %v905
        %v908 = vadd.f32 %v900, %v906
        %s909 = sld [smem:[#allocation8 + $0xe]]
        %v910 = vld [vmem:[#allocation7 + $0x2] sm:$0xff]
        %v911 = vld [vmem:[#allocation7 + $0xa] sm:$0xff]
        %v912 = vstv %s909
        %v913 = vmul.f32 %v912, %v910
        %v914 = vmul.f32 %v912, %v911
        %v915 = vadd.f32 %v907, %v913
        %v916 = vadd.f32 %v908, %v914
        %s917 = sld [smem:[#allocation8 + $0x13]]
        %v918 = vld [vmem:[#allocation7 + $0x3] sm:$0xff]
        %v919 = vld [vmem:[#allocation7 + $0xb] sm:$0xff]
        %v920 = vstv %s917
        %v921 = vmul.f32 %v920, %v918
        %v922 = vmul.f32 %v920, %v919
        %v923 = vadd.f32 %v915, %v921
        %v924 = vadd.f32 %v916, %v922
        %s925 = sld [smem:[#allocation8 + $0x18]]
        %v926 = vld [vmem:[#allocation7 + $0x4] sm:$0xff]
        %v927 = vld [vmem:[#allocation7 + $0xc] sm:$0xff]
        %v928 = vstv %s925
        %v929 = vmul.f32 %v928, %v926
        %v930 = vmul.f32 %v928, %v927
        %v931 = vadd.f32 %v923, %v929
        %v932 = vadd.f32 %v924, %v930
        %v933 = vld [vmem:[#allocation18] sm:$0xff]
        %v934 = vld [vmem:[#allocation18 + $0x8] sm:$0xff]
        %v935 = vmul.f32 %v933, %v931
        %v936 = vmul.f32 %v934, %v932
        %937 = vst.msk [vmem:[#allocation3] sm:$0xff] %vm586, %v766
        %938 = vst.msk [vmem:[#allocation3 + $0x8] sm:$0xff] %vm586, %v806
        %939 = vst.msk [vmem:[#allocation2 + $0x18] sm:$0xff] %vm586, %v935
        %940 = vst.msk [vmem:[#allocation2 + $0x28] sm:$0xff] %vm586, %v936
        %p941 = scmp.eq.s32.totalorder %s34, 2
        // Predicated region
        $region89: #{tpu_custom_call.1} parent=51 // pred_check
          %p942 = pneg %p941
        $region90: #{tpu_custom_call.1} parent=51 // pred_check_branch
          %944 = sbr.rel (%p942) target = $region92
        $region91: #{tpu_custom_call.1} parent=51 // pred_region
          %945 = vst.msk [vmem:[#allocation22] sm:$0xff] %vm586, %v935
          %946 = vst.msk [vmem:[#allocation22 + $0x8] sm:$0xff] %vm586, %v936
        $region92: #{tpu_custom_call.1} parent=51 // pred_fallthru
          _
        // Predicated region
        $region93: #{tpu_custom_call.1} parent=51 // pred_check
          %p947 = pneg %p266
        $region94: #{tpu_custom_call.1} parent=51 // pred_check_branch
          %949 = sbr.rel (%p947) target = $region96
        $region95: #{tpu_custom_call.1} parent=51 // pred_region
          %s951 = ssub.s32 256, 256
          %952 = vsyncadd [#allocation10], %s951
          %s953 = smul.addr %s33, 2
          %s954 = smul.addr %s953, 128
          %s955 = scalar_lea.hbm %s8, %s954
          %s956 = sshll.u32 [#allocation22], 4
          %s957 = int_to_ptr.vmem [resolvable:$true] %s956
          %962 = dma.vmem_to_hbm [thread:$0]  %s957, 256, %s955, [#allocation10], 128, 128, 8
        $region96: #{tpu_custom_call.1} parent=51 // pred_fallthru
          _
        // Predicated region
        $region97: #{tpu_custom_call.1} parent=51 // pred_check
          %p963 = pneg %p266
        $region98: #{tpu_custom_call.1} parent=51 // pred_check_branch
          %965 = sbr.rel (%p963) target = $region100
        $region99: #{tpu_custom_call.1} parent=51 // pred_region
          %966 = dma.done [#allocation10], 256
        $region100: #{tpu_custom_call.1} parent=51 // pred_fallthru
          _
      $region52: #{tpu_custom_call.1} parent=5 // pred_fallthru
        _
      %p967 = scmp.le.s32.totalorder 2, %s24
      // Predicated region
      $region101: #{tpu_custom_call.1} parent=5 // pred_check
        %p968 = pneg %p967
      $region102: #{tpu_custom_call.1} parent=5 // pred_check_branch
        %970 = sbr.rel (%p968) target = $region104
      $region103: #{tpu_custom_call.1} parent=5 // pred_region
        %s971 = ssub.s32 %s24, 2
      $region104: #{tpu_custom_call.1} parent=5 // pred_fallthru
        _
    $region6: #{tpu_custom_call.1} parent=1 // loop_footer
      %s28 = sadd.s32 1, %s24
    $region7: #{tpu_custom_call.1} parent=1 // loop_footer_branch
      %23 = sbr.rel target = $region3
    $region8: #{tpu_custom_call.1} parent=1 // loop_exit
      _
    %972 = vsyncpa [#allocation9], 1
    %s973 = scalar_lea.sflag [#allocation9], 1
    %974 = vsyncpa %s973, 1
    %975 = vsyncpa [#allocation14], 1
    %s976 = scalar_lea.sflag [#allocation14], 1
    %977 = vsyncpa %s976, 1
    %978 = vsyncpa [#allocation17], 1
    %979 = vsyncpa [#allocation20], 1
    %980 = vsyncpa [#allocation10], 1
    %s981 = scalar_lea.sflag [#allocation10], 1
    %982 = vsyncpa %s981, 1
    %983 = vsyncpa [#allocation11], 1
    %s984 = scalar_lea.sflag [#allocation11], 1
    %985 = vsyncpa %s984, 1

// kernel: tpu_custom_call.1
$region0: #{tpu_custom_call.1}
  #allocation0 [shape = 'u32[]', space=smem, size = 0x4, offset = 0x4, fixed_abs, tag = 'smem constant byte address 0x4 - core index']
  #allocation1 [shape = 'u32[144,128]{1,0:T(1,128)}', space=vmem, size = 0x12000, scoped, tag = 'internal scratch']
  #allocation2 [shape = 'f32[1,32,146]{2,1,0:T(8,128)}', space=vmem, size = 0x8000, scoped, tag = 'scratch operand']
  #allocation3 [shape = 'f32[1,16,16]{2,1,0:T(8,128)}', space=vmem, size = 0x2000, scoped, tag = 'scratch operand']
  #allocation4 [shape = 'f32[1,20,16]{2,1,0:T(8,128)}', space=vmem, size = 0x3000, scoped, tag = 'scratch operand']
  #allocation5 [shape = 'f32[1,20,16]{2,1,0:T(8,128)}', space=vmem, size = 0x3000, scoped, tag = 'scratch operand']
  #allocation6 [shape = 'f32[1,20,16]{2,1,0:T(8,128)}', space=vmem, size = 0x3000, scoped, tag = 'scratch operand']
  #allocation7 [shape = 'f32[1,20,16]{2,1,0:T(8,128)}', space=vmem, size = 0x3000, scoped, tag = 'scratch operand']
  %s0 = inlined_call_operand.hbm [shape: f32[25], index: 0, kind: input, shape index: {}]
  %s1 = inlined_call_operand.hbm [shape: f32[2,3,16,16], index: 1, kind: input, shape index: {}]
  %s2 = inlined_call_operand.hbm [shape: f32[2,3,16,16], index: 2, kind: input, shape index: {}]
  %s3 = inlined_call_operand.hbm [shape: f32[2,16,16], index: 3, kind: input, shape index: {}]
  %s4 = inlined_call_operand.hbm [shape: f32[2,16,16], index: 4, kind: input, shape index: {}]
  %s5 = inlined_call_operand.hbm [shape: f32[2,16,16], index: 5, kind: input, shape index: {}]
  %s6 = inlined_call_operand.hbm [shape: f32[2,16,16], index: 6, kind: input, shape index: {}]
  %s7 = inlined_call_operand.hbm [shape: f32[2,16,16], index: 7, kind: input, shape index: {}]
  %s8 = inlined_call_operand.hbm [shape: f32[2,16,16], index: 8, kind: output, shape index: {}]
  %s9 = sld [smem:[#allocation0]]
  $region105: #{tpu_custom_call.1} parent=0
    _
  %s11 = ssub.s32 1, %s9
  %s12 = scalar_select 0, %s11, %s9
  $region1: #{tpu_custom_call.1} parent=0
    #allocation8 [shape = 'u8[512]{0}', space=smem, size = 0x200, scoped, tag = 'input window, operand 0, single buffered']
    #allocation9 [shape = 's32[2]{0}', space=sflag, size = 0x8, scoped, tag = 'scoped memory for tpu_custom_call.1']
    #allocation10 [shape = 's32[2]{0}', space=sflag, size = 0x8, scoped, tag = 'scoped memory for tpu_custom_call.1']
    #allocation11 [shape = 's32[2]{0}', space=sflag, size = 0x8, scoped, tag = 'scoped memory for tpu_custom_call.1']
    #allocation12 [shape = 'u8[16384]{0}', space=vmem, size = 0x4000, scoped, tag = 'input window, operand 1']
    #allocation13 [shape = 'u8[16384]{0}', space=vmem, size = 0x4000, scoped, tag = 'input window, operand 2']
    #allocation14 [shape = 's32[2]{0}', space=sflag, size = 0x8, scoped, tag = 'scoped memory for tpu_custom_call.1']
    #allocation15 [shape = 'u8[16384]{0}', space=vmem, size = 0x4000, scoped, tag = 'input window, operand 3']
    #allocation16 [shape = 'u8[16384]{0}', space=vmem, size = 0x4000, scoped, tag = 'input window, operand 4']
    #allocation17 [shape = 's32[2]{0}', space=sflag, size = 0x8, scoped, tag = 'scoped memory for tpu_custom_call.1']
    #allocation18 [shape = 'u8[16384]{0}', space=vmem, size = 0x4000, scoped, tag = 'input window, operand 5']
    #allocation19 [shape = 'u8[16384]{0}', space=vmem, size = 0x4000, scoped, tag = 'input window, operand 6']
    #allocation20 [shape = 's32[2]{0}', space=sflag, size = 0x8, scoped, tag = 'scoped memory for tpu_custom_call.1']
    #allocation21 [shape = 'u8[16384]{0}', space=vmem, size = 0x4000, scoped, tag = 'input window, operand 7']
    #allocation22 [shape = 'u8[16384]{0}', space=vmem, size = 0x4000, scoped, tag = 'output window, operand 0']
    %13 = vsyncpa [#allocation11], 0
    %14 = vsyncpa [#allocation9], 0
    %s15 = scalar_lea.sflag [#allocation9], 1
    %16 = vsyncpa %s15, 0
    %17 = vsyncpa [#allocation14], 0
    %s18 = scalar_lea.sflag [#allocation14], 1
    %19 = vsyncpa %s18, 0
    %20 = vsyncpa [#allocation17], 0
    %s21 = scalar_lea.sflag [#allocation17], 1
    %22 = vsyncpa %s21, 0
    %23 = vsyncpa [#allocation20], 0
    %s24 = scalar_lea.sflag [#allocation20], 1
    %25 = vsyncpa %s24, 0
    %26 = vsyncpa [#allocation10], 0
    %s27 = scalar_lea.sflag [#allocation10], 1
    %28 = vsyncpa %s27, 0
    loop: start=0, step=1, limit=8
    $region2: #{tpu_custom_call.1} parent=1 // loop_pre_header
      _
    $region3: #{tpu_custom_call.1} parent=1 // loop_header
      %s30 = sphi 0, %s34
      %p31 = scmp.ge.s32.totalorder %s30, 8
      %s37 = sphi 0, %s49
      %s38 = sphi 0, %s45
      %s39 = sphi 0, %s37
      %s40 = sphi 0, %s38
      %s41 = sphi 0, %s39
      %s42 = sphi 0, %s40
      %s50 = sphi 0, %s50
      %s52 = sphi 0, %s50
      %s53 = sphi 0, %s52
      %s67 = sphi 0, %s53
      %s75 = sphi 0, %s77
      %s78 = sphi 0, %s75
      %s79 = sphi 0, %s78
      %s95 = sphi 0, %s79
      %s103 = sphi 0, %s105
      %s106 = sphi 0, %s103
      %s107 = sphi 0, %s106
      %s123 = sphi 0, %s107
      %s129 = sphi 0, %s131
      %s132 = sphi 0, %s129
      %s133 = sphi 0, %s132
      %s149 = sphi 0, %s133
      %s155 = sphi 0, %s157
      %s158 = sphi 0, %s155
      %s159 = sphi 0, %s158
      %s175 = sphi 0, %s159
      %s181 = sphi 0, %s183
      %s184 = sphi 0, %s181
      %s185 = sphi 0, %s184
      %s201 = sphi 0, %s185
      %s207 = sphi 0, %s209
      %s210 = sphi 0, %s207
      %s211 = sphi 0, %s210
      %s227 = sphi 0, %s211
      %s233 = sphi 0, %s235
      %s236 = sphi 0, %s233
      %s237 = sphi 0, %s236
      %s253 = sphi 0, %s237
      %s259 = sphi 0, %s261
      %s262 = sphi 0, %s259
      %s263 = sphi 0, %s262
      %s279 = sphi 0, %s263
    $region4: #{tpu_custom_call.1} parent=1 // loop_header_branch
      %33 = sbr.rel (%p31) target = $region8
    $region5: #{tpu_custom_call.1} parent=1 // loop_body
      %s35 = ssub.s32 %s30, 1
      %s36 = ssub.s32 %s30, 2
      %s43 = sadd.s32 1, %s38
      %p44 = scmp.ge.s32.totalorder %s43, 3
      %s45 = scalar_select %p44, 0, %s43
      %s46 = sadd.s32 1, %s37
      %s47 = scalar_select %p44, %s46, %s37
      %p48 = scmp.ge.s32.totalorder %s47, 2
      %s49 = scalar_select %p48, 0, %s47
      %s51 = sadd.s32 %s50, 1
      %p54 = scmp.eq.s32.totalorder %s30, 5
      %p55 = scmp.ne.s32.totalorder %s50, %s52
      %p56 = scmp.eq.s32.totalorder %s30, 0
      %p57 = por %p55, %p56
      %p58 = scmp.ne.s32.totalorder %s50, %s52
      %p59 = scmp.eq.s32.totalorder %s35, 5
      %p60 = por %p58, %p59
      %p61 = scmp.ne.s32.totalorder %s52, %s53
      %p62 = scmp.eq.s32.totalorder %s35, 0
      %p63 = por %p61, %p62
      %p64 = scmp.ne.s32.totalorder %s52, %s53
      %p65 = scmp.eq.s32.totalorder %s36, 5
      %p66 = por %p64, %p65
      %p68 = scmp.ne.s32.totalorder %s53, %s67
      %p69 = scmp.eq.s32.totalorder %s36, 0
      %p70 = por %p68, %p69
      %s71 = ssub.s32 %s37, %s49
      %s72 = ssub.s32 %s38, %s45
      %s73 = sor.u32 %s71, %s72
      %p74 = scmp.eq.s32.totalorder %s73, 0
      %s76 = sadd.s32 %s75, 1
      %s77 = scalar_select %p74, %s75, %s76
      %p80 = pneg %p74
      %p81 = scmp.eq.s32.totalorder %s30, 5
      %p82 = por %p80, %p81
      %p83 = scmp.ne.s32.totalorder %s75, %s78
      %p84 = scmp.eq.s32.totalorder %s30, 0
      %p85 = por %p83, %p84
      %p86 = scmp.ne.s32.totalorder %s75, %s78
      %p87 = scmp.eq.s32.totalorder %s35, 5
      %p88 = por %p86, %p87
      %p89 = scmp.ne.s32.totalorder %s78, %s79
      %p90 = scmp.eq.s32.totalorder %s35, 0
      %p91 = por %p89, %p90
      %p92 = scmp.ne.s32.totalorder %s78, %s79
      %p93 = scmp.eq.s32.totalorder %s36, 5
      %p94 = por %p92, %p93
      %p96 = scmp.ne.s32.totalorder %s79, %s95
      %p97 = scmp.eq.s32.totalorder %s36, 0
      %p98 = por %p96, %p97
      %s99 = ssub.s32 %s37, %s49
      %s100 = ssub.s32 %s38, %s45
      %s101 = sor.u32 %s99, %s100
      %p102 = scmp.eq.s32.totalorder %s101, 0
      %s104 = sadd.s32 %s103, 1
      %s105 = scalar_select %p102, %s103, %s104
      %p108 = pneg %p102
      %p109 = scmp.eq.s32.totalorder %s30, 5
      %p110 = por %p108, %p109
      %p111 = scmp.ne.s32.totalorder %s103, %s106
      %p112 = scmp.eq.s32.totalorder %s30, 0
      %p113 = por %p111, %p112
      %p114 = scmp.ne.s32.totalorder %s103, %s106
      %p115 = scmp.eq.s32.totalorder %s35, 5
      %p116 = por %p114, %p115
      %p117 = scmp.ne.s32.totalorder %s106, %s107
      %p118 = scmp.eq.s32.totalorder %s35, 0
      %p119 = por %p117, %p118
      %p120 = scmp.ne.s32.totalorder %s106, %s107
      %p121 = scmp.eq.s32.totalorder %s36, 5
      %p122 = por %p120, %p121
      %p124 = scmp.ne.s32.totalorder %s107, %s123
      %p125 = scmp.eq.s32.totalorder %s36, 0
      %p126 = por %p124, %p125
      %s127 = ssub.s32 %s37, %s49
      %p128 = scmp.eq.s32.totalorder %s127, 0
      %s130 = sadd.s32 %s129, 1
      %s131 = scalar_select %p128, %s129, %s130
      %p134 = pneg %p128
      %p135 = scmp.eq.s32.totalorder %s30, 5
      %p136 = por %p134, %p135
      %p137 = scmp.ne.s32.totalorder %s129, %s132
      %p138 = scmp.eq.s32.totalorder %s30, 0
      %p139 = por %p137, %p138
      %p140 = scmp.ne.s32.totalorder %s129, %s132
      %p141 = scmp.eq.s32.totalorder %s35, 5
      %p142 = por %p140, %p141
      %p143 = scmp.ne.s32.totalorder %s132, %s133
      %p144 = scmp.eq.s32.totalorder %s35, 0
      %p145 = por %p143, %p144
      %p146 = scmp.ne.s32.totalorder %s132, %s133
      %p147 = scmp.eq.s32.totalorder %s36, 5
      %p148 = por %p146, %p147
      %p150 = scmp.ne.s32.totalorder %s133, %s149
      %p151 = scmp.eq.s32.totalorder %s36, 0
      %p152 = por %p150, %p151
      %s153 = ssub.s32 %s37, %s49
      %p154 = scmp.eq.s32.totalorder %s153, 0
      %s156 = sadd.s32 %s155, 1
      %s157 = scalar_select %p154, %s155, %s156
      %p160 = pneg %p154
      %p161 = scmp.eq.s32.totalorder %s30, 5
      %p162 = por %p160, %p161
      %p163 = scmp.ne.s32.totalorder %s155, %s158
      %p164 = scmp.eq.s32.totalorder %s30, 0
      %p165 = por %p163, %p164
      %p166 = scmp.ne.s32.totalorder %s155, %s158
      %p167 = scmp.eq.s32.totalorder %s35, 5
      %p168 = por %p166, %p167
      %p169 = scmp.ne.s32.totalorder %s158, %s159
      %p170 = scmp.eq.s32.totalorder %s35, 0
      %p171 = por %p169, %p170
      %p172 = scmp.ne.s32.totalorder %s158, %s159
      %p173 = scmp.eq.s32.totalorder %s36, 5
      %p174 = por %p172, %p173
      %p176 = scmp.ne.s32.totalorder %s159, %s175
      %p177 = scmp.eq.s32.totalorder %s36, 0
      %p178 = por %p176, %p177
      %s179 = ssub.s32 %s37, %s49
      %p180 = scmp.eq.s32.totalorder %s179, 0
      %s182 = sadd.s32 %s181, 1
      %s183 = scalar_select %p180, %s181, %s182
      %p186 = pneg %p180
      %p187 = scmp.eq.s32.totalorder %s30, 5
      %p188 = por %p186, %p187
      %p189 = scmp.ne.s32.totalorder %s181, %s184
      %p190 = scmp.eq.s32.totalorder %s30, 0
      %p191 = por %p189, %p190
      %p192 = scmp.ne.s32.totalorder %s181, %s184
      %p193 = scmp.eq.s32.totalorder %s35, 5
      %p194 = por %p192, %p193
      %p195 = scmp.ne.s32.totalorder %s184, %s185
      %p196 = scmp.eq.s32.totalorder %s35, 0
      %p197 = por %p195, %p196
      %p198 = scmp.ne.s32.totalorder %s184, %s185
      %p199 = scmp.eq.s32.totalorder %s36, 5
      %p200 = por %p198, %p199
      %p202 = scmp.ne.s32.totalorder %s185, %s201
      %p203 = scmp.eq.s32.totalorder %s36, 0
      %p204 = por %p202, %p203
      %s205 = ssub.s32 %s37, %s49
      %p206 = scmp.eq.s32.totalorder %s205, 0
      %s208 = sadd.s32 %s207, 1
      %s209 = scalar_select %p206, %s207, %s208
      %p212 = pneg %p206
      %p213 = scmp.eq.s32.totalorder %s30, 5
      %p214 = por %p212, %p213
      %p215 = scmp.ne.s32.totalorder %s207, %s210
      %p216 = scmp.eq.s32.totalorder %s30, 0
      %p217 = por %p215, %p216
      %p218 = scmp.ne.s32.totalorder %s207, %s210
      %p219 = scmp.eq.s32.totalorder %s35, 5
      %p220 = por %p218, %p219
      %p221 = scmp.ne.s32.totalorder %s210, %s211
      %p222 = scmp.eq.s32.totalorder %s35, 0
      %p223 = por %p221, %p222
      %p224 = scmp.ne.s32.totalorder %s210, %s211
      %p225 = scmp.eq.s32.totalorder %s36, 5
      %p226 = por %p224, %p225
      %p228 = scmp.ne.s32.totalorder %s211, %s227
      %p229 = scmp.eq.s32.totalorder %s36, 0
      %p230 = por %p228, %p229
      %s231 = ssub.s32 %s37, %s49
      %p232 = scmp.eq.s32.totalorder %s231, 0
      %s234 = sadd.s32 %s233, 1
      %s235 = scalar_select %p232, %s233, %s234
      %p238 = pneg %p232
      %p239 = scmp.eq.s32.totalorder %s30, 5
      %p240 = por %p238, %p239
      %p241 = scmp.ne.s32.totalorder %s233, %s236
      %p242 = scmp.eq.s32.totalorder %s30, 0
      %p243 = por %p241, %p242
      %p244 = scmp.ne.s32.totalorder %s233, %s236
      %p245 = scmp.eq.s32.totalorder %s35, 5
      %p246 = por %p244, %p245
      %p247 = scmp.ne.s32.totalorder %s236, %s237
      %p248 = scmp.eq.s32.totalorder %s35, 0
      %p249 = por %p247, %p248
      %p250 = scmp.ne.s32.totalorder %s236, %s237
      %p251 = scmp.eq.s32.totalorder %s36, 5
      %p252 = por %p250, %p251
      %p254 = scmp.ne.s32.totalorder %s237, %s253
      %p255 = scmp.eq.s32.totalorder %s36, 0
      %p256 = por %p254, %p255
      %s257 = ssub.s32 %s37, %s49
      %p258 = scmp.eq.s32.totalorder %s257, 0
      %s260 = sadd.s32 %s259, 1
      %s261 = scalar_select %p258, %s259, %s260
      %p264 = pneg %p258
      %p265 = scmp.eq.s32.totalorder %s30, 5
      %p266 = por %p264, %p265
      %p267 = scmp.ne.s32.totalorder %s259, %s262
      %p268 = scmp.eq.s32.totalorder %s30, 0
      %p269 = por %p267, %p268
      %p270 = scmp.ne.s32.totalorder %s259, %s262
      %p271 = scmp.eq.s32.totalorder %s35, 5
      %p272 = por %p270, %p271
      %p273 = scmp.ne.s32.totalorder %s262, %s263
      %p274 = scmp.eq.s32.totalorder %s35, 0
      %p275 = por %p273, %p274
      %p276 = scmp.ne.s32.totalorder %s262, %s263
      %p277 = scmp.eq.s32.totalorder %s36, 5
      %p278 = por %p276, %p277
      %p280 = scmp.ne.s32.totalorder %s263, %s279
      %p281 = scmp.eq.s32.totalorder %s36, 0
      %p282 = por %p280, %p281
      %p283 = scmp.le.s32.totalorder 1, %s30
      %p284 = scmp.lt.s32.totalorder %s30, 7
      %p285 = pnand %p283, %p284
      %p286 = pneg %p285
      // Predicated region
      $region9: #{tpu_custom_call.1} parent=5 // pred_check
        _
      $region10: #{tpu_custom_call.1} parent=5 // pred_check_branch
        %288 = sbr.rel (%p285) target = $region12
      $region11: #{tpu_custom_call.1} parent=5 // pred_region
        %s289 = ssub.s32 %s30, 1
        // Predicated region
        $region13: #{tpu_custom_call.1} parent=11 // pred_check
          %p290 = pneg %p63
        $region14: #{tpu_custom_call.1} parent=11 // pred_check_branch
          %292 = sbr.rel (%p290) target = $region16
        $region15: #{tpu_custom_call.1} parent=11 // pred_region
          %s294 = ssub.s32 16, 16
          %295 = vsyncadd [#allocation11], %s294
          %298 = dma.hbm_to_smem %s0, 16, [#allocation8], [#allocation11]
        $region16: #{tpu_custom_call.1} parent=11 // pred_fallthru
          _
      $region12: #{tpu_custom_call.1} parent=5 // pred_fallthru
        _
      %p299 = scmp.lt.s32.totalorder %s30, 6
      // Predicated region
      $region17: #{tpu_custom_call.1} parent=5 // pred_check
        %p300 = pneg %p299
      $region18: #{tpu_custom_call.1} parent=5 // pred_check_branch
        %302 = sbr.rel (%p300) target = $region20
      $region19: #{tpu_custom_call.1} parent=5 // pred_region
        // Predicated region
        $region21: #{tpu_custom_call.1} parent=19 // pred_check
          %p303 = pneg %p85
        $region22: #{tpu_custom_call.1} parent=19 // pred_check_branch
          %305 = sbr.rel (%p303) target = $region24
        $region23: #{tpu_custom_call.1} parent=19 // pred_region
          %s306 = sand.u32 %s75, 1
          %s307 = scalar_lea.sflag [#allocation9], %s306
          %s308 = sand.u32 %s75, 1
          %s309 = smul.addr %s308, 16
          %s310 = scalar_lea.vmem [#allocation12], %s309
          %s312 = ssub.s32 256, 256
          %313 = vsyncadd %s307, %s312
          %s314 = smul.addr %s38, 2
          %s315 = smul.addr %s37, 6
          %s316 = sadd.s32 %s314, %s315
          %s317 = smul.addr %s316, 128
          %s318 = scalar_lea.hbm %s1, %s317
          %s319 = sshll.u32 %s310, 4
          %s320 = int_to_ptr.vmem [resolvable:$true] %s319
          %325 = dma.hbm_to_vmem [thread:$0]  %s318, 256, %s320, %s307, 128, 128, 8
        $region24: #{tpu_custom_call.1} parent=19 // pred_fallthru
          _
        // Predicated region
        $region25: #{tpu_custom_call.1} parent=19 // pred_check
          %p326 = pneg %p113
        $region26: #{tpu_custom_call.1} parent=19 // pred_check_branch
          %328 = sbr.rel (%p326) target = $region28
        $region27: #{tpu_custom_call.1} parent=19 // pred_region
          %s329 = sand.u32 %s30, 1
          %s330 = scalar_lea.sflag [#allocation14], %s329
          %s331 = sand.u32 %s103, 1
          %s332 = smul.addr %s331, 16
          %s333 = scalar_lea.vmem [#allocation13], %s332
          %s335 = ssub.s32 256, 256
          %336 = vsyncadd %s330, %s335
          %s337 = smul.addr %s38, 2
          %s338 = smul.addr %s37, 6
          %s339 = sadd.s32 %s337, %s338
          %s340 = smul.addr %s339, 128
          %s341 = scalar_lea.hbm %s2, %s340
          %s342 = sshll.u32 %s333, 4
          %s343 = int_to_ptr.vmem [resolvable:$true] %s342
          %348 = dma.hbm_to_vmem [thread:$0]  %s341, 256, %s343, %s330, 128, 128, 8
        $region28: #{tpu_custom_call.1} parent=19 // pred_fallthru
          _
        // Predicated region
        $region29: #{tpu_custom_call.1} parent=19 // pred_check
          %p349 = pneg %p139
        $region30: #{tpu_custom_call.1} parent=19 // pred_check_branch
          %351 = sbr.rel (%p349) target = $region32
        $region31: #{tpu_custom_call.1} parent=19 // pred_region
          %s352 = sand.u32 %s30, 1
          %s353 = scalar_lea.sflag [#allocation14], %s352
          %s354 = sand.u32 %s129, 1
          %s355 = smul.addr %s354, 16
          %s356 = scalar_lea.vmem [#allocation15], %s355
          %s358 = ssub.s32 256, 256
          %359 = vsyncadd %s353, %s358
          %s360 = smul.addr %s37, 2
          %s361 = smul.addr %s360, 128
          %s362 = scalar_lea.hbm %s3, %s361
          %s363 = sshll.u32 %s356, 4
          %s364 = int_to_ptr.vmem [resolvable:$true] %s363
          %369 = dma.hbm_to_vmem [thread:$0]  %s362, 256, %s364, %s353, 128, 128, 8
        $region32: #{tpu_custom_call.1} parent=19 // pred_fallthru
          _
        // Predicated region
        $region33: #{tpu_custom_call.1} parent=19 // pred_check
          %p370 = pneg %p165
        $region34: #{tpu_custom_call.1} parent=19 // pred_check_branch
          %372 = sbr.rel (%p370) target = $region36
        $region35: #{tpu_custom_call.1} parent=19 // pred_region
          %s373 = sand.u32 %s30, 1
          %s374 = scalar_lea.sflag [#allocation17], %s373
          %s375 = sand.u32 %s155, 1
          %s376 = smul.addr %s375, 16
          %s377 = scalar_lea.vmem [#allocation16], %s376
          %s379 = ssub.s32 256, 256
          %380 = vsyncadd %s374, %s379
          %s381 = smul.addr %s37, 2
          %s382 = smul.addr %s381, 128
          %s383 = scalar_lea.hbm %s4, %s382
          %s384 = sshll.u32 %s377, 4
          %s385 = int_to_ptr.vmem [resolvable:$true] %s384
          %390 = dma.hbm_to_vmem [thread:$0]  %s383, 256, %s385, %s374, 128, 128, 8
        $region36: #{tpu_custom_call.1} parent=19 // pred_fallthru
          _
        // Predicated region
        $region37: #{tpu_custom_call.1} parent=19 // pred_check
          %p391 = pneg %p191
        $region38: #{tpu_custom_call.1} parent=19 // pred_check_branch
          %393 = sbr.rel (%p391) target = $region40
        $region39: #{tpu_custom_call.1} parent=19 // pred_region
          %s394 = sand.u32 %s30, 1
          %s395 = scalar_lea.sflag [#allocation17], %s394
          %s396 = sand.u32 %s181, 1
          %s397 = smul.addr %s396, 16
          %s398 = scalar_lea.vmem [#allocation18], %s397
          %s400 = ssub.s32 256, 256
          %401 = vsyncadd %s395, %s400
          %s402 = smul.addr %s37, 2
          %s403 = smul.addr %s402, 128
          %s404 = scalar_lea.hbm %s5, %s403
          %s405 = sshll.u32 %s398, 4
          %s406 = int_to_ptr.vmem [resolvable:$true] %s405
          %411 = dma.hbm_to_vmem [thread:$0]  %s404, 256, %s406, %s395, 128, 128, 8
        $region40: #{tpu_custom_call.1} parent=19 // pred_fallthru
          _
        // Predicated region
        $region41: #{tpu_custom_call.1} parent=19 // pred_check
          %p412 = pneg %p217
        $region42: #{tpu_custom_call.1} parent=19 // pred_check_branch
          %414 = sbr.rel (%p412) target = $region44
        $region43: #{tpu_custom_call.1} parent=19 // pred_region
          %s415 = sand.u32 %s30, 1
          %s416 = scalar_lea.sflag [#allocation20], %s415
          %s417 = sand.u32 %s207, 1
          %s418 = smul.addr %s417, 16
          %s419 = scalar_lea.vmem [#allocation19], %s418
          %s421 = ssub.s32 256, 256
          %422 = vsyncadd %s416, %s421
          %s423 = smul.addr %s37, 2
          %s424 = smul.addr %s423, 128
          %s425 = scalar_lea.hbm %s6, %s424
          %s426 = sshll.u32 %s419, 4
          %s427 = int_to_ptr.vmem [resolvable:$true] %s426
          %432 = dma.hbm_to_vmem [thread:$0]  %s425, 256, %s427, %s416, 128, 128, 8
        $region44: #{tpu_custom_call.1} parent=19 // pred_fallthru
          _
        // Predicated region
        $region45: #{tpu_custom_call.1} parent=19 // pred_check
          %p433 = pneg %p243
        $region46: #{tpu_custom_call.1} parent=19 // pred_check_branch
          %435 = sbr.rel (%p433) target = $region48
        $region47: #{tpu_custom_call.1} parent=19 // pred_region
          %s436 = sand.u32 %s30, 1
          %s437 = scalar_lea.sflag [#allocation20], %s436
          %s438 = sand.u32 %s233, 1
          %s439 = smul.addr %s438, 16
          %s440 = scalar_lea.vmem [#allocation21], %s439
          %s442 = ssub.s32 256, 256
          %443 = vsyncadd %s437, %s442
          %s444 = smul.addr %s37, 2
          %s445 = smul.addr %s444, 128
          %s446 = scalar_lea.hbm %s7, %s445
          %s447 = sshll.u32 %s440, 4
          %s448 = int_to_ptr.vmem [resolvable:$true] %s447
          %453 = dma.hbm_to_vmem [thread:$0]  %s446, 256, %s448, %s437, 128, 128, 8
        $region48: #{tpu_custom_call.1} parent=19 // pred_fallthru
          _
      $region20: #{tpu_custom_call.1} parent=5 // pred_fallthru
        _
      %p454 = scmp.le.s32.totalorder 1, %s30
      %p455 = scmp.lt.s32.totalorder %s30, 7
      %p456 = pnand %p454, %p455
      %p457 = pneg %p456
      // Predicated region
      $region49: #{tpu_custom_call.1} parent=5 // pred_check
        _
      $region50: #{tpu_custom_call.1} parent=5 // pred_check_branch
        %459 = sbr.rel (%p456) target = $region52
      $region51: #{tpu_custom_call.1} parent=5 // pred_region
        %s460 = ssub.s32 %s30, 1
        // Predicated region
        $region53: #{tpu_custom_call.1} parent=51 // pred_check
          %p461 = pneg %p63
        $region54: #{tpu_custom_call.1} parent=51 // pred_check_branch
          %463 = sbr.rel (%p461) target = $region56
        $region55: #{tpu_custom_call.1} parent=51 // pred_region
          %464 = dma.done [#allocation11], 16
        $region56: #{tpu_custom_call.1} parent=51 // pred_fallthru
          _
        %s465 = sand.u32 %s78, 1
        %s466 = scalar_lea.sflag [#allocation9], %s465
        %s467 = sand.u32 %s78, 1
        %s468 = smul.addr %s467, 16
        %s469 = scalar_lea.vmem [#allocation12], %s468
        // Predicated region
        $region57: #{tpu_custom_call.1} parent=51 // pred_check
          %p470 = pneg %p91
        $region58: #{tpu_custom_call.1} parent=51 // pred_check_branch
          %472 = sbr.rel (%p470) target = $region60
        $region59: #{tpu_custom_call.1} parent=51 // pred_region
          %473 = dma.done %s466, 256
        $region60: #{tpu_custom_call.1} parent=51 // pred_fallthru
          _
        %s474 = sand.u32 %s35, 1
        %s475 = scalar_lea.sflag [#allocation14], %s474
        %s476 = sand.u32 %s106, 1
        %s477 = smul.addr %s476, 16
        %s478 = scalar_lea.vmem [#allocation13], %s477
        // Predicated region
        $region61: #{tpu_custom_call.1} parent=51 // pred_check
          %p479 = pneg %p119
        $region62: #{tpu_custom_call.1} parent=51 // pred_check_branch
          %481 = sbr.rel (%p479) target = $region64
        $region63: #{tpu_custom_call.1} parent=51 // pred_region
          %482 = dma.done %s475, 256
        $region64: #{tpu_custom_call.1} parent=51 // pred_fallthru
          _
        %s483 = sand.u32 %s35, 1
        %s484 = scalar_lea.sflag [#allocation14], %s483
        %s485 = sand.u32 %s132, 1
        %s486 = smul.addr %s485, 16
        %s487 = scalar_lea.vmem [#allocation15], %s486
        // Predicated region
        $region65: #{tpu_custom_call.1} parent=51 // pred_check
          %p488 = pneg %p145
        $region66: #{tpu_custom_call.1} parent=51 // pred_check_branch
          %490 = sbr.rel (%p488) target = $region68
        $region67: #{tpu_custom_call.1} parent=51 // pred_region
          %491 = dma.done %s484, 256
        $region68: #{tpu_custom_call.1} parent=51 // pred_fallthru
          _
        %s492 = sand.u32 %s35, 1
        %s493 = scalar_lea.sflag [#allocation17], %s492
        %s494 = sand.u32 %s158, 1
        %s495 = smul.addr %s494, 16
        %s496 = scalar_lea.vmem [#allocation16], %s495
        // Predicated region
        $region69: #{tpu_custom_call.1} parent=51 // pred_check
          %p497 = pneg %p171
        $region70: #{tpu_custom_call.1} parent=51 // pred_check_branch
          %499 = sbr.rel (%p497) target = $region72
        $region71: #{tpu_custom_call.1} parent=51 // pred_region
          %500 = dma.done %s493, 256
        $region72: #{tpu_custom_call.1} parent=51 // pred_fallthru
          _
        %s501 = sand.u32 %s35, 1
        %s502 = scalar_lea.sflag [#allocation17], %s501
        %s503 = sand.u32 %s184, 1
        %s504 = smul.addr %s503, 16
        %s505 = scalar_lea.vmem [#allocation18], %s504
        // Predicated region
        $region73: #{tpu_custom_call.1} parent=51 // pred_check
          %p506 = pneg %p197
        $region74: #{tpu_custom_call.1} parent=51 // pred_check_branch
          %508 = sbr.rel (%p506) target = $region76
        $region75: #{tpu_custom_call.1} parent=51 // pred_region
          %509 = dma.done %s502, 256
        $region76: #{tpu_custom_call.1} parent=51 // pred_fallthru
          _
        %s510 = sand.u32 %s35, 1
        %s511 = scalar_lea.sflag [#allocation20], %s510
        %s512 = sand.u32 %s210, 1
        %s513 = smul.addr %s512, 16
        %s514 = scalar_lea.vmem [#allocation19], %s513
        // Predicated region
        $region77: #{tpu_custom_call.1} parent=51 // pred_check
          %p515 = pneg %p223
        $region78: #{tpu_custom_call.1} parent=51 // pred_check_branch
          %517 = sbr.rel (%p515) target = $region80
        $region79: #{tpu_custom_call.1} parent=51 // pred_region
          %518 = dma.done %s511, 256
        $region80: #{tpu_custom_call.1} parent=51 // pred_fallthru
          _
        %s519 = sand.u32 %s35, 1
        %s520 = scalar_lea.sflag [#allocation20], %s519
        %s521 = sand.u32 %s236, 1
        %s522 = smul.addr %s521, 16
        %s523 = scalar_lea.vmem [#allocation21], %s522
        // Predicated region
        $region81: #{tpu_custom_call.1} parent=51 // pred_check
          %p524 = pneg %p249
        $region82: #{tpu_custom_call.1} parent=51 // pred_check_branch
          %526 = sbr.rel (%p524) target = $region84
        $region83: #{tpu_custom_call.1} parent=51 // pred_region
          %527 = dma.done %s520, 256
        $region84: #{tpu_custom_call.1} parent=51 // pred_fallthru
          _
        %528 = sfence
        %p529 = pneg %p63
        %p530 = pneg %p60
        %s531 = sand.u32 %s78, 1
        %s532 = scalar_lea.sflag [#allocation9], %s531
        %s533 = sand.u32 %s78, 1
        %s534 = smul.addr %s533, 16
        %s535 = scalar_lea.vmem [#allocation12], %s534
        %p536 = pneg %p91
        %p537 = pneg %p88
        %s538 = sand.u32 %s35, 1
        %s539 = scalar_lea.sflag [#allocation14], %s538
        %s540 = sand.u32 %s106, 1
        %s541 = smul.addr %s540, 16
        %s542 = scalar_lea.vmem [#allocation13], %s541
        %p543 = pneg %p119
        %p544 = pneg %p116
        %s545 = sand.u32 %s35, 1
        %s546 = scalar_lea.sflag [#allocation14], %s545
        %s547 = sand.u32 %s132, 1
        %s548 = smul.addr %s547, 16
        %s549 = scalar_lea.vmem [#allocation15], %s548
        %p550 = pneg %p145
        %p551 = pneg %p142
        %s552 = sand.u32 %s35, 1
        %s553 = scalar_lea.sflag [#allocation17], %s552
        %s554 = sand.u32 %s158, 1
        %s555 = smul.addr %s554, 16
        %s556 = scalar_lea.vmem [#allocation16], %s555
        %p557 = pneg %p171
        %p558 = pneg %p168
        %s559 = sand.u32 %s35, 1
        %s560 = scalar_lea.sflag [#allocation17], %s559
        %s561 = sand.u32 %s184, 1
        %s562 = smul.addr %s561, 16
        %s563 = scalar_lea.vmem [#allocation18], %s562
        %p564 = pneg %p197
        %p565 = pneg %p194
        %s566 = sand.u32 %s35, 1
        %s567 = scalar_lea.sflag [#allocation20], %s566
        %s568 = sand.u32 %s210, 1
        %s569 = smul.addr %s568, 16
        %s570 = scalar_lea.vmem [#allocation19], %s569
        %p571 = pneg %p223
        %p572 = pneg %p220
        %s573 = sand.u32 %s35, 1
        %s574 = scalar_lea.sflag [#allocation20], %s573
        %s575 = sand.u32 %s236, 1
        %s576 = smul.addr %s575, 16
        %s577 = scalar_lea.vmem [#allocation21], %s576
        %p578 = pneg %p249
        %p579 = pneg %p246
        %p580 = pneg %p275
        %p581 = pneg %p272
        %s582 = sand.u32 %s262, 1
        %s583 = scalar_lea.sflag [#allocation10], %s582
        %s584 = sand.u32 %s262, 1
        %s585 = smul.addr %s584, 16
        %s586 = scalar_lea.vmem [#allocation22], %s585
        %p587 = scmp.eq.s32.totalorder %s40, 0
        // Predicated region
        $region85: #{tpu_custom_call.1} parent=51 // pred_check
          %p588 = pneg %p587
        $region86: #{tpu_custom_call.1} parent=51 // pred_check_branch
          %590 = sbr.rel (%p588) target = $region88
        $region87: #{tpu_custom_call.1} parent=51 // pred_region
          %591 = vst [vmem:[#allocation2] sm:$0xff] 0.0
          %vm592 = vcmask 146432
          %593 = vst.msk [vmem:[#allocation2 + $0x8] sm:$0xff] %vm592, 0.0
          %594 = vst [vmem:[#allocation2 + $0x10] sm:$0xff] 0.0
          %595 = vst.msk [vmem:[#allocation2 + $0x18] sm:$0xff] %vm592, 0.0
          %596 = vst [vmem:[#allocation2 + $0x20] sm:$0xff] 0.0
          %597 = vst.msk [vmem:[#allocation2 + $0x28] sm:$0xff] %vm592, 0.0
          %598 = vst [vmem:[#allocation2 + $0x30] sm:$0xff] 0.0
          %599 = vst.msk [vmem:[#allocation2 + $0x38] sm:$0xff] %vm592, 0.0
          %v600 = vld [vmem:[%s487] sm:$0xff]
          %v601 = vld [vmem:[%s487 + $0x8] sm:$0xff]
          %vm602 = vcmask 130048
          %603 = vst.msk [vmem:[#allocation2 + $0x18] sm:$0xff] %vm602, %v600
          %604 = vst.msk [vmem:[#allocation2 + $0x28] sm:$0xff] %vm602, %v601
          %v605 = vld [vmem:[%s496] sm:$0xff]
          %v606 = vld [vmem:[%s496 + $0x8] sm:$0xff]
          %607 = vst.msk [vmem:[#allocation3] sm:$0xff] %vm602, %v605
          %608 = vst.msk [vmem:[#allocation3 + $0x8] sm:$0xff] %vm602, %v606
        $region88: #{tpu_custom_call.1} parent=51 // pred_fallthru
          _
        %v609 = vld [vmem:[#allocation2 + $0x18] sm:$0xff]
        %v610 = vld [vmem:[#allocation2 + $0x28] sm:$0xff]
        %v611 = vld [vmem:[%s514] sm:$0xff]
        %v612 = vld [vmem:[%s514 + $0x8] sm:$0xff]
        %v613 = vmul.f32 %v611, %v609
        %v614 = vmul.f32 %v612, %v610
        %v615 = vld [vmem:[%s523] sm:$0xff]
        %v616 = vld [vmem:[%s523 + $0x8] sm:$0xff]
        %v617 = vld [vmem:[#allocation3] sm:$0xff]
        %v618 = vld [vmem:[#allocation3 + $0x8] sm:$0xff]
        %v619 = vmul.f32 %v615, %v617
        %v620 = vmul.f32 %v616, %v618
        %v621 = vsub.f32 %v613, %v619
        %v622 = vsub.f32 %v614, %v620
        %v623 = vld [vmem:[%s469] sm:$0xff]
        %v624 = vld [vmem:[%s469 + $0x8] sm:$0xff]
        %v625 = vld [vmem:[%s478] sm:$0xff]
        %v626 = vld [vmem:[%s478 + $0x8] sm:$0xff]
        %v627 = vsub.f32 %v623, %v625
        %v628 = vsub.f32 %v624, %v626
        %v629 = vsub.f32 %v621, %v627
        %v630 = vsub.f32 %v622, %v628
        %v631 = vld [vmem:[#allocation2] sm:$0xc0]
        %v632 = vld [vmem:[#allocation2 + $0x8] sm:$0xc0]
        %v633 = vld [vmem:[#allocation2 + $0x10] sm:$0xff]
        %v634 = vld [vmem:[#allocation2 + $0x20] sm:$0xff]
        %v635 = vld [vmem:[#allocation2 + $0x30] sm:$0x3]
        %v636 = vld [vmem:[#allocation2 + $0x38] sm:$0x3]
        %645 = vrot.lane.b32.xlu0 %v631, 2
        %v646 = vpop.permute.xlu0 %645
        %647 = vrot.lane.b32.xlu0 %v632, 2
        %v648 = vpop.permute.xlu0 %647
        %649 = vrot.lane.b32.xlu0 %v633, 2
        %v650 = vpop.permute.xlu0 %649
        %651 = vrot.lane.b32.xlu0 %v609, 2
        %v652 = vpop.permute.xlu0 %651
        %653 = vrot.lane.b32.xlu0 %v634, 2
        %v654 = vpop.permute.xlu0 %653
        %655 = vrot.lane.b32.xlu0 %v610, 2
        %v656 = vpop.permute.xlu0 %655
        %657 = vrot.lane.b32.xlu0 %v635, 2
        %v658 = vpop.permute.xlu0 %657
        %659 = vrot.lane.b32.xlu0 %v636, 2
        %v660 = vpop.permute.xlu0 %659
        %vm661 = vcmask 15360
        %v662 = vsel %vm661, %v646, %v648
        %v663 = vsel %vm661, %v650, %v652
        %v664 = vsel %vm661, %v654, %v656
        %v665 = vsel %vm661, %v658, %v660
        %vm670 = vcmask 130054
        %671 = vst.msk [vmem:[#allocation4 - $0x6] sm:$0xc0] %vm670, %v662
        %vm672 = vcmask 130048
        %673 = vst.msk [vmem:[#allocation4 + $0x2] sm:$0xff] %vm672, %v663
        %674 = vst.msk [vmem:[#allocation4 + $0xa] sm:$0xff] %vm672, %v664
        %vm675 = vcmask 123904
        %676 = vst.msk [vmem:[#allocation4 + $0x12] sm:$0x3] %vm675, %v665
        %v677 = vld [vmem:[#allocation2] sm:$0xc0]
        %v678 = vld [vmem:[#allocation2 + $0x8] sm:$0xc0]
        %v679 = vld [vmem:[#allocation2 + $0x10] sm:$0xff]
        %v680 = vld [vmem:[#allocation2 + $0x18] sm:$0xff]
        %v681 = vld [vmem:[#allocation2 + $0x20] sm:$0xff]
        %v682 = vld [vmem:[#allocation2 + $0x28] sm:$0xff]
        %v683 = vld [vmem:[#allocation2 + $0x30] sm:$0x3]
        %v684 = vld [vmem:[#allocation2 + $0x38] sm:$0x3]
        %693 = vrot.lane.b32.xlu0 %v677, 1
        %v694 = vpop.permute.xlu0 %693
        %695 = vrot.lane.b32.xlu0 %v678, 1
        %v696 = vpop.permute.xlu0 %695
        %697 = vrot.lane.b32.xlu0 %v679, 1
        %v698 = vpop.permute.xlu0 %697
        %699 = vrot.lane.b32.xlu0 %v680, 1
        %v700 = vpop.permute.xlu0 %699
        %701 = vrot.lane.b32.xlu0 %v681, 1
        %v702 = vpop.permute.xlu0 %701
        %703 = vrot.lane.b32.xlu0 %v682, 1
        %v704 = vpop.permute.xlu0 %703
        %705 = vrot.lane.b32.xlu0 %v683, 1
        %v706 = vpop.permute.xlu0 %705
        %707 = vrot.lane.b32.xlu0 %v684, 1
        %v708 = vpop.permute.xlu0 %707
        %vm709 = vcmask 7168
        %v710 = vsel %vm709, %v694, %v696
        %v711 = vsel %vm709, %v698, %v700
        %v712 = vsel %vm709, %v702, %v704
        %v713 = vsel %vm709, %v706, %v708
        %718 = vst.msk [vmem:[#allocation5 - $0x6] sm:$0xc0] %vm670, %v710
        %719 = vst.msk [vmem:[#allocation5 + $0x2] sm:$0xff] %vm672, %v711
        %720 = vst.msk [vmem:[#allocation5 + $0xa] sm:$0xff] %vm672, %v712
        %721 = vst.msk [vmem:[#allocation5 + $0x12] sm:$0x3] %vm675, %v713
        %v722 = vld [vmem:[#allocation2 + $0x8] sm:$0xc0]
        %v723 = vld [vmem:[#allocation2 + $0x18] sm:$0xff]
        %v724 = vld [vmem:[#allocation2 + $0x28] sm:$0xff]
        %v725 = vld [vmem:[#allocation2 + $0x38] sm:$0x3]
        %730 = vrot.lane.b32.xlu0 %v722, 127
        %v731 = vpop.permute.xlu0 %730
        %732 = vrot.lane.b32.xlu0 %v723, 127
        %v733 = vpop.permute.xlu0 %732
        %734 = vrot.lane.b32.xlu0 %v724, 127
        %v735 = vpop.permute.xlu0 %734
        %736 = vrot.lane.b32.xlu0 %v725, 127
        %v737 = vpop.permute.xlu0 %736
        %742 = vst.msk [vmem:[#allocation6 - $0x6] sm:$0xc0] %vm670, %v731
        %743 = vst.msk [vmem:[#allocation6 + $0x2] sm:$0xff] %vm672, %v733
        %744 = vst.msk [vmem:[#allocation6 + $0xa] sm:$0xff] %vm672, %v735
        %745 = vst.msk [vmem:[#allocation6 + $0x12] sm:$0x3] %vm675, %v737
        %v746 = vld [vmem:[#allocation2 + $0x8] sm:$0xc0]
        %v747 = vld [vmem:[#allocation2 + $0x18] sm:$0xff]
        %v748 = vld [vmem:[#allocation2 + $0x28] sm:$0xff]
        %v749 = vld [vmem:[#allocation2 + $0x38] sm:$0x3]
        %754 = vrot.lane.b32.xlu0 %v746, 126
        %v755 = vpop.permute.xlu0 %754
        %756 = vrot.lane.b32.xlu0 %v747, 126
        %v757 = vpop.permute.xlu0 %756
        %758 = vrot.lane.b32.xlu0 %v748, 126
        %v759 = vpop.permute.xlu0 %758
        %760 = vrot.lane.b32.xlu0 %v749, 126
        %v761 = vpop.permute.xlu0 %760
        %766 = vst.msk [vmem:[#allocation7 - $0x6] sm:$0xc0] %vm670, %v755
        %767 = vst.msk [vmem:[#allocation7 + $0x2] sm:$0xff] %vm672, %v757
        %768 = vst.msk [vmem:[#allocation7 + $0xa] sm:$0xff] %vm672, %v759
        %769 = vst.msk [vmem:[#allocation7 + $0x12] sm:$0x3] %vm675, %v761
        %s770 = sld [smem:[#allocation8]]
        %v771 = vld [vmem:[#allocation4] sm:$0xff]
        %v772 = vld [vmem:[#allocation4 + $0x8] sm:$0xff]
        %v773 = vstv %s770
        %v774 = vmul.f32 %v773, %v771
        %v775 = vmul.f32 %v773, %v772
        %v776 = vadd.f32 %v629, %v774
        %v777 = vadd.f32 %v630, %v775
        %s778 = sld [smem:[#allocation8 + $0x5]]
        %v779 = vld [vmem:[#allocation4 + $0x1] sm:$0xff]
        %v780 = vld [vmem:[#allocation4 + $0x9] sm:$0xff]
        %v781 = vstv %s778
        %v782 = vmul.f32 %v781, %v779
        %v783 = vmul.f32 %v781, %v780
        %v784 = vadd.f32 %v776, %v782
        %v785 = vadd.f32 %v777, %v783
        %s786 = sld [smem:[#allocation8 + $0xa]]
        %v787 = vld [vmem:[#allocation4 + $0x2] sm:$0xff]
        %v788 = vld [vmem:[#allocation4 + $0xa] sm:$0xff]
        %v789 = vstv %s786
        %v790 = vmul.f32 %v789, %v787
        %v791 = vmul.f32 %v789, %v788
        %v792 = vadd.f32 %v784, %v790
        %v793 = vadd.f32 %v785, %v791
        %s794 = sld [smem:[#allocation8 + $0xf]]
        %v795 = vld [vmem:[#allocation4 + $0x3] sm:$0xff]
        %v796 = vld [vmem:[#allocation4 + $0xb] sm:$0xff]
        %v797 = vstv %s794
        %v798 = vmul.f32 %v797, %v795
        %v799 = vmul.f32 %v797, %v796
        %v800 = vadd.f32 %v792, %v798
        %v801 = vadd.f32 %v793, %v799
        %s802 = sld [smem:[#allocation8 + $0x14]]
        %v803 = vld [vmem:[#allocation4 + $0x4] sm:$0xff]
        %v804 = vld [vmem:[#allocation4 + $0xc] sm:$0xff]
        %v805 = vstv %s802
        %v806 = vmul.f32 %v805, %v803
        %v807 = vmul.f32 %v805, %v804
        %v808 = vadd.f32 %v800, %v806
        %v809 = vadd.f32 %v801, %v807
        %s810 = sld [smem:[#allocation8 + $0x1]]
        %v811 = vld [vmem:[#allocation5] sm:$0xff]
        %v812 = vld [vmem:[#allocation5 + $0x8] sm:$0xff]
        %v813 = vstv %s810
        %v814 = vmul.f32 %v813, %v811
        %v815 = vmul.f32 %v813, %v812
        %v816 = vadd.f32 %v808, %v814
        %v817 = vadd.f32 %v809, %v815
        %s818 = sld [smem:[#allocation8 + $0x6]]
        %v819 = vld [vmem:[#allocation5 + $0x1] sm:$0xff]
        %v820 = vld [vmem:[#allocation5 + $0x9] sm:$0xff]
        %v821 = vstv %s818
        %v822 = vmul.f32 %v821, %v819
        %v823 = vmul.f32 %v821, %v820
        %v824 = vadd.f32 %v816, %v822
        %v825 = vadd.f32 %v817, %v823
        %s826 = sld [smem:[#allocation8 + $0xb]]
        %v827 = vld [vmem:[#allocation5 + $0x2] sm:$0xff]
        %v828 = vld [vmem:[#allocation5 + $0xa] sm:$0xff]
        %v829 = vstv %s826
        %v830 = vmul.f32 %v829, %v827
        %v831 = vmul.f32 %v829, %v828
        %v832 = vadd.f32 %v824, %v830
        %v833 = vadd.f32 %v825, %v831
        %s834 = sld [smem:[#allocation8 + $0x10]]
        %v835 = vld [vmem:[#allocation5 + $0x3] sm:$0xff]
        %v836 = vld [vmem:[#allocation5 + $0xb] sm:$0xff]
        %v837 = vstv %s834
        %v838 = vmul.f32 %v837, %v835
        %v839 = vmul.f32 %v837, %v836
        %v840 = vadd.f32 %v832, %v838
        %v841 = vadd.f32 %v833, %v839
        %s842 = sld [smem:[#allocation8 + $0x15]]
        %v843 = vld [vmem:[#allocation5 + $0x4] sm:$0xff]
        %v844 = vld [vmem:[#allocation5 + $0xc] sm:$0xff]
        %v845 = vstv %s842
        %v846 = vmul.f32 %v845, %v843
        %v847 = vmul.f32 %v845, %v844
        %v848 = vadd.f32 %v840, %v846
        %v849 = vadd.f32 %v841, %v847
        %s850 = sld [smem:[#allocation8 + $0x2]]
        %v851 = vld [vmem:[#allocation2 + $0x8] sm:$0xc0]
        %v852 = vld [vmem:[#allocation2 + $0x18] sm:$0xff]
        %v853 = vld [vmem:[#allocation2 + $0x28] sm:$0x3f]
        %v854 = vstv %s850
        %v855 = vmul.f32 %v854, %v851
        %v856 = vmul.f32 %v854, %v852
        %v857 = vmul.f32 %v854, %v853
        %vm861 = vcmask 1041408
        %v862 = vrot.slane %v855, 6
        %v863 = vrot.slane %v856, 6
        %v864 = vsel %vm861, %v862, %v863
        %v865 = vrot.slane %v857, 6
        %v866 = vsel %vm861, %v863, %v865
        %v869 = vadd.f32 %v848, %v864
        %v870 = vadd.f32 %v849, %v866
        %s871 = sld [smem:[#allocation8 + $0x7]]
        %v872 = vld [vmem:[#allocation2 + $0x8] sm:$0x80]
        %v873 = vld [vmem:[#allocation2 + $0x28] sm:$0x7f]
        %v874 = vstv %s871
        %v875 = vmul.f32 %v874, %v872
        %v876 = vmul.f32 %v874, %v852
        %v877 = vmul.f32 %v874, %v873
        %vm881 = vcmask 1040384
        %v882 = vrot.slane %v875, 7
        %v883 = vrot.slane %v876, 7
        %v884 = vsel %vm881, %v882, %v883
        %v885 = vrot.slane %v877, 7
        %v886 = vsel %vm881, %v883, %v885
        %v889 = vadd.f32 %v869, %v884
        %v890 = vadd.f32 %v870, %v886
        %s891 = sld [smem:[#allocation8 + $0xc]]
        %v892 = vld [vmem:[#allocation2 + $0x28] sm:$0xff]
        %v893 = vstv %s891
        %v894 = vmul.f32 %v893, %v852
        %v895 = vmul.f32 %v893, %v892
        %v896 = vadd.f32 %v889, %v894
        %v897 = vadd.f32 %v890, %v895
        %s898 = sld [smem:[#allocation8 + $0x11]]
        %v899 = vld [vmem:[#allocation2 + $0x18] sm:$0xfe]
        %v900 = vld [vmem:[#allocation2 + $0x28] sm:$0xff]
        %v901 = vld [vmem:[#allocation2 + $0x38] sm:$0x1]
        %v902 = vstv %s898
        %v903 = vmul.f32 %v902, %v899
        %v904 = vmul.f32 %v902, %v900
        %v905 = vmul.f32 %v902, %v901
        %vm909 = vcmask 1046528
        %v910 = vrot.slane %v903, 1
        %v911 = vrot.slane %v904, 1
        %v912 = vsel %vm909, %v910, %v911
        %v913 = vrot.slane %v905, 1
        %v914 = vsel %vm909, %v911, %v913
        %v917 = vadd.f32 %v896, %v912
        %v918 = vadd.f32 %v897, %v914
        %s919 = sld [smem:[#allocation8 + $0x16]]
        %v920 = vld [vmem:[#allocation2 + $0x18] sm:$0xfc]
        %v921 = vld [vmem:[#allocation2 + $0x38] sm:$0x3]
        %v922 = vstv %s919
        %v923 = vmul.f32 %v922, %v920
        %v924 = vmul.f32 %v922, %v900
        %v925 = vmul.f32 %v922, %v921
        %vm929 = vcmask 1045504
        %v930 = vrot.slane %v923, 2
        %v931 = vrot.slane %v924, 2
        %v932 = vsel %vm929, %v930, %v931
        %v933 = vrot.slane %v925, 2
        %v934 = vsel %vm929, %v931, %v933
        %v937 = vadd.f32 %v917, %v932
        %v938 = vadd.f32 %v918, %v934
        %s939 = sld [smem:[#allocation8 + $0x3]]
        %v940 = vld [vmem:[#allocation6] sm:$0xff]
        %v941 = vld [vmem:[#allocation6 + $0x8] sm:$0xff]
        %v942 = vstv %s939
        %v943 = vmul.f32 %v942, %v940
        %v944 = vmul.f32 %v942, %v941
        %v945 = vadd.f32 %v937, %v943
        %v946 = vadd.f32 %v938, %v944
        %s947 = sld [smem:[#allocation8 + $0x8]]
        %v948 = vld [vmem:[#allocation6 + $0x1] sm:$0xff]
        %v949 = vld [vmem:[#allocation6 + $0x9] sm:$0xff]
        %v950 = vstv %s947
        %v951 = vmul.f32 %v950, %v948
        %v952 = vmul.f32 %v950, %v949
        %v953 = vadd.f32 %v945, %v951
        %v954 = vadd.f32 %v946, %v952
        %s955 = sld [smem:[#allocation8 + $0xd]]
        %v956 = vld [vmem:[#allocation6 + $0x2] sm:$0xff]
        %v957 = vld [vmem:[#allocation6 + $0xa] sm:$0xff]
        %v958 = vstv %s955
        %v959 = vmul.f32 %v958, %v956
        %v960 = vmul.f32 %v958, %v957
        %v961 = vadd.f32 %v953, %v959
        %v962 = vadd.f32 %v954, %v960
        %s963 = sld [smem:[#allocation8 + $0x12]]
        %v964 = vld [vmem:[#allocation6 + $0x3] sm:$0xff]
        %v965 = vld [vmem:[#allocation6 + $0xb] sm:$0xff]
        %v966 = vstv %s963
        %v967 = vmul.f32 %v966, %v964
        %v968 = vmul.f32 %v966, %v965
        %v969 = vadd.f32 %v961, %v967
        %v970 = vadd.f32 %v962, %v968
        %s971 = sld [smem:[#allocation8 + $0x17]]
        %v972 = vld [vmem:[#allocation6 + $0x4] sm:$0xff]
        %v973 = vld [vmem:[#allocation6 + $0xc] sm:$0xff]
        %v974 = vstv %s971
        %v975 = vmul.f32 %v974, %v972
        %v976 = vmul.f32 %v974, %v973
        %v977 = vadd.f32 %v969, %v975
        %v978 = vadd.f32 %v970, %v976
        %s979 = sld [smem:[#allocation8 + $0x4]]
        %v980 = vld [vmem:[#allocation7] sm:$0xff]
        %v981 = vld [vmem:[#allocation7 + $0x8] sm:$0xff]
        %v982 = vstv %s979
        %v983 = vmul.f32 %v982, %v980
        %v984 = vmul.f32 %v982, %v981
        %v985 = vadd.f32 %v977, %v983
        %v986 = vadd.f32 %v978, %v984
        %s987 = sld [smem:[#allocation8 + $0x9]]
        %v988 = vld [vmem:[#allocation7 + $0x1] sm:$0xff]
        %v989 = vld [vmem:[#allocation7 + $0x9] sm:$0xff]
        %v990 = vstv %s987
        %v991 = vmul.f32 %v990, %v988
        %v992 = vmul.f32 %v990, %v989
        %v993 = vadd.f32 %v985, %v991
        %v994 = vadd.f32 %v986, %v992
        %s995 = sld [smem:[#allocation8 + $0xe]]
        %v996 = vld [vmem:[#allocation7 + $0x2] sm:$0xff]
        %v997 = vld [vmem:[#allocation7 + $0xa] sm:$0xff]
        %v998 = vstv %s995
        %v999 = vmul.f32 %v998, %v996
        %v1000 = vmul.f32 %v998, %v997
        %v1001 = vadd.f32 %v993, %v999
        %v1002 = vadd.f32 %v994, %v1000
        %s1003 = sld [smem:[#allocation8 + $0x13]]
        %v1004 = vld [vmem:[#allocation7 + $0x3] sm:$0xff]
        %v1005 = vld [vmem:[#allocation7 + $0xb] sm:$0xff]
        %v1006 = vstv %s1003
        %v1007 = vmul.f32 %v1006, %v1004
        %v1008 = vmul.f32 %v1006, %v1005
        %v1009 = vadd.f32 %v1001, %v1007
        %v1010 = vadd.f32 %v1002, %v1008
        %s1011 = sld [smem:[#allocation8 + $0x18]]
        %v1012 = vld [vmem:[#allocation7 + $0x4] sm:$0xff]
        %v1013 = vld [vmem:[#allocation7 + $0xc] sm:$0xff]
        %v1014 = vstv %s1011
        %v1015 = vmul.f32 %v1014, %v1012
        %v1016 = vmul.f32 %v1014, %v1013
        %v1017 = vadd.f32 %v1009, %v1015
        %v1018 = vadd.f32 %v1010, %v1016
        %v1019 = vld [vmem:[%s505] sm:$0xff]
        %v1020 = vld [vmem:[%s505 + $0x8] sm:$0xff]
        %v1021 = vmul.f32 %v1019, %v1017
        %v1022 = vmul.f32 %v1020, %v1018
        %1023 = vst.msk [vmem:[#allocation3] sm:$0xff] %vm672, %v852
        %1024 = vst.msk [vmem:[#allocation3 + $0x8] sm:$0xff] %vm672, %v892
        %1025 = vst.msk [vmem:[#allocation2 + $0x18] sm:$0xff] %vm672, %v1021
        %1026 = vst.msk [vmem:[#allocation2 + $0x28] sm:$0xff] %vm672, %v1022
        %p1027 = scmp.eq.s32.totalorder %s40, 2
        // Predicated region
        $region89: #{tpu_custom_call.1} parent=51 // pred_check
          %p1028 = pneg %p1027
        $region90: #{tpu_custom_call.1} parent=51 // pred_check_branch
          %1030 = sbr.rel (%p1028) target = $region92
        $region91: #{tpu_custom_call.1} parent=51 // pred_region
          %1031 = vst.msk [vmem:[%s586] sm:$0xff] %vm672, %v1021
          %1032 = vst.msk [vmem:[%s586 + $0x8] sm:$0xff] %vm672, %v1022
        $region92: #{tpu_custom_call.1} parent=51 // pred_fallthru
          _
        %s1033 = sand.u32 %s262, 1
        %s1034 = scalar_lea.sflag [#allocation10], %s1033
        %s1035 = sand.u32 %s262, 1
        %s1036 = smul.addr %s1035, 16
        %s1037 = scalar_lea.vmem [#allocation22], %s1036
        // Predicated region
        $region93: #{tpu_custom_call.1} parent=51 // pred_check
          %p1038 = pneg %p272
        $region94: #{tpu_custom_call.1} parent=51 // pred_check_branch
          %1040 = sbr.rel (%p1038) target = $region96
        $region95: #{tpu_custom_call.1} parent=51 // pred_region
          %s1042 = ssub.s32 256, 256
          %1043 = vsyncadd %s1034, %s1042
          %s1044 = smul.addr %s39, 2
          %s1045 = smul.addr %s1044, 128
          %s1046 = scalar_lea.hbm %s8, %s1045
          %s1047 = sshll.u32 %s1037, 4
          %s1048 = int_to_ptr.vmem [resolvable:$true] %s1047
          %1053 = dma.vmem_to_hbm [thread:$0]  %s1048, 256, %s1046, %s1034, 128, 128, 8
        $region96: #{tpu_custom_call.1} parent=51 // pred_fallthru
          _
      $region52: #{tpu_custom_call.1} parent=5 // pred_fallthru
        _
      %p1054 = scmp.le.s32.totalorder 2, %s30
      // Predicated region
      $region97: #{tpu_custom_call.1} parent=5 // pred_check
        %p1055 = pneg %p1054
      $region98: #{tpu_custom_call.1} parent=5 // pred_check_branch
        %1057 = sbr.rel (%p1055) target = $region100
      $region99: #{tpu_custom_call.1} parent=5 // pred_region
        %s1058 = ssub.s32 %s30, 2
        // Predicated region
        $region101: #{tpu_custom_call.1} parent=99 // pred_check
          %p1059 = pneg %p278
        $region102: #{tpu_custom_call.1} parent=99 // pred_check_branch
          %1061 = sbr.rel (%p1059) target = $region104
        $region103: #{tpu_custom_call.1} parent=99 // pred_region
          %s1062 = sand.u32 %s263, 1
          %s1063 = scalar_lea.sflag [#allocation10], %s1062
          %s1064 = sand.u32 %s263, 1
          %s1065 = smul.addr %s1064, 16
          %s1066 = scalar_lea.vmem [#allocation22], %s1065
          %1067 = dma.done %s1063, 256
        $region104: #{tpu_custom_call.1} parent=99 // pred_fallthru
          _
      $region100: #{tpu_custom_call.1} parent=5 // pred_fallthru
        _
    $region6: #{tpu_custom_call.1} parent=1 // loop_footer
      %s34 = sadd.s32 1, %s30
    $region7: #{tpu_custom_call.1} parent=1 // loop_footer_branch
      %29 = sbr.rel target = $region3
    $region8: #{tpu_custom_call.1} parent=1 // loop_exit
      _
    %1068 = vsyncpa [#allocation9], 1
    %s1069 = scalar_lea.sflag [#allocation9], 1
    %1070 = vsyncpa %s1069, 1
    %1071 = vsyncpa [#allocation14], 1
    %s1072 = scalar_lea.sflag [#allocation14], 1
    %1073 = vsyncpa %s1072, 1
    %1074 = vsyncpa [#allocation17], 1
    %s1075 = scalar_lea.sflag [#allocation17], 1
    %1076 = vsyncpa %s1075, 1
    %1077 = vsyncpa [#allocation20], 1
    %s1078 = scalar_lea.sflag [#allocation20], 1
    %1079 = vsyncpa %s1078, 1
    %1080 = vsyncpa [#allocation10], 1
    %s1081 = scalar_lea.sflag [#allocation10], 1
    %1082 = vsyncpa %s1081, 1
    %1083 = vsyncpa [#allocation11], 1
    %s1084 = scalar_lea.sflag [#allocation11], 1
    %1085 = vsyncpa %s1084, 1

</llo_original>
